<compile_context>
chip_gen: v7x
topology: tpu7x:2x2x1
jax: 0.10.0
libtpu: 0.0.40
codegen_flags: <defaults>
</compile_context>

<pallas_src>
import jax
import jax.numpy as jnp
from jax.experimental import pallas as pl
from jax.experimental.pallas import tpu as pltpu

_EPS = 1e-5
_NEG_SLOPE = 0.01      # nn.LeakyReLU default
_LANE = 128            # TPU lane width; channels are padded to a multiple of this
# Matmul operand dtype. float32 keeps exact parity with the f32 PyTorch module;
# set to jnp.bfloat16 on v6e/v7x for ~2x MXU throughput and half the weight DMA
# bytes (accumulation stays f32 via preferred_element_type).
_MXU_DTYPE = jnp.float32


def _leaky(v):
    return jnp.where(v > 0, v, _NEG_SLOPE * v)


def _stats(v):
    """One-pass per-channel batch stats of an (N, C) tensor -> (1, C) mean/var."""
    n = v.shape[0]
    s1 = jnp.sum(v, axis=0, keepdims=True)
    s2 = jnp.sum(v * v, axis=0, keepdims=True)
    mean = s1 * (1.0 / n)
    var = jnp.maximum(s2 * (1.0 / n) - mean * mean, 0.0)   # biased variance
    return mean, var


def _im2col(halo_ref, b, lu, cp):
    """(B*Lu, 3*Cp) conv operand from a (B, >=Lu+2, Cp) haloed VMEM scratch."""
    n = b * lu
    t0 = halo_ref[:, 0:lu, :].reshape(n, cp)         # taps at l-1
    t1 = halo_ref[:, 1:lu + 1, :].reshape(n, cp)     # taps at l
    t2 = halo_ref[:, 2:lu + 2, :].reshape(n, cp)     # taps at l+1
    return jnp.concatenate([t0, t1, t2], axis=-1)


def _dot(a, b):
    return jnp.dot(a.astype(_MXU_DTYPE), b.astype(_MXU_DTYPE),
                   preferred_element_type=jnp.float32)


def _make_res_block_kernel(unit_cfg, b, cp):
    """unit_cfg: static tuple of (L_in, has_downsample) per ResNet unit."""

    def kernel(x_ref, w1_ref, w2_ref, dw_ref, fcw_ref, vec_ref, out_ref, halo_ref):
        zero_row = jnp.zeros((b, 1, cp), jnp.float32)     # hoisted out of the loop
        cur = x_ref[...]                                  # (B, L0, Cp)

        for u, (lu, has_ds) in enumerate(unit_cfg):       # trace-time unrolled
            n = b * lu
            lp = lu // 3
            vec = vec_ref[u]                              # (8, Cp) packed per-channel params
            bn0_g, bn0_b = vec[0:1, :], vec[1:2, :]
            b1 = vec[2:3, :]
            bn1_g, bn1_b = vec[3:4, :], vec[4:5, :]
            b2 = vec[5:6, :]
            db = vec[6:7, :]
            fc_b = vec[7:8, :]

            x2 = cur.reshape(n, cp)

            # ---- first_norm: BatchNorm1d (training batch stats) + LeakyReLU ----
            mean0, var0 = _stats(x2)
            a = _leaky((x2 - mean0) * (bn0_g * jax.lax.rsqrt(var0 + _EPS)) + bn0_b)

            # ---- Conv1d(k=3, pad=1) #1 as a single im2col matmul ----
            halo_ref[:, 0:1, :] = zero_row
            halo_ref[:, lu + 1:lu + 2, :] = zero_row
            halo_ref[:, 1:lu + 1, :] = a.reshape(b, lu, cp)
            y = _dot(_im2col(halo_ref, b, lu, cp), w1_ref[u]) + b1          # (n, Cp)

            # ---- BatchNorm1d #2 folded into Conv1d #2 (stats only) ----
            # z = y*scale + off: scale multiplies y once, off goes into the bias,
            # and the halo rows hold -off so the conv's zero padding of z is exact.
            mean1, var1 = _stats(y)
            scale1 = bn1_g * jax.lax.rsqrt(var1 + _EPS)                     # (1, Cp)
            off1 = bn1_b - mean1 * scale1                                   # (1, Cp)
            off3 = jnp.concatenate([off1, off1, off1], axis=-1)             # (1, 3Cp)
            w2u = w2_ref[u]                                                 # (3Cp, Cp)
            b2_eff = b2 + _dot(off3, w2u)                                   # (1, Cp)

            neg_off = jnp.broadcast_to((-off1).reshape(1, 1, cp), (b, 1, cp))
            halo_ref[:, 0:1, :] = neg_off
            halo_ref[:, lu + 1:lu + 2, :] = neg_off
            halo_ref[:, 1:lu + 1, :] = (y * scale1).reshape(b, lu, cp)
            a2 = _leaky(_dot(_im2col(halo_ref, b, lu, cp), w2u) + b2_eff)   # (n, Cp)

            # ---- residual (+ 1x1 downsample only when Cin != Cout) ----
            if has_ds:
                res = _dot(x2, dw_ref[u]) + db
            else:
                res = x2                       # down_sample is None: plain skip
            s = (a2 + res).reshape(b, lu, cp)

            # ---- MaxPool1d(3): stage in the halo scratch, stride-3 sublane reads ----
            halo_ref[:, 0:lu, :] = s
            pooled = halo_ref[:, pl.ds(0, lp, stride=3), :]
            pooled = jnp.maximum(pooled, halo_ref[:, pl.ds(1, lp, stride=3), :])
            pooled = jnp.maximum(pooled, halo_ref[:, pl.ds(2, lp, stride=3), :])

            # ---- AdaptiveAvgPool1d(1) -> Linear -> sigmoid gate ----
            avg = jnp.mean(pooled, axis=1)                                  # (B, Cp)
            gate = jax.nn.sigmoid(_dot(avg, fcw_ref[u]) + fc_b)             # (B, Cp)
            cur = (pooled + 1.0) * gate[:, None, :]                         # (B, lp, Cp)

        out_ref[...] = cur

    return kernel


# --------------------------- host-side packing ---------------------------

def _round_up(x, m):
    return ((x + m - 1) // m) * m


def _pad_vec(v, cp):
    return jnp.pad(v, (0, cp - v.shape[0]))


def _pad_mat(m, r, c):
    return jnp.pad(m, ((0, r - m.shape[0]), (0, c - m.shape[1])))


def _pack_params(units, cp):
    """Stack per-unit torch-layout params into 5 lane-padded kernel operands."""
    w1s, w2s, dws, fcws, vecs = [], [], [], [], []
    for p in units:
        cin, cout = p["c_in"], p["c_out"]
        # torch Conv1d weight (Cout, Cin, K) -> im2col weight (K*Cp, Cp), whose
        # row k*Cp + ci multiplies input tap k (offset k-1), channel ci.
        w1 = jnp.transpose(p["w1"], (2, 1, 0))                   # (3, Cin, Cout)
        w1 = jnp.pad(w1, ((0, 0), (0, cp - cin), (0, cp - cout))).reshape(3 * cp, cp)
        w2 = jnp.transpose(p["w2"], (2, 1, 0))                   # (3, Cout, Cout)
        w2 = jnp.pad(w2, ((0, 0), (0, cp - cout), (0, cp - cout))).reshape(3 * cp, cp)
        if p["dw"] is not None:
            dw = _pad_mat(p["dw"].T, cp, cp)                     # (Cin, Cout) padded
            db = _pad_vec(p["db"], cp)
        else:                                                    # unused (trace-time skip)
            dw = jnp.zeros((cp, cp), jnp.float32)
            db = jnp.zeros((cp,), jnp.float32)
        fcw = _pad_mat(p["fc_w"].T, cp, cp)                      # Linear as (in, out)
        vec = jnp.stack([
            _pad_vec(p["bn0_g"], cp), _pad_vec(p["bn0_b"], cp),
            _pad_vec(p["b1"], cp),
            _pad_vec(p["bn1_g"], cp), _pad_vec(p["bn1_b"], cp),
            _pad_vec(p["b2"], cp),
            db,
            _pad_vec(p["fc_b"], cp),
        ])
        w1s.append(w1); w2s.append(w2); dws.append(dw); fcws.append(fcw); vecs.append(vec)
    to = lambda xs: jnp.stack(xs).astype(jnp.float32)
    return to(w1s), to(w2s), to(dws), to(fcws), to(vecs)


def res_block_forward(x_ncl, units):
    """x_ncl: (B, C, L) like the PyTorch module; returns (B, C_out, L_out)."""
    b, c0, l0 = x_ncl.shape
    assert c0 == units[0]["c_in"]
    cp = _round_up(max(max(p["c_in"], p["c_out"]) for p in units), _LANE)
    w1, w2, dw, fcw, vec = _pack_params(units, cp)

    lengths, lu = [], l0
    for _ in units:
        lengths.append(lu)
        lu //= 3                                   # MaxPool1d(3)
    l_out = lu
    unit_cfg = tuple((lg, p["dw"] is not None) for lg, p in zip(lengths, units))

    # NCL -> channels-last; zero-pad channels to the 128-lane width.
    x = jnp.transpose(x_ncl, (0, 2, 1))
    x = jnp.pad(x, ((0, 0), (0, 0), (0, cp - c0)))

    # Advisory cost estimate for XLA's scheduler.
    flops, transc = 0, 0
    for lg, p in zip(lengths, units):
        n = b * lg
        flops += 2 * n * (3 * cp) * cp * 2                      # two im2col convs
        if p["dw"] is not None:
            flops += 2 * n * cp * cp                            # 1x1 downsample
        flops += 2 * b * cp * cp + 2 * 3 * cp * cp              # fc gate + bias fold
        transc += 2 * cp + b * cp                               # rsqrt x2 + sigmoid
    bytes_accessed = sum(int(a.size) * a.dtype.itemsize
                         for a in (x, w1, w2, dw, fcw, vec)) + b * l_out * cp * 4

    out = pl.pallas_call(
        _make_res_block_kernel(unit_cfg, b, cp),
        out_shape=jax.ShapeDtypeStruct((b, l_out, cp), jnp.float32),
        in_specs=[pl.BlockSpec(memory_space=pltpu.MemorySpace.VMEM)] * 6,
        out_specs=pl.BlockSpec(memory_space=pltpu.MemorySpace.VMEM),
        scratch_shapes=[pltpu.VMEM((b, l0 + 2, cp), jnp.float32)],   # shared halo/pool scratch
        compiler_params=pltpu.CompilerParams(vmem_limit_bytes=32 * 1024 * 1024),
        cost_estimate=pl.CostEstimate(flops=flops, transcendentals=transc,
                                      bytes_accessed=bytes_accessed),
    )(x, w1, w2, dw, fcw, vec)

    # strip the channel padding, back to PyTorch NCL layout.
    return jnp.transpose(out[:, :, :units[-1]["c_out"]], (0, 2, 1))


# --------------------------- parameters (torch layout) ---------------------------

def init_resnet_params(key, c_in, c_out):
    ks = jax.random.split(key, 12)
    n = lambda k, shape, scale: scale * jax.random.normal(k, shape, jnp.float32)
    p = {
        "c_in": c_in, "c_out": c_out,
        "bn0_g": 1.0 + n(ks[0], (c_in,), 0.1), "bn0_b": n(ks[1], (c_in,), 0.1),
        "w1": n(ks[2], (c_out, c_in, 3), 0.3), "b1": n(ks[3], (c_out,), 0.1),
        "bn1_g": 1.0 + n(ks[4], (c_out,), 0.1), "bn1_b": n(ks[5], (c_out,), 0.1),
        "w2": n(ks[6], (c_out, c_out, 3), 0.3), "b2": n(ks[7], (c_out,), 0.1),
        "fc_w": n(ks[8], (c_out, c_out), 0.3), "fc_b": n(ks[9], (c_out,), 0.1),
    }
    if c_in != c_out:
        p["dw"] = n(ks[10], (c_out, c_in), 0.3)   # torch 1x1 conv weight (O, I)
        p["db"] = n(ks[11], (c_out,), 0.1)
    else:
        p["dw"] = None                            # down_sample is None in PyTorch
        p["db"] = None
    return p


def build_res_block_params(key, num_of_nets, num_of_layers, channels):
    keys = jax.random.split(key, sum(num_of_layers))
    units, idx = [], 0
    for net in range(num_of_nets):
        for i in range(num_of_layers[net]):
            c_in = channels[net] if i == 0 else channels[net + 1]
            c_out = channels[net + 1]
            units.append(init_resnet_params(keys[idx], c_in, c_out))
            idx += 1
    return units


# --------------------------- pure-JAX reference (for validation) ---------------------------

def _ref_resnet(x, p):
    hi = jax.lax.Precision.HIGHEST

    def bn(v, g, b):
        mean = jnp.mean(v, axis=(0, 2), keepdims=True)
        var = jnp.mean((v - mean) ** 2, axis=(0, 2), keepdims=True)
        return (v - mean) / jnp.sqrt(var + _EPS) * g[None, :, None] + b[None, :, None]

    def conv3(v, w, b):
        o = jax.lax.conv_general_dilated(v, w, (1,), [(1, 1)],
                                         dimension_numbers=("NCH", "OIH", "NCH"),
                                         precision=hi)
        return o + b[None, :, None]

    ans = _leaky(bn(x, p["bn0_g"], p["bn0_b"]))
    ans = conv3(ans, p["w1"], p["b1"])
    ans = bn(ans, p["bn1_g"], p["bn1_b"])
    ans = _leaky(conv3(ans, p["w2"], p["b2"]))
    if p["dw"] is not None:
        x = jnp.einsum("oc,bcl->bol", p["dw"], x, precision=hi) + p["db"][None, :, None]
    s = ans + x
    bb, cc, ll = s.shape
    lp = ll // 3
    pooled = jnp.max(s[:, :, :3 * lp].reshape(bb, cc, lp, 3), axis=-1)
    avg = jnp.mean(pooled, axis=-1)
    gate = jax.nn.sigmoid(jnp.einsum("bi,oi->bo", avg, p["fc_w"], precision=hi) + p["fc_b"])
    return (pooled + 1.0) * gate[:, :, None]


def _ref_res_block(x, units):
    for p in units:
        x = _ref_resnet(x, p)
    return x


if __name__ == "__main__":
    key = jax.random.PRNGKey(0)
    kx, kp = jax.random.split(key)
    # ResBlock(num_of_nets=1, num_of_layers=[2], channels=[4, 8], first_norm=True)
    num_of_nets, num_of_layers, channels = 1, [2], [4, 8]
    B, L = 2, 48
    x = jax.random.normal(kx, (B, channels[0], L), jnp.float32)   # NCL, like PyTorch
    units = build_res_block_params(kp, num_of_nets, num_of_layers, channels)

    out = res_block_forward(x, units)
    jax.block_until_ready(out)
    # ResNet0: L 48 -> 16 (MaxPool1d(3)); ResNet1: 16 -> 5
    assert out.shape == (B, channels[-1], (L // 3) // 3), out.shape

    ref = _ref_res_block(x, units)
    err = float(jnp.max(jnp.abs(out - ref)))
    assert jnp.allclose(out, ref, rtol=2e-2, atol=1e-2), f"max |diff| = {err}"
    print("KERNEL_OK")
</pallas_src>

<mosaic_0001>
module attributes {stable_mosaic.version = 11 : i64} {
  func.func @kernel(%arg0: memref<2x48x128xf32, #tpu.memory_space<vmem>>, %arg1: memref<2x384x128xf32, #tpu.memory_space<vmem>>, %arg2: memref<2x384x128xf32, #tpu.memory_space<vmem>>, %arg3: memref<2x128x128xf32, #tpu.memory_space<vmem>>, %arg4: memref<2x128x128xf32, #tpu.memory_space<vmem>>, %arg5: memref<2x8x128xf32, #tpu.memory_space<vmem>>, %arg6: memref<2x5x128xf32, #tpu.memory_space<vmem>>, %arg7: memref<2x50x128xf32, #tpu.memory_space<vmem>>) attributes {dimension_semantics = [], scalar_prefetch = 0 : i64, scratch_operands = 1 : i64, tpu.core_type = #tpu.core_type<tc>} {
    %cst = arith.constant 0.000000e+00 : f32
    %0 = vector.broadcast %cst : f32 to vector<2x1x128xf32>
    %c0 = arith.constant 0 : index
    %c0_0 = arith.constant 0 : index
    %c0_1 = arith.constant 0 : index
    %1 = vector.load %arg0[%c0, %c0_0, %c0_1] : memref<2x48x128xf32, #tpu.memory_space<vmem>>, vector<2x48x128xf32>
    %c0_2 = arith.constant 0 : index
    %c0_3 = arith.constant 0 : index
    %c0_4 = arith.constant 0 : index
    %2 = vector.load %arg5[%c0_2, %c0_3, %c0_4] : memref<2x8x128xf32, #tpu.memory_space<vmem>>, vector<1x8x128xf32>
    %3 = vector.shape_cast %2 : vector<1x8x128xf32> to vector<8x128xf32>
    %4 = vector.extract_strided_slice %3 {offsets = [0, 0], sizes = [1, 128], strides = [1, 1]} : vector<8x128xf32> to vector<1x128xf32>
    %5 = vector.extract_strided_slice %3 {offsets = [1, 0], sizes = [1, 128], strides = [1, 1]} : vector<8x128xf32> to vector<1x128xf32>
    %6 = vector.extract_strided_slice %3 {offsets = [2, 0], sizes = [1, 128], strides = [1, 1]} : vector<8x128xf32> to vector<1x128xf32>
    %7 = vector.extract_strided_slice %3 {offsets = [3, 0], sizes = [1, 128], strides = [1, 1]} : vector<8x128xf32> to vector<1x128xf32>
    %8 = vector.extract_strided_slice %3 {offsets = [4, 0], sizes = [1, 128], strides = [1, 1]} : vector<8x128xf32> to vector<1x128xf32>
    %9 = vector.extract_strided_slice %3 {offsets = [5, 0], sizes = [1, 128], strides = [1, 1]} : vector<8x128xf32> to vector<1x128xf32>
    %10 = vector.extract_strided_slice %3 {offsets = [6, 0], sizes = [1, 128], strides = [1, 1]} : vector<8x128xf32> to vector<1x128xf32>
    %11 = vector.extract_strided_slice %3 {offsets = [7, 0], sizes = [1, 128], strides = [1, 1]} : vector<8x128xf32> to vector<1x128xf32>
    %12 = vector.shape_cast %1 : vector<2x48x128xf32> to vector<96x128xf32>
    %cst_5 = arith.constant dense<0.000000e+00> : vector<128xf32>
    %13 = vector.multi_reduction <add>, %12, %cst_5 [0] : vector<96x128xf32> to vector<128xf32>
    %14 = vector.shape_cast %13 : vector<128xf32> to vector<1x128xf32>
    %15 = arith.mulf %12, %12 : vector<96x128xf32>
    %cst_6 = arith.constant dense<0.000000e+00> : vector<128xf32>
    %16 = vector.multi_reduction <add>, %15, %cst_6 [0] : vector<96x128xf32> to vector<128xf32>
    %17 = vector.shape_cast %16 : vector<128xf32> to vector<1x128xf32>
    %cst_7 = arith.constant 0.010416667 : f32
    %18 = vector.broadcast %cst_7 : f32 to vector<1x128xf32>
    %19 = arith.mulf %14, %18 : vector<1x128xf32>
    %cst_8 = arith.constant 0.010416667 : f32
    %20 = vector.broadcast %cst_8 : f32 to vector<1x128xf32>
    %21 = arith.mulf %17, %20 : vector<1x128xf32>
    %22 = arith.mulf %19, %19 : vector<1x128xf32>
    %23 = arith.subf %21, %22 : vector<1x128xf32>
    %cst_9 = arith.constant 0.000000e+00 : f32
    %24 = vector.broadcast %cst_9 : f32 to vector<1x128xf32>
    %25 = arith.maximumf %23, %24 : vector<1x128xf32>
    %26 = vector.broadcast %19 : vector<1x128xf32> to vector<96x128xf32>
    %27 = arith.subf %12, %26 : vector<96x128xf32>
    %cst_10 = arith.constant 9.99999974E-6 : f32
    %28 = vector.broadcast %cst_10 : f32 to vector<1x128xf32>
    %29 = arith.addf %25, %28 : vector<1x128xf32>
    %30 = math.rsqrt %29 : vector<1x128xf32>
    %31 = arith.mulf %4, %30 : vector<1x128xf32>
    %32 = vector.broadcast %31 : vector<1x128xf32> to vector<96x128xf32>
    %33 = arith.mulf %27, %32 : vector<96x128xf32>
    %34 = vector.broadcast %5 : vector<1x128xf32> to vector<96x128xf32>
    %35 = arith.addf %33, %34 : vector<96x128xf32>
    %cst_11 = arith.constant 0.000000e+00 : f32
    %36 = vector.broadcast %cst_11 : f32 to vector<96x128xf32>
    %37 = arith.cmpf ogt, %35, %36 : vector<96x128xf32>
    %cst_12 = arith.constant 0.00999999977 : f32
    %38 = vector.broadcast %cst_12 : f32 to vector<96x128xf32>
    %39 = arith.mulf %38, %35 : vector<96x128xf32>
    %40 = arith.select %37, %35, %39 : vector<96x128xi1>, vector<96x128xf32>
    %c0_13 = arith.constant 0 : index
    %c0_14 = arith.constant 0 : index
    %c0_15 = arith.constant 0 : index
    %41 = vector.load %arg7[%c0_13, %c0_14, %c0_15] : memref<2x50x128xf32, #tpu.memory_space<vmem>>, vector<2x1x128xf32>
    tpu.vector_store %arg7[%c0_13, %c0_14, %c0_15], %0 {strides = array<i32>} : memref<2x50x128xf32, #tpu.memory_space<vmem>>, vector<2x1x128xf32>,
    %c0_16 = arith.constant 0 : index
    %c49 = arith.constant 49 : index
    %c0_17 = arith.constant 0 : index
    %42 = vector.load %arg7[%c0_16, %c49, %c0_17] : memref<2x50x128xf32, #tpu.memory_space<vmem>>, vector<2x1x128xf32>
    tpu.vector_store %arg7[%c0_16, %c49, %c0_17], %0 {strides = array<i32>} : memref<2x50x128xf32, #tpu.memory_space<vmem>>, vector<2x1x128xf32>,
    %43 = vector.shape_cast %40 : vector<96x128xf32> to vector<2x48x128xf32>
    %c0_18 = arith.constant 0 : index
    %c1 = arith.constant 1 : index
    %c0_19 = arith.constant 0 : index
    %44 = vector.load %arg7[%c0_18, %c1, %c0_19] : memref<2x50x128xf32, #tpu.memory_space<vmem>>, vector<2x48x128xf32>
    tpu.vector_store %arg7[%c0_18, %c1, %c0_19], %43 {strides = array<i32>} : memref<2x50x128xf32, #tpu.memory_space<vmem>>, vector<2x48x128xf32>,
    %c0_20 = arith.constant 0 : index
    %c0_21 = arith.constant 0 : index
    %c0_22 = arith.constant 0 : index
    %45 = vector.load %arg7[%c0_20, %c0_21, %c0_22] : memref<2x50x128xf32, #tpu.memory_space<vmem>>, vector<2x48x128xf32>
    %46 = vector.shape_cast %45 : vector<2x48x128xf32> to vector<96x128xf32>
    %c0_23 = arith.constant 0 : index
    %c1_24 = arith.constant 1 : index
    %c0_25 = arith.constant 0 : index
    %47 = vector.load %arg7[%c0_23, %c1_24, %c0_25] : memref<2x50x128xf32, #tpu.memory_space<vmem>>, vector<2x48x128xf32>
    %48 = vector.shape_cast %47 : vector<2x48x128xf32> to vector<96x128xf32>
    %c0_26 = arith.constant 0 : index
    %c2 = arith.constant 2 : index
    %c0_27 = arith.constant 0 : index
    %49 = vector.load %arg7[%c0_26, %c2, %c0_27] : memref<2x50x128xf32, #tpu.memory_space<vmem>>, vector<2x48x128xf32>
    %50 = vector.shape_cast %49 : vector<2x48x128xf32> to vector<96x128xf32>
    %51 = tpu.concatenate %46, %48, %50 in 1 : vector<96x128xf32>, vector<96x128xf32>, vector<96x128xf32> -> vector<96x384xf32>
    %c0_28 = arith.constant 0 : index
    %c0_29 = arith.constant 0 : index
    %c0_30 = arith.constant 0 : index
    %52 = vector.load %arg1[%c0_28, %c0_29, %c0_30] : memref<2x384x128xf32, #tpu.memory_space<vmem>>, vector<1x384x128xf32>
    %53 = vector.shape_cast %52 : vector<1x384x128xf32> to vector<384x128xf32>
    %cst_31 = arith.constant dense<0.000000e+00> : vector<96x128xf32>
    %54 = tpu.matmul %51, %53, %cst_31 {dimension_numbers = #tpu.dot_dimension_numbers<[1], [0], [0], [1], [0, 0, 1, 1], [], []>} : vector<96x384xf32>, vector<384x128xf32>, vector<96x128xf32> -> vector<96x128xf32>
    %55 = vector.broadcast %6 : vector<1x128xf32> to vector<96x128xf32>
    %56 = arith.addf %54, %55 : vector<96x128xf32>
    %cst_32 = arith.constant dense<0.000000e+00> : vector<128xf32>
    %57 = vector.multi_reduction <add>, %56, %cst_32 [0] : vector<96x128xf32> to vector<128xf32>
    %58 = vector.shape_cast %57 : vector<128xf32> to vector<1x128xf32>
    %59 = arith.mulf %56, %56 : vector<96x128xf32>
    %cst_33 = arith.constant dense<0.000000e+00> : vector<128xf32>
    %60 = vector.multi_reduction <add>, %59, %cst_33 [0] : vector<96x128xf32> to vector<128xf32>
    %61 = vector.shape_cast %60 : vector<128xf32> to vector<1x128xf32>
    %cst_34 = arith.constant 0.010416667 : f32
    %62 = vector.broadcast %cst_34 : f32 to vector<1x128xf32>
    %63 = arith.mulf %58, %62 : vector<1x128xf32>
    %cst_35 = arith.constant 0.010416667 : f32
    %64 = vector.broadcast %cst_35 : f32 to vector<1x128xf32>
    %65 = arith.mulf %61, %64 : vector<1x128xf32>
    %66 = arith.mulf %63, %63 : vector<1x128xf32>
    %67 = arith.subf %65, %66 : vector<1x128xf32>
    %cst_36 = arith.constant 0.000000e+00 : f32
    %68 = vector.broadcast %cst_36 : f32 to vector<1x128xf32>
    %69 = arith.maximumf %67, %68 : vector<1x128xf32>
    %cst_37 = arith.constant 9.99999974E-6 : f32
    %70 = vector.broadcast %cst_37 : f32 to vector<1x128xf32>
    %71 = arith.addf %69, %70 : vector<1x128xf32>
    %72 = math.rsqrt %71 : vector<1x128xf32>
    %73 = arith.mulf %7, %72 : vector<1x128xf32>
    %74 = arith.mulf %63, %73 : vector<1x128xf32>
    %75 = arith.subf %8, %74 : vector<1x128xf32>
    %76 = tpu.concatenate %75, %75, %75 in 1 : vector<1x128xf32>, vector<1x128xf32>, vector<1x128xf32> -> vector<1x384xf32>
    %c0_38 = arith.constant 0 : index
    %c0_39 = arith.constant 0 : index
    %c0_40 = arith.constant 0 : index
    %77 = vector.load %arg2[%c0_38, %c0_39, %c0_40] : memref<2x384x128xf32, #tpu.memory_space<vmem>>, vector<1x384x128xf32>
    %78 = vector.shape_cast %77 : vector<1x384x128xf32> to vector<384x128xf32>
    %cst_41 = arith.constant dense<0.000000e+00> : vector<1x128xf32>
    %79 = tpu.matmul %76, %78, %cst_41 {dimension_numbers = #tpu.dot_dimension_numbers<[1], [0], [0], [1], [0, 0, 1, 1], [], []>} : vector<1x384xf32>, vector<384x128xf32>, vector<1x128xf32> -> vector<1x128xf32>
    %80 = arith.addf %9, %79 : vector<1x128xf32>
    %cst_42 = arith.constant 0.000000e+00 : f32
    %81 = vector.broadcast %cst_42 : f32 to vector<1x128xf32>
    %82 = arith.subf %81, %75 : vector<1x128xf32>
    %83 = vector.shape_cast %82 : vector<1x128xf32> to vector<1x1x128xf32>
    %84 = vector.shape_cast %83 : vector<1x1x128xf32> to vector<1x1x128xf32>
    %85 = vector.broadcast %84 : vector<1x1x128xf32> to vector<2x1x128xf32>
    %c0_43 = arith.constant 0 : index
    %c0_44 = arith.constant 0 : index
    %c0_45 = arith.constant 0 : index
    %86 = vector.load %arg7[%c0_43, %c0_44, %c0_45] : memref<2x50x128xf32, #tpu.memory_space<vmem>>, vector<2x1x128xf32>
    tpu.vector_store %arg7[%c0_43, %c0_44, %c0_45], %85 {strides = array<i32>} : memref<2x50x128xf32, #tpu.memory_space<vmem>>, vector<2x1x128xf32>,
    %c0_46 = arith.constant 0 : index
    %c49_47 = arith.constant 49 : index
    %c0_48 = arith.constant 0 : index
    %87 = vector.load %arg7[%c0_46, %c49_47, %c0_48] : memref<2x50x128xf32, #tpu.memory_space<vmem>>, vector<2x1x128xf32>
    tpu.vector_store %arg7[%c0_46, %c49_47, %c0_48], %85 {strides = array<i32>} : memref<2x50x128xf32, #tpu.memory_space<vmem>>, vector<2x1x128xf32>,
    %88 = vector.broadcast %73 : vector<1x128xf32> to vector<96x128xf32>
    %89 = arith.mulf %56, %88 : vector<96x128xf32>
    %90 = vector.shape_cast %89 : vector<96x128xf32> to vector<2x48x128xf32>
    %c0_49 = arith.constant 0 : index
    %c1_50 = arith.constant 1 : index
    %c0_51 = arith.constant 0 : index
    %91 = vector.load %arg7[%c0_49, %c1_50, %c0_51] : memref<2x50x128xf32, #tpu.memory_space<vmem>>, vector<2x48x128xf32>
    tpu.vector_store %arg7[%c0_49, %c1_50, %c0_51], %90 {strides = array<i32>} : memref<2x50x128xf32, #tpu.memory_space<vmem>>, vector<2x48x128xf32>,
    %c0_52 = arith.constant 0 : index
    %c0_53 = arith.constant 0 : index
    %c0_54 = arith.constant 0 : index
    %92 = vector.load %arg7[%c0_52, %c0_53, %c0_54] : memref<2x50x128xf32, #tpu.memory_space<vmem>>, vector<2x48x128xf32>
    %93 = vector.shape_cast %92 : vector<2x48x128xf32> to vector<96x128xf32>
    %c0_55 = arith.constant 0 : index
    %c1_56 = arith.constant 1 : index
    %c0_57 = arith.constant 0 : index
    %94 = vector.load %arg7[%c0_55, %c1_56, %c0_57] : memref<2x50x128xf32, #tpu.memory_space<vmem>>, vector<2x48x128xf32>
    %95 = vector.shape_cast %94 : vector<2x48x128xf32> to vector<96x128xf32>
    %c0_58 = arith.constant 0 : index
    %c2_59 = arith.constant 2 : index
    %c0_60 = arith.constant 0 : index
    %96 = vector.load %arg7[%c0_58, %c2_59, %c0_60] : memref<2x50x128xf32, #tpu.memory_space<vmem>>, vector<2x48x128xf32>
    %97 = vector.shape_cast %96 : vector<2x48x128xf32> to vector<96x128xf32>
    %98 = tpu.concatenate %93, %95, %97 in 1 : vector<96x128xf32>, vector<96x128xf32>, vector<96x128xf32> -> vector<96x384xf32>
    %cst_61 = arith.constant dense<0.000000e+00> : vector<96x128xf32>
    %99 = tpu.matmul %98, %78, %cst_61 {dimension_numbers = #tpu.dot_dimension_numbers<[1], [0], [0], [1], [0, 0, 1, 1], [], []>} : vector<96x384xf32>, vector<384x128xf32>, vector<96x128xf32> -> vector<96x128xf32>
    %100 = vector.broadcast %80 : vector<1x128xf32> to vector<96x128xf32>
    %101 = arith.addf %99, %100 : vector<96x128xf32>
    %cst_62 = arith.constant 0.000000e+00 : f32
    %102 = vector.broadcast %cst_62 : f32 to vector<96x128xf32>
    %103 = arith.cmpf ogt, %101, %102 : vector<96x128xf32>
    %cst_63 = arith.constant 0.00999999977 : f32
    %104 = vector.broadcast %cst_63 : f32 to vector<96x128xf32>
    %105 = arith.mulf %104, %101 : vector<96x128xf32>
    %106 = arith.select %103, %101, %105 : vector<96x128xi1>, vector<96x128xf32>
    %c0_64 = arith.constant 0 : index
    %c0_65 = arith.constant 0 : index
    %c0_66 = arith.constant 0 : index
    %107 = vector.load %arg3[%c0_64, %c0_65, %c0_66] : memref<2x128x128xf32, #tpu.memory_space<vmem>>, vector<1x128x128xf32>
    %108 = vector.shape_cast %107 : vector<1x128x128xf32> to vector<128x128xf32>
    %cst_67 = arith.constant dense<0.000000e+00> : vector<96x128xf32>
    %109 = tpu.matmul %12, %108, %cst_67 {dimension_numbers = #tpu.dot_dimension_numbers<[1], [0], [0], [1], [0, 0, 1, 1], [], []>} : vector<96x128xf32>, vector<128x128xf32>, vector<96x128xf32> -> vector<96x128xf32>
    %110 = vector.broadcast %10 : vector<1x128xf32> to vector<96x128xf32>
    %111 = arith.addf %109, %110 : vector<96x128xf32>
    %112 = arith.addf %106, %111 : vector<96x128xf32>
    %113 = vector.shape_cast %112 : vector<96x128xf32> to vector<2x48x128xf32>
    %c0_68 = arith.constant 0 : index
    %c0_69 = arith.constant 0 : index
    %c0_70 = arith.constant 0 : index
    %114 = vector.load %arg7[%c0_68, %c0_69, %c0_70] : memref<2x50x128xf32, #tpu.memory_space<vmem>>, vector<2x48x128xf32>
    tpu.vector_store %arg7[%c0_68, %c0_69, %c0_70], %113 {strides = array<i32>} : memref<2x50x128xf32, #tpu.memory_space<vmem>>, vector<2x48x128xf32>,
    %c0_71 = arith.constant 0 : index
    %c0_72 = arith.constant 0 : index
    %c0_73 = arith.constant 0 : index
    %115 = tpu.strided_load %arg7[%c0_71, %c0_72, %c0_73] {strides = array<i32: 1, 3, 1>} : memref<2x50x128xf32, #tpu.memory_space<vmem>>, vector<2x16x128xf32>
    %c0_74 = arith.constant 0 : index
    %c1_75 = arith.constant 1 : index
    %c0_76 = arith.constant 0 : index
    %116 = tpu.strided_load %arg7[%c0_74, %c1_75, %c0_76] {strides = array<i32: 1, 3, 1>} : memref<2x50x128xf32, #tpu.memory_space<vmem>>, vector<2x16x128xf32>
    %117 = arith.maximumf %115, %116 : vector<2x16x128xf32>
    %c0_77 = arith.constant 0 : index
    %c2_78 = arith.constant 2 : index
    %c0_79 = arith.constant 0 : index
    %118 = tpu.strided_load %arg7[%c0_77, %c2_78, %c0_79] {strides = array<i32: 1, 3, 1>} : memref<2x50x128xf32, #tpu.memory_space<vmem>>, vector<2x16x128xf32>
    %119 = arith.maximumf %117, %118 : vector<2x16x128xf32>
    %cst_80 = arith.constant dense<0.000000e+00> : vector<2x128xf32>
    %120 = vector.multi_reduction <add>, %119, %cst_80 [1] : vector<2x16x128xf32> to vector<2x128xf32>
    %cst_81 = arith.constant 1.600000e+01 : f32
    %121 = vector.broadcast %cst_81 : f32 to vector<2x128xf32>
    %122 = arith.divf %120, %121 : vector<2x128xf32>
    %c0_82 = arith.constant 0 : index
    %c0_83 = arith.constant 0 : index
    %c0_84 = arith.constant 0 : index
    %123 = vector.load %arg4[%c0_82, %c0_83, %c0_84] : memref<2x128x128xf32, #tpu.memory_space<vmem>>, vector<1x128x128xf32>
    %124 = vector.shape_cast %123 : vector<1x128x128xf32> to vector<128x128xf32>
    %cst_85 = arith.constant dense<0.000000e+00> : vector<2x128xf32>
    %125 = tpu.matmul %122, %124, %cst_85 {dimension_numbers = #tpu.dot_dimension_numbers<[1], [0], [0], [1], [0, 0, 1, 1], [], []>} : vector<2x128xf32>, vector<128x128xf32>, vector<2x128xf32> -> vector<2x128xf32>
    %126 = vector.broadcast %11 : vector<1x128xf32> to vector<2x128xf32>
    %127 = arith.addf %125, %126 : vector<2x128xf32>
    %128 = arith.negf %127 : vector<2x128xf32>
    %129 = math.exp %128 : vector<2x128xf32>
    %cst_86 = arith.constant 1.000000e+00 : f32
    %130 = vector.broadcast %cst_86 : f32 to vector<2x128xf32>
    %131 = arith.addf %130, %129 : vector<2x128xf32>
    %132 = arith.divf %130, %131 : vector<2x128xf32>
    %cst_87 = arith.constant 1.000000e+00 : f32
    %133 = vector.broadcast %cst_87 : f32 to vector<2x16x128xf32>
    %134 = arith.addf %119, %133 : vector<2x16x128xf32>
    %135 = vector.shape_cast %132 : vector<2x128xf32> to vector<2x1x128xf32>
    %136 = vector.broadcast %135 : vector<2x1x128xf32> to vector<2x16x128xf32>
    %137 = arith.mulf %134, %136 : vector<2x16x128xf32>
    %c1_88 = arith.constant 1 : index
    %c0_89 = arith.constant 0 : index
    %c0_90 = arith.constant 0 : index
    %138 = vector.load %arg5[%c1_88, %c0_89, %c0_90] : memref<2x8x128xf32, #tpu.memory_space<vmem>>, vector<1x8x128xf32>
    %139 = vector.shape_cast %138 : vector<1x8x128xf32> to vector<8x128xf32>
    %140 = vector.extract_strided_slice %139 {offsets = [0, 0], sizes = [1, 128], strides = [1, 1]} : vector<8x128xf32> to vector<1x128xf32>
    %141 = vector.extract_strided_slice %139 {offsets = [1, 0], sizes = [1, 128], strides = [1, 1]} : vector<8x128xf32> to vector<1x128xf32>
    %142 = vector.extract_strided_slice %139 {offsets = [2, 0], sizes = [1, 128], strides = [1, 1]} : vector<8x128xf32> to vector<1x128xf32>
    %143 = vector.extract_strided_slice %139 {offsets = [3, 0], sizes = [1, 128], strides = [1, 1]} : vector<8x128xf32> to vector<1x128xf32>
    %144 = vector.extract_strided_slice %139 {offsets = [4, 0], sizes = [1, 128], strides = [1, 1]} : vector<8x128xf32> to vector<1x128xf32>
    %145 = vector.extract_strided_slice %139 {offsets = [5, 0], sizes = [1, 128], strides = [1, 1]} : vector<8x128xf32> to vector<1x128xf32>
    %146 = vector.extract_strided_slice %139 {offsets = [7, 0], sizes = [1, 128], strides = [1, 1]} : vector<8x128xf32> to vector<1x128xf32>
    %147 = vector.shape_cast %137 : vector<2x16x128xf32> to vector<32x128xf32>
    %cst_91 = arith.constant dense<0.000000e+00> : vector<128xf32>
    %148 = vector.multi_reduction <add>, %147, %cst_91 [0] : vector<32x128xf32> to vector<128xf32>
    %149 = vector.shape_cast %148 : vector<128xf32> to vector<1x128xf32>
    %150 = arith.mulf %147, %147 : vector<32x128xf32>
    %cst_92 = arith.constant dense<0.000000e+00> : vector<128xf32>
    %151 = vector.multi_reduction <add>, %150, %cst_92 [0] : vector<32x128xf32> to vector<128xf32>
    %152 = vector.shape_cast %151 : vector<128xf32> to vector<1x128xf32>
    %cst_93 = arith.constant 3.125000e-02 : f32
    %153 = vector.broadcast %cst_93 : f32 to vector<1x128xf32>
    %154 = arith.mulf %149, %153 : vector<1x128xf32>
    %cst_94 = arith.constant 3.125000e-02 : f32
    %155 = vector.broadcast %cst_94 : f32 to vector<1x128xf32>
    %156 = arith.mulf %152, %155 : vector<1x128xf32>
    %157 = arith.mulf %154, %154 : vector<1x128xf32>
    %158 = arith.subf %156, %157 : vector<1x128xf32>
    %cst_95 = arith.constant 0.000000e+00 : f32
    %159 = vector.broadcast %cst_95 : f32 to vector<1x128xf32>
    %160 = arith.maximumf %158, %159 : vector<1x128xf32>
    %161 = vector.broadcast %154 : vector<1x128xf32> to vector<32x128xf32>
    %162 = arith.subf %147, %161 : vector<32x128xf32>
    %cst_96 = arith.constant 9.99999974E-6 : f32
    %163 = vector.broadcast %cst_96 : f32 to vector<1x128xf32>
    %164 = arith.addf %160, %163 : vector<1x128xf32>
    %165 = math.rsqrt %164 : vector<1x128xf32>
    %166 = arith.mulf %140, %165 : vector<1x128xf32>
    %167 = vector.broadcast %166 : vector<1x128xf32> to vector<32x128xf32>
    %168 = arith.mulf %162, %167 : vector<32x128xf32>
    %169 = vector.broadcast %141 : vector<1x128xf32> to vector<32x128xf32>
    %170 = arith.addf %168, %169 : vector<32x128xf32>
    %cst_97 = arith.constant 0.000000e+00 : f32
    %171 = vector.broadcast %cst_97 : f32 to vector<32x128xf32>
    %172 = arith.cmpf ogt, %170, %171 : vector<32x128xf32>
    %cst_98 = arith.constant 0.00999999977 : f32
    %173 = vector.broadcast %cst_98 : f32 to vector<32x128xf32>
    %174 = arith.mulf %173, %170 : vector<32x128xf32>
    %175 = arith.select %172, %170, %174 : vector<32x128xi1>, vector<32x128xf32>
    %c0_99 = arith.constant 0 : index
    %c0_100 = arith.constant 0 : index
    %c0_101 = arith.constant 0 : index
    %176 = vector.load %arg7[%c0_99, %c0_100, %c0_101] : memref<2x50x128xf32, #tpu.memory_space<vmem>>, vector<2x1x128xf32>
    tpu.vector_store %arg7[%c0_99, %c0_100, %c0_101], %0 {strides = array<i32>} : memref<2x50x128xf32, #tpu.memory_space<vmem>>, vector<2x1x128xf32>,
    %c0_102 = arith.constant 0 : index
    %c17 = arith.constant 17 : index
    %c0_103 = arith.constant 0 : index
    %177 = vector.load %arg7[%c0_102, %c17, %c0_103] : memref<2x50x128xf32, #tpu.memory_space<vmem>>, vector<2x1x128xf32>
    tpu.vector_store %arg7[%c0_102, %c17, %c0_103], %0 {strides = array<i32>} : memref<2x50x128xf32, #tpu.memory_space<vmem>>, vector<2x1x128xf32>,
    %178 = vector.shape_cast %175 : vector<32x128xf32> to vector<2x16x128xf32>
    %c0_104 = arith.constant 0 : index
    %c1_105 = arith.constant 1 : index
    %c0_106 = arith.constant 0 : index
    %179 = vector.load %arg7[%c0_104, %c1_105, %c0_106] : memref<2x50x128xf32, #tpu.memory_space<vmem>>, vector<2x16x128xf32>
    tpu.vector_store %arg7[%c0_104, %c1_105, %c0_106], %178 {strides = array<i32>} : memref<2x50x128xf32, #tpu.memory_space<vmem>>, vector<2x16x128xf32>,
    %c0_107 = arith.constant 0 : index
    %c0_108 = arith.constant 0 : index
    %c0_109 = arith.constant 0 : index
    %180 = vector.load %arg7[%c0_107, %c0_108, %c0_109] : memref<2x50x128xf32, #tpu.memory_space<vmem>>, vector<2x16x128xf32>
    %181 = vector.shape_cast %180 : vector<2x16x128xf32> to vector<32x128xf32>
    %c0_110 = arith.constant 0 : index
    %c1_111 = arith.constant 1 : index
    %c0_112 = arith.constant 0 : index
    %182 = vector.load %arg7[%c0_110, %c1_111, %c0_112] : memref<2x50x128xf32, #tpu.memory_space<vmem>>, vector<2x16x128xf32>
    %183 = vector.shape_cast %182 : vector<2x16x128xf32> to vector<32x128xf32>
    %c0_113 = arith.constant 0 : index
    %c2_114 = arith.constant 2 : index
    %c0_115 = arith.constant 0 : index
    %184 = vector.load %arg7[%c0_113, %c2_114, %c0_115] : memref<2x50x128xf32, #tpu.memory_space<vmem>>, vector<2x16x128xf32>
    %185 = vector.shape_cast %184 : vector<2x16x128xf32> to vector<32x128xf32>
    %186 = tpu.concatenate %181, %183, %185 in 1 : vector<32x128xf32>, vector<32x128xf32>, vector<32x128xf32> -> vector<32x384xf32>
    %c1_116 = arith.constant 1 : index
    %c0_117 = arith.constant 0 : index
    %c0_118 = arith.constant 0 : index
    %187 = vector.load %arg1[%c1_116, %c0_117, %c0_118] : memref<2x384x128xf32, #tpu.memory_space<vmem>>, vector<1x384x128xf32>
    %188 = vector.shape_cast %187 : vector<1x384x128xf32> to vector<384x128xf32>
    %cst_119 = arith.constant dense<0.000000e+00> : vector<32x128xf32>
    %189 = tpu.matmul %186, %188, %cst_119 {dimension_numbers = #tpu.dot_dimension_numbers<[1], [0], [0], [1], [0, 0, 1, 1], [], []>} : vector<32x384xf32>, vector<384x128xf32>, vector<32x128xf32> -> vector<32x128xf32>
    %190 = vector.broadcast %142 : vector<1x128xf32> to vector<32x128xf32>
    %191 = arith.addf %189, %190 : vector<32x128xf32>
    %cst_120 = arith.constant dense<0.000000e+00> : vector<128xf32>
    %192 = vector.multi_reduction <add>, %191, %cst_120 [0] : vector<32x128xf32> to vector<128xf32>
    %193 = vector.shape_cast %192 : vector<128xf32> to vector<1x128xf32>
    %194 = arith.mulf %191, %191 : vector<32x128xf32>
    %cst_121 = arith.constant dense<0.000000e+00> : vector<128xf32>
    %195 = vector.multi_reduction <add>, %194, %cst_121 [0] : vector<32x128xf32> to vector<128xf32>
    %196 = vector.shape_cast %195 : vector<128xf32> to vector<1x128xf32>
    %cst_122 = arith.constant 3.125000e-02 : f32
    %197 = vector.broadcast %cst_122 : f32 to vector<1x128xf32>
    %198 = arith.mulf %193, %197 : vector<1x128xf32>
    %cst_123 = arith.constant 3.125000e-02 : f32
    %199 = vector.broadcast %cst_123 : f32 to vector<1x128xf32>
    %200 = arith.mulf %196, %199 : vector<1x128xf32>
    %201 = arith.mulf %198, %198 : vector<1x128xf32>
    %202 = arith.subf %200, %201 : vector<1x128xf32>
    %cst_124 = arith.constant 0.000000e+00 : f32
    %203 = vector.broadcast %cst_124 : f32 to vector<1x128xf32>
    %204 = arith.maximumf %202, %203 : vector<1x128xf32>
    %cst_125 = arith.constant 9.99999974E-6 : f32
    %205 = vector.broadcast %cst_125 : f32 to vector<1x128xf32>
    %206 = arith.addf %204, %205 : vector<1x128xf32>
    %207 = math.rsqrt %206 : vector<1x128xf32>
    %208 = arith.mulf %143, %207 : vector<1x128xf32>
    %209 = arith.mulf %198, %208 : vector<1x128xf32>
    %210 = arith.subf %144, %209 : vector<1x128xf32>
    %211 = tpu.concatenate %210, %210, %210 in 1 : vector<1x128xf32>, vector<1x128xf32>, vector<1x128xf32> -> vector<1x384xf32>
    %c1_126 = arith.constant 1 : index
    %c0_127 = arith.constant 0 : index
    %c0_128 = arith.constant 0 : index
    %212 = vector.load %arg2[%c1_126, %c0_127, %c0_128] : memref<2x384x128xf32, #tpu.memory_space<vmem>>, vector<1x384x128xf32>
    %213 = vector.shape_cast %212 : vector<1x384x128xf32> to vector<384x128xf32>
    %cst_129 = arith.constant dense<0.000000e+00> : vector<1x128xf32>
    %214 = tpu.matmul %211, %213, %cst_129 {dimension_numbers = #tpu.dot_dimension_numbers<[1], [0], [0], [1], [0, 0, 1, 1], [], []>} : vector<1x384xf32>, vector<384x128xf32>, vector<1x128xf32> -> vector<1x128xf32>
    %215 = arith.addf %145, %214 : vector<1x128xf32>
    %cst_130 = arith.constant 0.000000e+00 : f32
    %216 = vector.broadcast %cst_130 : f32 to vector<1x128xf32>
    %217 = arith.subf %216, %210 : vector<1x128xf32>
    %218 = vector.shape_cast %217 : vector<1x128xf32> to vector<1x1x128xf32>
    %219 = vector.shape_cast %218 : vector<1x1x128xf32> to vector<1x1x128xf32>
    %220 = vector.broadcast %219 : vector<1x1x128xf32> to vector<2x1x128xf32>
    %c0_131 = arith.constant 0 : index
    %c0_132 = arith.constant 0 : index
    %c0_133 = arith.constant 0 : index
    %221 = vector.load %arg7[%c0_131, %c0_132, %c0_133] : memref<2x50x128xf32, #tpu.memory_space<vmem>>, vector<2x1x128xf32>
    tpu.vector_store %arg7[%c0_131, %c0_132, %c0_133], %220 {strides = array<i32>} : memref<2x50x128xf32, #tpu.memory_space<vmem>>, vector<2x1x128xf32>,
    %c0_134 = arith.constant 0 : index
    %c17_135 = arith.constant 17 : index
    %c0_136 = arith.constant 0 : index
    %222 = vector.load %arg7[%c0_134, %c17_135, %c0_136] : memref<2x50x128xf32, #tpu.memory_space<vmem>>, vector<2x1x128xf32>
    tpu.vector_store %arg7[%c0_134, %c17_135, %c0_136], %220 {strides = array<i32>} : memref<2x50x128xf32, #tpu.memory_space<vmem>>, vector<2x1x128xf32>,
    %223 = vector.broadcast %208 : vector<1x128xf32> to vector<32x128xf32>
    %224 = arith.mulf %191, %223 : vector<32x128xf32>
    %225 = vector.shape_cast %224 : vector<32x128xf32> to vector<2x16x128xf32>
    %c0_137 = arith.constant 0 : index
    %c1_138 = arith.constant 1 : index
    %c0_139 = arith.constant 0 : index
    %226 = vector.load %arg7[%c0_137, %c1_138, %c0_139] : memref<2x50x128xf32, #tpu.memory_space<vmem>>, vector<2x16x128xf32>
    tpu.vector_store %arg7[%c0_137, %c1_138, %c0_139], %225 {strides = array<i32>} : memref<2x50x128xf32, #tpu.memory_space<vmem>>, vector<2x16x128xf32>,
    %c0_140 = arith.constant 0 : index
    %c0_141 = arith.constant 0 : index
    %c0_142 = arith.constant 0 : index
    %227 = vector.load %arg7[%c0_140, %c0_141, %c0_142] : memref<2x50x128xf32, #tpu.memory_space<vmem>>, vector<2x16x128xf32>
    %228 = vector.shape_cast %227 : vector<2x16x128xf32> to vector<32x128xf32>
    %c0_143 = arith.constant 0 : index
    %c1_144 = arith.constant 1 : index
    %c0_145 = arith.constant 0 : index
    %229 = vector.load %arg7[%c0_143, %c1_144, %c0_145] : memref<2x50x128xf32, #tpu.memory_space<vmem>>, vector<2x16x128xf32>
    %230 = vector.shape_cast %229 : vector<2x16x128xf32> to vector<32x128xf32>
    %c0_146 = arith.constant 0 : index
    %c2_147 = arith.constant 2 : index
    %c0_148 = arith.constant 0 : index
    %231 = vector.load %arg7[%c0_146, %c2_147, %c0_148] : memref<2x50x128xf32, #tpu.memory_space<vmem>>, vector<2x16x128xf32>
    %232 = vector.shape_cast %231 : vector<2x16x128xf32> to vector<32x128xf32>
    %233 = tpu.concatenate %228, %230, %232 in 1 : vector<32x128xf32>, vector<32x128xf32>, vector<32x128xf32> -> vector<32x384xf32>
    %cst_149 = arith.constant dense<0.000000e+00> : vector<32x128xf32>
    %234 = tpu.matmul %233, %213, %cst_149 {dimension_numbers = #tpu.dot_dimension_numbers<[1], [0], [0], [1], [0, 0, 1, 1], [], []>} : vector<32x384xf32>, vector<384x128xf32>, vector<32x128xf32> -> vector<32x128xf32>
    %235 = vector.broadcast %215 : vector<1x128xf32> to vector<32x128xf32>
    %236 = arith.addf %234, %235 : vector<32x128xf32>
    %cst_150 = arith.constant 0.000000e+00 : f32
    %237 = vector.broadcast %cst_150 : f32 to vector<32x128xf32>
    %238 = arith.cmpf ogt, %236, %237 : vector<32x128xf32>
    %cst_151 = arith.constant 0.00999999977 : f32
    %239 = vector.broadcast %cst_151 : f32 to vector<32x128xf32>
    %240 = arith.mulf %239, %236 : vector<32x128xf32>
    %241 = arith.select %238, %236, %240 : vector<32x128xi1>, vector<32x128xf32>
    %242 = arith.addf %241, %147 : vector<32x128xf32>
    %243 = vector.shape_cast %242 : vector<32x128xf32> to vector<2x16x128xf32>
    %c0_152 = arith.constant 0 : index
    %c0_153 = arith.constant 0 : index
    %c0_154 = arith.constant 0 : index
    %244 = vector.load %arg7[%c0_152, %c0_153, %c0_154] : memref<2x50x128xf32, #tpu.memory_space<vmem>>, vector<2x16x128xf32>
    tpu.vector_store %arg7[%c0_152, %c0_153, %c0_154], %243 {strides = array<i32>} : memref<2x50x128xf32, #tpu.memory_space<vmem>>, vector<2x16x128xf32>,
    %c0_155 = arith.constant 0 : index
    %c0_156 = arith.constant 0 : index
    %c0_157 = arith.constant 0 : index
    %245 = tpu.strided_load %arg7[%c0_155, %c0_156, %c0_157] {strides = array<i32: 1, 3, 1>} : memref<2x50x128xf32, #tpu.memory_space<vmem>>, vector<2x5x128xf32>
    %c0_158 = arith.constant 0 : index
    %c1_159 = arith.constant 1 : index
    %c0_160 = arith.constant 0 : index
    %246 = tpu.strided_load %arg7[%c0_158, %c1_159, %c0_160] {strides = array<i32: 1, 3, 1>} : memref<2x50x128xf32, #tpu.memory_space<vmem>>, vector<2x5x128xf32>
    %247 = arith.maximumf %245, %246 : vector<2x5x128xf32>
    %c0_161 = arith.constant 0 : index
    %c2_162 = arith.constant 2 : index
    %c0_163 = arith.constant 0 : index
    %248 = tpu.strided_load %arg7[%c0_161, %c2_162, %c0_163] {strides = array<i32: 1, 3, 1>} : memref<2x50x128xf32, #tpu.memory_space<vmem>>, vector<2x5x128xf32>
    %249 = arith.maximumf %247, %248 : vector<2x5x128xf32>
    %cst_164 = arith.constant dense<0.000000e+00> : vector<2x128xf32>
    %250 = vector.multi_reduction <add>, %249, %cst_164 [1] : vector<2x5x128xf32> to vector<2x128xf32>
    %cst_165 = arith.constant 5.000000e+00 : f32
    %251 = vector.broadcast %cst_165 : f32 to vector<2x128xf32>
    %252 = arith.divf %250, %251 : vector<2x128xf32>
    %c1_166 = arith.constant 1 : index
    %c0_167 = arith.constant 0 : index
    %c0_168 = arith.constant 0 : index
    %253 = vector.load %arg4[%c1_166, %c0_167, %c0_168] : memref<2x128x128xf32, #tpu.memory_space<vmem>>, vector<1x128x128xf32>
    %254 = vector.shape_cast %253 : vector<1x128x128xf32> to vector<128x128xf32>
    %cst_169 = arith.constant dense<0.000000e+00> : vector<2x128xf32>
    %255 = tpu.matmul %252, %254, %cst_169 {dimension_numbers = #tpu.dot_dimension_numbers<[1], [0], [0], [1], [0, 0, 1, 1], [], []>} : vector<2x128xf32>, vector<128x128xf32>, vector<2x128xf32> -> vector<2x128xf32>
    %256 = vector.broadcast %146 : vector<1x128xf32> to vector<2x128xf32>
    %257 = arith.addf %255, %256 : vector<2x128xf32>
    %258 = arith.negf %257 : vector<2x128xf32>
    %259 = math.exp %258 : vector<2x128xf32>
    %cst_170 = arith.constant 1.000000e+00 : f32
    %260 = vector.broadcast %cst_170 : f32 to vector<2x128xf32>
    %261 = arith.addf %260, %259 : vector<2x128xf32>
    %262 = arith.divf %260, %261 : vector<2x128xf32>
    %cst_171 = arith.constant 1.000000e+00 : f32
    %263 = vector.broadcast %cst_171 : f32 to vector<2x5x128xf32>
    %264 = arith.addf %249, %263 : vector<2x5x128xf32>
    %265 = vector.shape_cast %262 : vector<2x128xf32> to vector<2x1x128xf32>
    %266 = vector.broadcast %265 : vector<2x1x128xf32> to vector<2x5x128xf32>
    %267 = arith.mulf %264, %266 : vector<2x5x128xf32>
    %c0_172 = arith.constant 0 : index
    %c0_173 = arith.constant 0 : index
    %c0_174 = arith.constant 0 : index
    %268 = vector.load %arg6[%c0_172, %c0_173, %c0_174] : memref<2x5x128xf32, #tpu.memory_space<vmem>>, vector<2x5x128xf32>
    tpu.vector_store %arg6[%c0_172, %c0_173, %c0_174], %267 {strides = array<i32>} : memref<2x5x128xf32, #tpu.memory_space<vmem>>, vector<2x5x128xf32>,
    return
  }
}

</mosaic_0001>

<llo_original>
// kernel: tpu_custom_call.1
$region0: #{tpu_custom_call.1}
  #allocation0 [shape = 'u32[]', space=smem, size = 0x4, offset = 0x4, fixed_abs, tag = 'smem constant byte address 0x4 - core index']
  #allocation1 [shape = 'u32[144,128]{1,0:T(1,128)}', space=vmem, size = 0x12000, scoped, tag = 'internal scratch']
  #allocation2 [shape = 'f32[2,50,128]{2,1,0:T(8,128)}', space=vmem, size = 0xe000, scoped, tag = 'scratch operand']
  %s0 = inlined_call_operand.hbm [shape: f32[2,48,128], index: 0, kind: input, shape index: {}]
  %s1 = inlined_call_operand.hbm [shape: f32[2,384,128], index: 1, kind: input, shape index: {}]
  %s2 = inlined_call_operand.hbm [shape: f32[2,384,128], index: 2, kind: input, shape index: {}]
  %s3 = inlined_call_operand.hbm [shape: f32[2,128,128], index: 3, kind: input, shape index: {}]
  %s4 = inlined_call_operand.hbm [shape: f32[2,128,128], index: 4, kind: input, shape index: {}]
  %s5 = inlined_call_operand.vmem [shape: f32[2,8,128], index: 5, kind: input, shape index: {}]
  %s6 = inlined_call_operand.vmem [shape: f32[2,5,128], index: 6, kind: output, shape index: {}]
  %s7 = sld [smem:[#allocation0]]
  $region54: #{tpu_custom_call.1} parent=0
    _
  %s9 = ssub.s32 1, %s7
  %s10 = scalar_select 0, %s9, %s7
  $region1: #{tpu_custom_call.1} parent=0
    #allocation3 [shape = 'u8[49152]{0}', space=vmem, size = 0xc000, scoped, tag = 'input window, operand 0, single buffered']
    #allocation4 [shape = 's32[1]{0}', space=sflag, size = 0x4, scoped, tag = 'scoped memory for tpu_custom_call.1']
    #allocation5 [shape = 'u8[393216]{0}', space=vmem, size = 0x60000, scoped, tag = 'input window, operand 1, single buffered']
    #allocation6 [shape = 's32[1]{0}', space=sflag, size = 0x4, scoped, tag = 'scoped memory for tpu_custom_call.1']
    #allocation7 [shape = 'u8[393216]{0}', space=vmem, size = 0x60000, scoped, tag = 'input window, operand 2, single buffered']
    #allocation8 [shape = 'u8[131072]{0}', space=vmem, size = 0x20000, scoped, tag = 'input window, operand 3, single buffered']
    #allocation9 [shape = 's32[1]{0}', space=sflag, size = 0x4, scoped, tag = 'scoped memory for tpu_custom_call.1']
    #allocation10 [shape = 'u8[131072]{0}', space=vmem, size = 0x20000, scoped, tag = 'input window, operand 4, single buffered']
    %11 = vsyncpa [#allocation4], 0
    %12 = vsyncpa [#allocation6], 0
    %13 = vsyncpa [#allocation9], 0
    // Predicated region
    $region2: #{tpu_custom_call.1} parent=1 // pred_check
      _
    $region3: #{tpu_custom_call.1} parent=1 // pred_check_branch
      %15 = sbr.rel (0) target = $region5
    $region4: #{tpu_custom_call.1} parent=1 // pred_region
      %s17 = ssub.s32 1536, 1536
      %18 = vsyncadd [#allocation4], %s17
      %s19 = sshll.u32 [#allocation3], 4
      %s20 = int_to_ptr.vmem [resolvable:$true] %s19
      %25 = dma.hbm_to_vmem [thread:$0]  %s0, 1536, %s20, [#allocation4], 128, 128, 8
    $region5: #{tpu_custom_call.1} parent=1 // pred_fallthru
      _
    // Predicated region
    $region6: #{tpu_custom_call.1} parent=1 // pred_check
      _
    $region7: #{tpu_custom_call.1} parent=1 // pred_check_branch
      %27 = sbr.rel (0) target = $region9
    $region8: #{tpu_custom_call.1} parent=1 // pred_region
      %s29 = ssub.s32 12288, 12288
      %30 = vsyncadd [#allocation6], %s29
      %s31 = sshll.u32 [#allocation5], 4
      %s32 = int_to_ptr.vmem [resolvable:$true] %s31
      %37 = dma.hbm_to_vmem [thread:$0]  %s1, 12288, %s32, [#allocation6], 128, 128, 8
    $region9: #{tpu_custom_call.1} parent=1 // pred_fallthru
      _
    // Predicated region
    $region10: #{tpu_custom_call.1} parent=1 // pred_check
      _
    $region11: #{tpu_custom_call.1} parent=1 // pred_check_branch
      %39 = sbr.rel (0) target = $region13
    $region12: #{tpu_custom_call.1} parent=1 // pred_region
      %s41 = ssub.s32 12288, 12288
      %42 = vsyncadd [#allocation6], %s41
      %s43 = sshll.u32 [#allocation7], 4
      %s44 = int_to_ptr.vmem [resolvable:$true] %s43
      %49 = dma.hbm_to_vmem [thread:$0]  %s2, 12288, %s44, [#allocation6], 128, 128, 8
    $region13: #{tpu_custom_call.1} parent=1 // pred_fallthru
      _
    // Predicated region
    $region14: #{tpu_custom_call.1} parent=1 // pred_check
      _
    $region15: #{tpu_custom_call.1} parent=1 // pred_check_branch
      %51 = sbr.rel (0) target = $region17
    $region16: #{tpu_custom_call.1} parent=1 // pred_region
      %s53 = ssub.s32 4096, 4096
      %54 = vsyncadd [#allocation9], %s53
      %s55 = sshll.u32 [#allocation8], 4
      %s56 = int_to_ptr.vmem [resolvable:$true] %s55
      %61 = dma.hbm_to_vmem [thread:$0]  %s3, 4096, %s56, [#allocation9], 128, 128, 8
    $region17: #{tpu_custom_call.1} parent=1 // pred_fallthru
      _
    // Predicated region
    $region18: #{tpu_custom_call.1} parent=1 // pred_check
      _
    $region19: #{tpu_custom_call.1} parent=1 // pred_check_branch
      %63 = sbr.rel (0) target = $region21
    $region20: #{tpu_custom_call.1} parent=1 // pred_region
      %s65 = ssub.s32 4096, 4096
      %66 = vsyncadd [#allocation9], %s65
      %s67 = sshll.u32 [#allocation10], 4
      %s68 = int_to_ptr.vmem [resolvable:$true] %s67
      %73 = dma.hbm_to_vmem [thread:$0]  %s4, 4096, %s68, [#allocation9], 128, 128, 8
    $region21: #{tpu_custom_call.1} parent=1 // pred_fallthru
      _
    // Predicated region
    $region22: #{tpu_custom_call.1} parent=1 // pred_check
      _
    $region23: #{tpu_custom_call.1} parent=1 // pred_check_branch
      %75 = sbr.rel (0) target = $region25
    $region24: #{tpu_custom_call.1} parent=1 // pred_region
      _
    $region25: #{tpu_custom_call.1} parent=1 // pred_fallthru
      _
    // Predicated region
    $region26: #{tpu_custom_call.1} parent=1 // pred_check
      _
    $region27: #{tpu_custom_call.1} parent=1 // pred_check_branch
      %77 = sbr.rel (0) target = $region29
    $region28: #{tpu_custom_call.1} parent=1 // pred_region
      %78 = dma.done [#allocation4], 1536
    $region29: #{tpu_custom_call.1} parent=1 // pred_fallthru
      _
    // Predicated region
    $region30: #{tpu_custom_call.1} parent=1 // pred_check
      _
    $region31: #{tpu_custom_call.1} parent=1 // pred_check_branch
      %80 = sbr.rel (0) target = $region33
    $region32: #{tpu_custom_call.1} parent=1 // pred_region
      %81 = dma.done [#allocation6], 12288
    $region33: #{tpu_custom_call.1} parent=1 // pred_fallthru
      _
    // Predicated region
    $region34: #{tpu_custom_call.1} parent=1 // pred_check
      _
    $region35: #{tpu_custom_call.1} parent=1 // pred_check_branch
      %83 = sbr.rel (0) target = $region37
    $region36: #{tpu_custom_call.1} parent=1 // pred_region
      %84 = dma.done [#allocation6], 12288
    $region37: #{tpu_custom_call.1} parent=1 // pred_fallthru
      _
    // Predicated region
    $region38: #{tpu_custom_call.1} parent=1 // pred_check
      _
    $region39: #{tpu_custom_call.1} parent=1 // pred_check_branch
      %86 = sbr.rel (0) target = $region41
    $region40: #{tpu_custom_call.1} parent=1 // pred_region
      %87 = dma.done [#allocation9], 4096
    $region41: #{tpu_custom_call.1} parent=1 // pred_fallthru
      _
    // Predicated region
    $region42: #{tpu_custom_call.1} parent=1 // pred_check
      _
    $region43: #{tpu_custom_call.1} parent=1 // pred_check_branch
      %89 = sbr.rel (0) target = $region45
    $region44: #{tpu_custom_call.1} parent=1 // pred_region
      %90 = dma.done [#allocation9], 4096
    $region45: #{tpu_custom_call.1} parent=1 // pred_fallthru
      _
    %v91 = vld [vmem:[#allocation3] sm:$0xff]
    %v92 = vld [vmem:[#allocation3 + $0x8] sm:$0xff]
    %v93 = vld [vmem:[#allocation3 + $0x10] sm:$0xff]
    %v94 = vld [vmem:[#allocation3 + $0x18] sm:$0xff]
    %v95 = vld [vmem:[#allocation3 + $0x20] sm:$0xff]
    %v96 = vld [vmem:[#allocation3 + $0x28] sm:$0xff]
    %v97 = vld [vmem:[#allocation3 + $0x30] sm:$0xff]
    %v98 = vld [vmem:[#allocation3 + $0x38] sm:$0xff]
    %v99 = vld [vmem:[#allocation3 + $0x40] sm:$0xff]
    %v100 = vld [vmem:[#allocation3 + $0x48] sm:$0xff]
    %v101 = vld [vmem:[#allocation3 + $0x50] sm:$0xff]
    %v102 = vld [vmem:[#allocation3 + $0x58] sm:$0xff]
    %v103 = vld [vmem:[%s5] sm:$0xff]
    %v104 = vadd.f32 %v91, %v92
    %v105 = vadd.f32 %v104, %v93
    %v106 = vadd.f32 %v105, %v94
    %v107 = vadd.f32 %v106, %v95
    %v108 = vadd.f32 %v107, %v96
    %v109 = vadd.f32 %v108, %v97
    %v110 = vadd.f32 %v109, %v98
    %v111 = vadd.f32 %v110, %v99
    %v112 = vadd.f32 %v111, %v100
    %v113 = vadd.f32 %v112, %v101
    %v114 = vadd.f32 %v113, %v102
    %v115 = vrot.slane %v114, 4
    %v116 = vadd.f32 %v114, %v115
    %v117 = vrot.slane %v116, 2
    %v118 = vadd.f32 %v116, %v117
    %v119 = vrot.slane %v118, 1
    %v120 = vadd.f32 %v118, %v119
    %v121 = vmul.f32 %v91, %v91
    %v122 = vmul.f32 %v92, %v92
    %v123 = vmul.f32 %v93, %v93
    %v124 = vmul.f32 %v94, %v94
    %v125 = vmul.f32 %v95, %v95
    %v126 = vmul.f32 %v96, %v96
    %v127 = vmul.f32 %v97, %v97
    %v128 = vmul.f32 %v98, %v98
    %v129 = vmul.f32 %v99, %v99
    %v130 = vmul.f32 %v100, %v100
    %v131 = vmul.f32 %v101, %v101
    %v132 = vmul.f32 %v102, %v102
    %v133 = vadd.f32 %v121, %v122
    %v134 = vadd.f32 %v133, %v123
    %v135 = vadd.f32 %v134, %v124
    %v136 = vadd.f32 %v135, %v125
    %v137 = vadd.f32 %v136, %v126
    %v138 = vadd.f32 %v137, %v127
    %v139 = vadd.f32 %v138, %v128
    %v140 = vadd.f32 %v139, %v129
    %v141 = vadd.f32 %v140, %v130
    %v142 = vadd.f32 %v141, %v131
    %v143 = vadd.f32 %v142, %v132
    %v144 = vrot.slane %v143, 4
    %v145 = vadd.f32 %v143, %v144
    %v146 = vrot.slane %v145, 2
    %v147 = vadd.f32 %v145, %v146
    %v148 = vrot.slane %v147, 1
    %v149 = vadd.f32 %v147, %v148
    %v150 = vmul.f32 %v120, 0.010416667
    %v151 = vmul.f32 %v149, 0.010416667
    %v152 = vmul.f32 %v150, %v150
    %v153 = vsub.f32 %v151, %v152
    %v154 = vmax.f32 %v153, 0.0
    %v155 = vsub.f32 %v91, %v150
    %v156 = vsub.f32 %v92, %v150
    %v157 = vsub.f32 %v93, %v150
    %v158 = vsub.f32 %v94, %v150
    %v159 = vsub.f32 %v95, %v150
    %v160 = vsub.f32 %v96, %v150
    %v161 = vsub.f32 %v97, %v150
    %v162 = vsub.f32 %v98, %v150
    %v163 = vsub.f32 %v99, %v150
    %v164 = vsub.f32 %v100, %v150
    %v165 = vsub.f32 %v101, %v150
    %v166 = vsub.f32 %v102, %v150
    %v167 = vadd.f32 %v154, 1e-05
    %v168 = vrsqrt.pop %v167
    %v169 = vmul.f32 %v103, %v168
    %v170 = vlaneseq
    %v171 = vshrl.u32 %v170, 7
    %v172 = vsub.s32 0, %v171
    %v173 = vrot.slane %v169, %v172
    %v174 = vmul.f32 %v155, %v173
    %v175 = vmul.f32 %v156, %v173
    %v176 = vmul.f32 %v157, %v173
    %v177 = vmul.f32 %v158, %v173
    %v178 = vmul.f32 %v159, %v173
    %v179 = vmul.f32 %v160, %v173
    %v180 = vmul.f32 %v161, %v173
    %v181 = vmul.f32 %v162, %v173
    %v182 = vmul.f32 %v163, %v173
    %v183 = vmul.f32 %v164, %v173
    %v184 = vmul.f32 %v165, %v173
    %v185 = vmul.f32 %v166, %v173
    %v186 = vlaneseq
    %v187 = vshrl.u32 %v186, 7
    %v188 = vsub.s32 1, %v187
    %v189 = vrot.slane %v103, %v188
    %v190 = vadd.f32 %v174, %v189
    %v191 = vadd.f32 %v175, %v189
    %v192 = vadd.f32 %v176, %v189
    %v193 = vadd.f32 %v177, %v189
    %v194 = vadd.f32 %v178, %v189
    %v195 = vadd.f32 %v179, %v189
    %v196 = vadd.f32 %v180, %v189
    %v197 = vadd.f32 %v181, %v189
    %v198 = vadd.f32 %v182, %v189
    %v199 = vadd.f32 %v183, %v189
    %v200 = vadd.f32 %v184, %v189
    %v201 = vadd.f32 %v185, %v189
    %vm202 = vcmp.gt.f32.partialorder %v190, 0.0
    %vm203 = vcmp.gt.f32.partialorder %v191, 0.0
    %vm204 = vcmp.gt.f32.partialorder %v192, 0.0
    %vm205 = vcmp.gt.f32.partialorder %v193, 0.0
    %vm206 = vcmp.gt.f32.partialorder %v194, 0.0
    %vm207 = vcmp.gt.f32.partialorder %v195, 0.0
    %vm208 = vcmp.gt.f32.partialorder %v196, 0.0
    %vm209 = vcmp.gt.f32.partialorder %v197, 0.0
    %vm210 = vcmp.gt.f32.partialorder %v198, 0.0
    %vm211 = vcmp.gt.f32.partialorder %v199, 0.0
    %vm212 = vcmp.gt.f32.partialorder %v200, 0.0
    %vm213 = vcmp.gt.f32.partialorder %v201, 0.0
    %v214 = vmul.f32 %v190, 0.01
    %v215 = vmul.f32 %v191, 0.01
    %v216 = vmul.f32 %v192, 0.01
    %v217 = vmul.f32 %v193, 0.01
    %v218 = vmul.f32 %v194, 0.01
    %v219 = vmul.f32 %v195, 0.01
    %v220 = vmul.f32 %v196, 0.01
    %v221 = vmul.f32 %v197, 0.01
    %v222 = vmul.f32 %v198, 0.01
    %v223 = vmul.f32 %v199, 0.01
    %v224 = vmul.f32 %v200, 0.01
    %v225 = vmul.f32 %v201, 0.01
    %v226 = vsel %vm202, %v190, %v214
    %v227 = vsel %vm203, %v191, %v215
    %v228 = vsel %vm204, %v192, %v216
    %v229 = vsel %vm205, %v193, %v217
    %v230 = vsel %vm206, %v194, %v218
    %v231 = vsel %vm207, %v195, %v219
    %v232 = vsel %vm208, %v196, %v220
    %v233 = vsel %vm209, %v197, %v221
    %v234 = vsel %vm210, %v198, %v222
    %v235 = vsel %vm211, %v199, %v223
    %v236 = vsel %vm212, %v200, %v224
    %v237 = vsel %vm213, %v201, %v225
    %238 = vst [vmem:[#allocation2] sm:$0x1] 0.0
    %239 = vst [vmem:[#allocation2 + $0x38] sm:$0x1] 0.0
    %240 = vst [vmem:[#allocation2 + $0x31] sm:$0x1] 0.0
    %241 = vst [vmem:[#allocation2 + $0x69] sm:$0x1] 0.0
    %242 = vst [vmem:[#allocation2 + $0x1] sm:$0xff] %v226
    %243 = vst [vmem:[#allocation2 + $0x9] sm:$0xff] %v227
    %244 = vst [vmem:[#allocation2 + $0x11] sm:$0xff] %v228
    %245 = vst [vmem:[#allocation2 + $0x19] sm:$0xff] %v229
    %246 = vst [vmem:[#allocation2 + $0x21] sm:$0xff] %v230
    %247 = vst [vmem:[#allocation2 + $0x29] sm:$0xff] %v231
    %248 = vst [vmem:[#allocation2 + $0x39] sm:$0xff] %v232
    %249 = vst [vmem:[#allocation2 + $0x41] sm:$0xff] %v233
    %250 = vst [vmem:[#allocation2 + $0x49] sm:$0xff] %v234
    %251 = vst [vmem:[#allocation2 + $0x51] sm:$0xff] %v235
    %252 = vst [vmem:[#allocation2 + $0x59] sm:$0xff] %v236
    %253 = vst [vmem:[#allocation2 + $0x61] sm:$0xff] %v237
    %v254 = vld [vmem:[#allocation2] sm:$0xff]
    %v255 = vld [vmem:[#allocation2 + $0x8] sm:$0xff]
    %v256 = vld [vmem:[#allocation2 + $0x10] sm:$0xff]
    %v257 = vld [vmem:[#allocation2 + $0x18] sm:$0xff]
    %v258 = vld [vmem:[#allocation2 + $0x20] sm:$0xff]
    %v259 = vld [vmem:[#allocation2 + $0x28] sm:$0xff]
    %v260 = vld [vmem:[#allocation2 + $0x38] sm:$0xff]
    %v261 = vld [vmem:[#allocation2 + $0x40] sm:$0xff]
    %v262 = vld [vmem:[#allocation2 + $0x48] sm:$0xff]
    %v263 = vld [vmem:[#allocation2 + $0x50] sm:$0xff]
    %v264 = vld [vmem:[#allocation2 + $0x58] sm:$0xff]
    %v265 = vld [vmem:[#allocation2 + $0x60] sm:$0xff]
    %v266 = vld [vmem:[#allocation2 + $0x1] sm:$0xff]
    %v267 = vld [vmem:[#allocation2 + $0x9] sm:$0xff]
    %v268 = vld [vmem:[#allocation2 + $0x11] sm:$0xff]
    %v269 = vld [vmem:[#allocation2 + $0x19] sm:$0xff]
    %v270 = vld [vmem:[#allocation2 + $0x21] sm:$0xff]
    %v271 = vld [vmem:[#allocation2 + $0x29] sm:$0xff]
    %v272 = vld [vmem:[#allocation2 + $0x39] sm:$0xff]
    %v273 = vld [vmem:[#allocation2 + $0x41] sm:$0xff]
    %v274 = vld [vmem:[#allocation2 + $0x49] sm:$0xff]
    %v275 = vld [vmem:[#allocation2 + $0x51] sm:$0xff]
    %v276 = vld [vmem:[#allocation2 + $0x59] sm:$0xff]
    %v277 = vld [vmem:[#allocation2 + $0x61] sm:$0xff]
    %v278 = vld [vmem:[#allocation2 + $0x2] sm:$0xff]
    %v279 = vld [vmem:[#allocation2 + $0xa] sm:$0xff]
    %v280 = vld [vmem:[#allocation2 + $0x12] sm:$0xff]
    %v281 = vld [vmem:[#allocation2 + $0x1a] sm:$0xff]
    %v282 = vld [vmem:[#allocation2 + $0x22] sm:$0xff]
    %v283 = vld [vmem:[#allocation2 + $0x2a] sm:$0xff]
    %v284 = vld [vmem:[#allocation2 + $0x3a] sm:$0xff]
    %v285 = vld [vmem:[#allocation2 + $0x42] sm:$0xff]
    %v286 = vld [vmem:[#allocation2 + $0x4a] sm:$0xff]
    %v287 = vld [vmem:[#allocation2 + $0x52] sm:$0xff]
    %v288 = vld [vmem:[#allocation2 + $0x5a] sm:$0xff]
    %v289 = vld [vmem:[#allocation2 + $0x62] sm:$0xff]
    %v290 = vld [vmem:[#allocation5] sm:$0xff]
    %v291 = vld [vmem:[#allocation5 + $0x8] sm:$0xff]
    %v292 = vld [vmem:[#allocation5 + $0x10] sm:$0xff]
    %v293 = vld [vmem:[#allocation5 + $0x18] sm:$0xff]
    %v294 = vld [vmem:[#allocation5 + $0x20] sm:$0xff]
    %v295 = vld [vmem:[#allocation5 + $0x28] sm:$0xff]
    %v296 = vld [vmem:[#allocation5 + $0x30] sm:$0xff]
    %v297 = vld [vmem:[#allocation5 + $0x38] sm:$0xff]
    %v298 = vld [vmem:[#allocation5 + $0x40] sm:$0xff]
    %v299 = vld [vmem:[#allocation5 + $0x48] sm:$0xff]
    %v300 = vld [vmem:[#allocation5 + $0x50] sm:$0xff]
    %v301 = vld [vmem:[#allocation5 + $0x58] sm:$0xff]
    %v302 = vld [vmem:[#allocation5 + $0x60] sm:$0xff]
    %v303 = vld [vmem:[#allocation5 + $0x68] sm:$0xff]
    %v304 = vld [vmem:[#allocation5 + $0x70] sm:$0xff]
    %v305 = vld [vmem:[#allocation5 + $0x78] sm:$0xff]
    %v306 = vld [vmem:[#allocation5 + $0x80] sm:$0xff]
    %v307 = vld [vmem:[#allocation5 + $0x88] sm:$0xff]
    %v308 = vld [vmem:[#allocation5 + $0x90] sm:$0xff]
    %v309 = vld [vmem:[#allocation5 + $0x98] sm:$0xff]
    %v310 = vld [vmem:[#allocation5 + $0xa0] sm:$0xff]
    %v311 = vld [vmem:[#allocation5 + $0xa8] sm:$0xff]
    %v312 = vld [vmem:[#allocation5 + $0xb0] sm:$0xff]
    %v313 = vld [vmem:[#allocation5 + $0xb8] sm:$0xff]
    %v314 = vld [vmem:[#allocation5 + $0xc0] sm:$0xff]
    %v315 = vld [vmem:[#allocation5 + $0xc8] sm:$0xff]
    %v316 = vld [vmem:[#allocation5 + $0xd0] sm:$0xff]
    %v317 = vld [vmem:[#allocation5 + $0xd8] sm:$0xff]
    %v318 = vld [vmem:[#allocation5 + $0xe0] sm:$0xff]
    %v319 = vld [vmem:[#allocation5 + $0xe8] sm:$0xff]
    %v320 = vld [vmem:[#allocation5 + $0xf0] sm:$0xff]
    %v321 = vld [vmem:[#allocation5 + $0xf8] sm:$0xff]
    %v322 = vld [vmem:[#allocation5 + $0x100] sm:$0xff]
    %v323 = vld [vmem:[#allocation5 + $0x108] sm:$0xff]
    %v324 = vld [vmem:[#allocation5 + $0x110] sm:$0xff]
    %v325 = vld [vmem:[#allocation5 + $0x118] sm:$0xff]
    %v326 = vld [vmem:[#allocation5 + $0x120] sm:$0xff]
    %v327 = vld [vmem:[#allocation5 + $0x128] sm:$0xff]
    %v328 = vld [vmem:[#allocation5 + $0x130] sm:$0xff]
    %v329 = vld [vmem:[#allocation5 + $0x138] sm:$0xff]
    %v330 = vld [vmem:[#allocation5 + $0x140] sm:$0xff]
    %v331 = vld [vmem:[#allocation5 + $0x148] sm:$0xff]
    %v332 = vld [vmem:[#allocation5 + $0x150] sm:$0xff]
    %v333 = vld [vmem:[#allocation5 + $0x158] sm:$0xff]
    %v334 = vld [vmem:[#allocation5 + $0x160] sm:$0xff]
    %v335 = vld [vmem:[#allocation5 + $0x168] sm:$0xff]
    %v336 = vld [vmem:[#allocation5 + $0x170] sm:$0xff]
    %v337 = vld [vmem:[#allocation5 + $0x178] sm:$0xff]
    %v338 = vlaneseq
    %v339 = vshrl.u32 %v338, 7
    %v340 = vsub.s32 2, %v339
    %v341 = vrot.slane %v103, %v340
    %342 = vmatprep.subr.mxu0 0.0
    %343 = vmatpush1.msra.mxu0 %v290
    %344 = vmatprep.subr.mxu0 0.0
    %345 = vmatpush1.msra.mxu0 %v291
    %346 = vmatprep.subr.mxu0 0.0
    %347 = vmatpush1.msra.mxu0 %v292
    %348 = vmatprep.subr.mxu0 0.0
    %349 = vmatpush1.msra.mxu0 %v293
    %350 = vmatprep.subr.mxu0 0.0
    %351 = vmatpush1.msra.mxu0 %v294
    %352 = vmatprep.subr.mxu0 0.0
    %353 = vmatpush1.msra.mxu0 %v295
    %354 = vmatprep.subr.mxu0 0.0
    %355 = vmatpush1.msra.mxu0 %v296
    %356 = vmatprep.subr.mxu0 0.0
    %357 = vmatpush1.msra.mxu0 %v297
    %358 = vmatprep.subr.mxu0 0.0
    %359 = vmatpush1.msra.mxu0 %v298
    %360 = vmatprep.subr.mxu0 0.0
    %361 = vmatpush1.msra.mxu0 %v299
    %362 = vmatprep.subr.mxu0 0.0
    %363 = vmatpush1.msra.mxu0 %v300
    %364 = vmatprep.subr.mxu0 0.0
    %365 = vmatpush1.msra.mxu0 %v301
    %366 = vmatprep.subr.mxu0 0.0
    %367 = vmatpush1.msra.mxu0 %v302
    %368 = vmatprep.subr.mxu0 0.0
    %369 = vmatpush1.msra.mxu0 %v303
    %370 = vmatprep.subr.mxu0 0.0
    %371 = vmatpush1.msra.mxu0 %v304
    %372 = vmatprep.subr.mxu0 0.0
    %373 = vmatpush1.msra.mxu0 %v305
    %374 = vmatprep.subr.mxu0 0.0
    %375 = vmatpush1.msra.mxu0 %v306
    %376 = vmatprep.subr.mxu0 0.0
    %377 = vmatpush1.msra.mxu0 %v307
    %378 = vmatprep.subr.mxu0 0.0
    %379 = vmatpush1.msra.mxu0 %v308
    %380 = vmatprep.subr.mxu0 0.0
    %381 = vmatpush1.msra.mxu0 %v309
    %382 = vmatprep.subr.mxu0 0.0
    %383 = vmatpush1.msra.mxu0 %v310
    %384 = vmatprep.subr.mxu0 0.0
    %385 = vmatpush1.msra.mxu0 %v311
    %386 = vmatprep.subr.mxu0 0.0
    %387 = vmatpush1.msra.mxu0 %v312
    %388 = vmatprep.subr.mxu0 0.0
    %389 = vmatpush1.msra.mxu0 %v313
    %390 = vmatprep.subr.mxu0 0.0
    %391 = vmatpush1.msra.mxu0 %v314
    %392 = vmatprep.subr.mxu0 0.0
    %393 = vmatpush1.msra.mxu0 %v315
    %394 = vmatprep.subr.mxu0 0.0
    %395 = vmatpush1.msra.mxu0 %v316
    %396 = vmatprep.subr.mxu0 0.0
    %397 = vmatpush1.msra.mxu0 %v317
    %398 = vmatprep.subr.mxu0 0.0
    %399 = vmatpush1.msra.mxu0 %v318
    %400 = vmatprep.subr.mxu0 0.0
    %401 = vmatpush1.msra.mxu0 %v319
    %402 = vmatprep.subr.mxu0 0.0
    %403 = vmatpush1.msra.mxu0 %v320
    %404 = vmatprep.subr.mxu0 0.0
    %405 = vmatpush1.msra.mxu0 %v321
    %406 = vmatprep.mubr.f32.mxu0 %v266
    %407 = vmatmul.mubr.f32.gmra.mrb[0].mxu0 %v254
    %v408 = vpop.f32.mrb[0].mxu0
    %v409 = vadd.f32 %v341, %v408
    %v410 = vpop.f32.mrb[0].mxu0
    %411 = vmatprep.mubr.f32.mxu0 %v267
    %412 = vmatmul.mubr.f32.gmra.mrb[0].mxu0 %v255
    %v413 = vpop.f32.mrb[0].mxu0
    %v414 = vadd.f32 %v341, %v413
    %v415 = vpop.f32.mrb[0].mxu0
    %416 = vmatprep.mubr.f32.mxu0 %v268
    %417 = vmatmul.mubr.f32.gmra.mrb[0].mxu0 %v256
    %v418 = vpop.f32.mrb[0].mxu0
    %v419 = vadd.f32 %v341, %v418
    %v420 = vpop.f32.mrb[0].mxu0
    %421 = vmatprep.mubr.f32.mxu0 %v269
    %422 = vmatmul.mubr.f32.gmra.mrb[0].mxu0 %v257
    %v423 = vpop.f32.mrb[0].mxu0
    %v424 = vadd.f32 %v341, %v423
    %v425 = vpop.f32.mrb[0].mxu0
    %426 = vmatprep.mubr.f32.mxu0 %v270
    %427 = vmatmul.mubr.f32.gmra.mrb[0].mxu0 %v258
    %v428 = vpop.f32.mrb[0].mxu0
    %v429 = vadd.f32 %v341, %v428
    %v430 = vpop.f32.mrb[0].mxu0
    %431 = vmatprep.mubr.f32.mxu0 %v271
    %432 = vmatmul.mubr.f32.gmra.mrb[0].mxu0 %v259
    %v433 = vpop.f32.mrb[0].mxu0
    %v434 = vadd.f32 %v341, %v433
    %v435 = vpop.f32.mrb[0].mxu0
    %436 = vmatprep.mubr.f32.mxu0 %v272
    %437 = vmatmul.mubr.f32.gmra.mrb[0].mxu0 %v260
    %v438 = vpop.f32.mrb[0].mxu0
    %v439 = vadd.f32 %v341, %v438
    %v440 = vpop.f32.mrb[0].mxu0
    %441 = vmatprep.mubr.f32.mxu0 %v273
    %442 = vmatmul.mubr.f32.gmra.mrb[0].mxu0 %v261
    %v443 = vpop.f32.mrb[0].mxu0
    %v444 = vadd.f32 %v341, %v443
    %v445 = vpop.f32.mrb[0].mxu0
    %446 = vmatprep.mubr.f32.mxu0 %v274
    %447 = vmatmul.mubr.f32.gmra.mrb[0].mxu0 %v262
    %v448 = vpop.f32.mrb[0].mxu0
    %v449 = vadd.f32 %v341, %v448
    %v450 = vpop.f32.mrb[0].mxu0
    %451 = vmatprep.mubr.f32.mxu0 %v275
    %452 = vmatmul.mubr.f32.gmra.mrb[0].mxu0 %v263
    %v453 = vpop.f32.mrb[0].mxu0
    %v454 = vadd.f32 %v341, %v453
    %v455 = vpop.f32.mrb[0].mxu0
    %456 = vmatprep.mubr.f32.mxu0 %v276
    %457 = vmatmul.mubr.f32.gmra.mrb[0].mxu0 %v264
    %v458 = vpop.f32.mrb[0].mxu0
    %v459 = vadd.f32 %v341, %v458
    %v460 = vpop.f32.mrb[0].mxu0
    %461 = vmatprep.mubr.f32.mxu0 %v277
    %462 = vmatmul.mubr.f32.gmra.mrb[0].mxu0 %v265
    %v463 = vpop.f32.mrb[0].mxu0
    %v464 = vadd.f32 %v341, %v463
    %v465 = vpop.f32.mrb[0].mxu0
    %466 = vdwg.mxu0
    %467 = vmatprep.subr.mxu0 0.0
    %468 = vmatpush1.msra.mxu0 %v322
    %469 = vmatprep.subr.mxu0 0.0
    %470 = vmatpush1.msra.mxu0 %v323
    %471 = vmatprep.subr.mxu0 0.0
    %472 = vmatpush1.msra.mxu0 %v324
    %473 = vmatprep.subr.mxu0 0.0
    %474 = vmatpush1.msra.mxu0 %v325
    %475 = vmatprep.subr.mxu0 0.0
    %476 = vmatpush1.msra.mxu0 %v326
    %477 = vmatprep.subr.mxu0 0.0
    %478 = vmatpush1.msra.mxu0 %v327
    %479 = vmatprep.subr.mxu0 0.0
    %480 = vmatpush1.msra.mxu0 %v328
    %481 = vmatprep.subr.mxu0 0.0
    %482 = vmatpush1.msra.mxu0 %v329
    %483 = vmatprep.subr.mxu0 0.0
    %484 = vmatpush1.msra.mxu0 %v330
    %485 = vmatprep.subr.mxu0 0.0
    %486 = vmatpush1.msra.mxu0 %v331
    %487 = vmatprep.subr.mxu0 0.0
    %488 = vmatpush1.msra.mxu0 %v332
    %489 = vmatprep.subr.mxu0 0.0
    %490 = vmatpush1.msra.mxu0 %v333
    %491 = vmatprep.subr.mxu0 0.0
    %492 = vmatpush1.msra.mxu0 %v334
    %493 = vmatprep.subr.mxu0 0.0
    %494 = vmatpush1.msra.mxu0 %v335
    %495 = vmatprep.subr.mxu0 0.0
    %496 = vmatpush1.msra.mxu0 %v336
    %497 = vmatprep.subr.mxu0 0.0
    %498 = vmatpush1.msra.mxu0 %v337
    %499 = vmatprep.subr.mxu0 0.0
    %500 = vmatpush1.msra.mxu0 0.0
    %501 = vmatprep.subr.mxu0 0.0
    %502 = vmatpush1.msra.mxu0 0.0
    %503 = vmatprep.subr.mxu0 0.0
    %504 = vmatpush1.msra.mxu0 0.0
    %505 = vmatprep.subr.mxu0 0.0
    %506 = vmatpush1.msra.mxu0 0.0
    %507 = vmatprep.subr.mxu0 0.0
    %508 = vmatpush1.msra.mxu0 0.0
    %509 = vmatprep.subr.mxu0 0.0
    %510 = vmatpush1.msra.mxu0 0.0
    %511 = vmatprep.subr.mxu0 0.0
    %512 = vmatpush1.msra.mxu0 0.0
    %513 = vmatprep.subr.mxu0 0.0
    %514 = vmatpush1.msra.mxu0 0.0
    %515 = vmatprep.subr.mxu0 0.0
    %516 = vmatpush1.msra.mxu0 0.0
    %517 = vmatprep.subr.mxu0 0.0
    %518 = vmatpush1.msra.mxu0 0.0
    %519 = vmatprep.subr.mxu0 0.0
    %520 = vmatpush1.msra.mxu0 0.0
    %521 = vmatprep.subr.mxu0 0.0
    %522 = vmatpush1.msra.mxu0 0.0
    %523 = vmatprep.subr.mxu0 0.0
    %524 = vmatpush1.msra.mxu0 0.0
    %525 = vmatprep.subr.mxu0 0.0
    %526 = vmatpush1.msra.mxu0 0.0
    %527 = vmatprep.subr.mxu0 0.0
    %528 = vmatpush1.msra.mxu0 0.0
    %529 = vmatprep.subr.mxu0 0.0
    %530 = vmatpush1.msra.mxu0 0.0
    %531 = vmatprep.mubr.f32.mxu0 0.0
    %532 = vmatmul.mubr.f32.gmra.mrb[0].mxu0 %v278
    %v533 = vpop.f32.mrb[0].mxu0
    %v534 = vadd.f32 %v409, %v533
    %v535 = vpop.f32.mrb[0].mxu0
    %536 = vmatprep.mubr.f32.mxu0 0.0
    %537 = vmatmul.mubr.f32.gmra.mrb[0].mxu0 %v279
    %v538 = vpop.f32.mrb[0].mxu0
    %v539 = vadd.f32 %v414, %v538
    %v540 = vpop.f32.mrb[0].mxu0
    %541 = vmatprep.mubr.f32.mxu0 0.0
    %542 = vmatmul.mubr.f32.gmra.mrb[0].mxu0 %v280
    %v543 = vpop.f32.mrb[0].mxu0
    %v544 = vadd.f32 %v419, %v543
    %v545 = vpop.f32.mrb[0].mxu0
    %546 = vmatprep.mubr.f32.mxu0 0.0
    %547 = vmatmul.mubr.f32.gmra.mrb[0].mxu0 %v281
    %v548 = vpop.f32.mrb[0].mxu0
    %v549 = vadd.f32 %v424, %v548
    %v550 = vpop.f32.mrb[0].mxu0
    %551 = vmatprep.mubr.f32.mxu0 0.0
    %552 = vmatmul.mubr.f32.gmra.mrb[0].mxu0 %v282
    %v553 = vpop.f32.mrb[0].mxu0
    %v554 = vadd.f32 %v429, %v553
    %v555 = vpop.f32.mrb[0].mxu0
    %556 = vmatprep.mubr.f32.mxu0 0.0
    %557 = vmatmul.mubr.f32.gmra.mrb[0].mxu0 %v283
    %v558 = vpop.f32.mrb[0].mxu0
    %v559 = vadd.f32 %v434, %v558
    %v560 = vpop.f32.mrb[0].mxu0
    %561 = vmatprep.mubr.f32.mxu0 0.0
    %562 = vmatmul.mubr.f32.gmra.mrb[0].mxu0 %v284
    %v563 = vpop.f32.mrb[0].mxu0
    %v564 = vadd.f32 %v439, %v563
    %v565 = vpop.f32.mrb[0].mxu0
    %566 = vmatprep.mubr.f32.mxu0 0.0
    %567 = vmatmul.mubr.f32.gmra.mrb[0].mxu0 %v285
    %v568 = vpop.f32.mrb[0].mxu0
    %v569 = vadd.f32 %v444, %v568
    %v570 = vpop.f32.mrb[0].mxu0
    %571 = vmatprep.mubr.f32.mxu0 0.0
    %572 = vmatmul.mubr.f32.gmra.mrb[0].mxu0 %v286
    %v573 = vpop.f32.mrb[0].mxu0
    %v574 = vadd.f32 %v449, %v573
    %v575 = vpop.f32.mrb[0].mxu0
    %576 = vmatprep.mubr.f32.mxu0 0.0
    %577 = vmatmul.mubr.f32.gmra.mrb[0].mxu0 %v287
    %v578 = vpop.f32.mrb[0].mxu0
    %v579 = vadd.f32 %v454, %v578
    %v580 = vpop.f32.mrb[0].mxu0
    %581 = vmatprep.mubr.f32.mxu0 0.0
    %582 = vmatmul.mubr.f32.gmra.mrb[0].mxu0 %v288
    %v583 = vpop.f32.mrb[0].mxu0
    %v584 = vadd.f32 %v459, %v583
    %v585 = vpop.f32.mrb[0].mxu0
    %586 = vmatprep.mubr.f32.mxu0 0.0
    %587 = vmatmul.mubr.f32.gmra.mrb[0].mxu0 %v289
    %v588 = vpop.f32.mrb[0].mxu0
    %v589 = vadd.f32 %v464, %v588
    %v590 = vpop.f32.mrb[0].mxu0
    %591 = vdwg.mxu0
    %v592 = vadd.f32 %v534, %v539
    %v593 = vadd.f32 %v592, %v544
    %v594 = vadd.f32 %v593, %v549
    %v595 = vadd.f32 %v594, %v554
    %v596 = vadd.f32 %v595, %v559
    %v597 = vadd.f32 %v596, %v564
    %v598 = vadd.f32 %v597, %v569
    %v599 = vadd.f32 %v598, %v574
    %v600 = vadd.f32 %v599, %v579
    %v601 = vadd.f32 %v600, %v584
    %v602 = vadd.f32 %v601, %v589
    %v603 = vrot.slane %v602, 4
    %v604 = vadd.f32 %v602, %v603
    %v605 = vrot.slane %v604, 2
    %v606 = vadd.f32 %v604, %v605
    %v607 = vrot.slane %v606, 1
    %v608 = vadd.f32 %v606, %v607
    %v609 = vmul.f32 %v534, %v534
    %v610 = vmul.f32 %v539, %v539
    %v611 = vmul.f32 %v544, %v544
    %v612 = vmul.f32 %v549, %v549
    %v613 = vmul.f32 %v554, %v554
    %v614 = vmul.f32 %v559, %v559
    %v615 = vmul.f32 %v564, %v564
    %v616 = vmul.f32 %v569, %v569
    %v617 = vmul.f32 %v574, %v574
    %v618 = vmul.f32 %v579, %v579
    %v619 = vmul.f32 %v584, %v584
    %v620 = vmul.f32 %v589, %v589
    %v621 = vadd.f32 %v609, %v610
    %v622 = vadd.f32 %v621, %v611
    %v623 = vadd.f32 %v622, %v612
    %v624 = vadd.f32 %v623, %v613
    %v625 = vadd.f32 %v624, %v614
    %v626 = vadd.f32 %v625, %v615
    %v627 = vadd.f32 %v626, %v616
    %v628 = vadd.f32 %v627, %v617
    %v629 = vadd.f32 %v628, %v618
    %v630 = vadd.f32 %v629, %v619
    %v631 = vadd.f32 %v630, %v620
    %v632 = vrot.slane %v631, 4
    %v633 = vadd.f32 %v631, %v632
    %v634 = vrot.slane %v633, 2
    %v635 = vadd.f32 %v633, %v634
    %v636 = vrot.slane %v635, 1
    %v637 = vadd.f32 %v635, %v636
    %v638 = vmul.f32 %v608, 0.010416667
    %v639 = vmul.f32 %v637, 0.010416667
    %v640 = vmul.f32 %v638, %v638
    %v641 = vsub.f32 %v639, %v640
    %v642 = vmax.f32 %v641, 0.0
    %v643 = vadd.f32 %v642, 1e-05
    %v644 = vrsqrt.pop %v643
    %v645 = vmul.f32 %v103, %v644
    %v646 = vmul.f32 %v638, %v645
    %v648 = vrot.slane %v646, 7
    %v650 = vsub.f32 %v103, %v648
    %v651 = vld [vmem:[#allocation7] sm:$0xff]
    %v652 = vld [vmem:[#allocation7 + $0x8] sm:$0xff]
    %v653 = vld [vmem:[#allocation7 + $0x10] sm:$0xff]
    %v654 = vld [vmem:[#allocation7 + $0x18] sm:$0xff]
    %v655 = vld [vmem:[#allocation7 + $0x20] sm:$0xff]
    %v656 = vld [vmem:[#allocation7 + $0x28] sm:$0xff]
    %v657 = vld [vmem:[#allocation7 + $0x30] sm:$0xff]
    %v658 = vld [vmem:[#allocation7 + $0x38] sm:$0xff]
    %v659 = vld [vmem:[#allocation7 + $0x40] sm:$0xff]
    %v660 = vld [vmem:[#allocation7 + $0x48] sm:$0xff]
    %v661 = vld [vmem:[#allocation7 + $0x50] sm:$0xff]
    %v662 = vld [vmem:[#allocation7 + $0x58] sm:$0xff]
    %v663 = vld [vmem:[#allocation7 + $0x60] sm:$0xff]
    %v664 = vld [vmem:[#allocation7 + $0x68] sm:$0xff]
    %v665 = vld [vmem:[#allocation7 + $0x70] sm:$0xff]
    %v666 = vld [vmem:[#allocation7 + $0x78] sm:$0xff]
    %v667 = vld [vmem:[#allocation7 + $0x80] sm:$0xff]
    %v668 = vld [vmem:[#allocation7 + $0x88] sm:$0xff]
    %v669 = vld [vmem:[#allocation7 + $0x90] sm:$0xff]
    %v670 = vld [vmem:[#allocation7 + $0x98] sm:$0xff]
    %v671 = vld [vmem:[#allocation7 + $0xa0] sm:$0xff]
    %v672 = vld [vmem:[#allocation7 + $0xa8] sm:$0xff]
    %v673 = vld [vmem:[#allocation7 + $0xb0] sm:$0xff]
    %v674 = vld [vmem:[#allocation7 + $0xb8] sm:$0xff]
    %v675 = vld [vmem:[#allocation7 + $0xc0] sm:$0xff]
    %v676 = vld [vmem:[#allocation7 + $0xc8] sm:$0xff]
    %v677 = vld [vmem:[#allocation7 + $0xd0] sm:$0xff]
    %v678 = vld [vmem:[#allocation7 + $0xd8] sm:$0xff]
    %v679 = vld [vmem:[#allocation7 + $0xe0] sm:$0xff]
    %v680 = vld [vmem:[#allocation7 + $0xe8] sm:$0xff]
    %v681 = vld [vmem:[#allocation7 + $0xf0] sm:$0xff]
    %v682 = vld [vmem:[#allocation7 + $0xf8] sm:$0xff]
    %v683 = vld [vmem:[#allocation7 + $0x100] sm:$0xff]
    %v684 = vld [vmem:[#allocation7 + $0x108] sm:$0xff]
    %v685 = vld [vmem:[#allocation7 + $0x110] sm:$0xff]
    %v686 = vld [vmem:[#allocation7 + $0x118] sm:$0xff]
    %v687 = vld [vmem:[#allocation7 + $0x120] sm:$0xff]
    %v688 = vld [vmem:[#allocation7 + $0x128] sm:$0xff]
    %v689 = vld [vmem:[#allocation7 + $0x130] sm:$0xff]
    %v690 = vld [vmem:[#allocation7 + $0x138] sm:$0xff]
    %v691 = vld [vmem:[#allocation7 + $0x140] sm:$0xff]
    %v692 = vld [vmem:[#allocation7 + $0x148] sm:$0xff]
    %v693 = vld [vmem:[#allocation7 + $0x150] sm:$0xff]
    %v694 = vld [vmem:[#allocation7 + $0x158] sm:$0xff]
    %v695 = vld [vmem:[#allocation7 + $0x160] sm:$0xff]
    %v696 = vld [vmem:[#allocation7 + $0x168] sm:$0xff]
    %v697 = vld [vmem:[#allocation7 + $0x170] sm:$0xff]
    %v698 = vld [vmem:[#allocation7 + $0x178] sm:$0xff]
    %v700 = vrot.slane %v650, 4
    %702 = vmatprep.subr.mxu0 0.0
    %703 = vmatpush1.msra.mxu0 %v651
    %704 = vmatprep.subr.mxu0 0.0
    %705 = vmatpush1.msra.mxu0 %v652
    %706 = vmatprep.subr.mxu0 0.0
    %707 = vmatpush1.msra.mxu0 %v653
    %708 = vmatprep.subr.mxu0 0.0
    %709 = vmatpush1.msra.mxu0 %v654
    %710 = vmatprep.subr.mxu0 0.0
    %711 = vmatpush1.msra.mxu0 %v655
    %712 = vmatprep.subr.mxu0 0.0
    %713 = vmatpush1.msra.mxu0 %v656
    %714 = vmatprep.subr.mxu0 0.0
    %715 = vmatpush1.msra.mxu0 %v657
    %716 = vmatprep.subr.mxu0 0.0
    %717 = vmatpush1.msra.mxu0 %v658
    %718 = vmatprep.subr.mxu0 0.0
    %719 = vmatpush1.msra.mxu0 %v659
    %720 = vmatprep.subr.mxu0 0.0
    %721 = vmatpush1.msra.mxu0 %v660
    %722 = vmatprep.subr.mxu0 0.0
    %723 = vmatpush1.msra.mxu0 %v661
    %724 = vmatprep.subr.mxu0 0.0
    %725 = vmatpush1.msra.mxu0 %v662
    %726 = vmatprep.subr.mxu0 0.0
    %727 = vmatpush1.msra.mxu0 %v663
    %728 = vmatprep.subr.mxu0 0.0
    %729 = vmatpush1.msra.mxu0 %v664
    %730 = vmatprep.subr.mxu0 0.0
    %731 = vmatpush1.msra.mxu0 %v665
    %732 = vmatprep.subr.mxu0 0.0
    %733 = vmatpush1.msra.mxu0 %v666
    %734 = vmatprep.subr.mxu0 0.0
    %735 = vmatpush1.msra.mxu0 %v667
    %736 = vmatprep.subr.mxu0 0.0
    %737 = vmatpush1.msra.mxu0 %v668
    %738 = vmatprep.subr.mxu0 0.0
    %739 = vmatpush1.msra.mxu0 %v669
    %740 = vmatprep.subr.mxu0 0.0
    %741 = vmatpush1.msra.mxu0 %v670
    %742 = vmatprep.subr.mxu0 0.0
    %743 = vmatpush1.msra.mxu0 %v671
    %744 = vmatprep.subr.mxu0 0.0
    %745 = vmatpush1.msra.mxu0 %v672
    %746 = vmatprep.subr.mxu0 0.0
    %747 = vmatpush1.msra.mxu0 %v673
    %748 = vmatprep.subr.mxu0 0.0
    %749 = vmatpush1.msra.mxu0 %v674
    %750 = vmatprep.subr.mxu0 0.0
    %751 = vmatpush1.msra.mxu0 %v675
    %752 = vmatprep.subr.mxu0 0.0
    %753 = vmatpush1.msra.mxu0 %v676
    %754 = vmatprep.subr.mxu0 0.0
    %755 = vmatpush1.msra.mxu0 %v677
    %756 = vmatprep.subr.mxu0 0.0
    %757 = vmatpush1.msra.mxu0 %v678
    %758 = vmatprep.subr.mxu0 0.0
    %759 = vmatpush1.msra.mxu0 %v679
    %760 = vmatprep.subr.mxu0 0.0
    %761 = vmatpush1.msra.mxu0 %v680
    %762 = vmatprep.subr.mxu0 0.0
    %763 = vmatpush1.msra.mxu0 %v681
    %764 = vmatprep.subr.mxu0 0.0
    %765 = vmatpush1.msra.mxu0 %v682
    %766 = vmatprep.mubr.f32.mxu0 %v700
    %767 = vmatmul.mubr.f32.gmra.mrb[0].mxu0 %v700
    %v768 = vpop.f32.mrb[0].mxu0
    %v769 = vadd.f32 0.0, %v768
    %v770 = vpop.f32.mrb[0].mxu0
    %771 = vdwg.mxu0
    %772 = vmatprep.subr.mxu0 0.0
    %773 = vmatpush1.msra.mxu0 %v683
    %774 = vmatprep.subr.mxu0 0.0
    %775 = vmatpush1.msra.mxu0 %v684
    %776 = vmatprep.subr.mxu0 0.0
    %777 = vmatpush1.msra.mxu0 %v685
    %778 = vmatprep.subr.mxu0 0.0
    %779 = vmatpush1.msra.mxu0 %v686
    %780 = vmatprep.subr.mxu0 0.0
    %781 = vmatpush1.msra.mxu0 %v687
    %782 = vmatprep.subr.mxu0 0.0
    %783 = vmatpush1.msra.mxu0 %v688
    %784 = vmatprep.subr.mxu0 0.0
    %785 = vmatpush1.msra.mxu0 %v689
    %786 = vmatprep.subr.mxu0 0.0
    %787 = vmatpush1.msra.mxu0 %v690
    %788 = vmatprep.subr.mxu0 0.0
    %789 = vmatpush1.msra.mxu0 %v691
    %790 = vmatprep.subr.mxu0 0.0
    %791 = vmatpush1.msra.mxu0 %v692
    %792 = vmatprep.subr.mxu0 0.0
    %793 = vmatpush1.msra.mxu0 %v693
    %794 = vmatprep.subr.mxu0 0.0
    %795 = vmatpush1.msra.mxu0 %v694
    %796 = vmatprep.subr.mxu0 0.0
    %797 = vmatpush1.msra.mxu0 %v695
    %798 = vmatprep.subr.mxu0 0.0
    %799 = vmatpush1.msra.mxu0 %v696
    %800 = vmatprep.subr.mxu0 0.0
    %801 = vmatpush1.msra.mxu0 %v697
    %802 = vmatprep.subr.mxu0 0.0
    %803 = vmatpush1.msra.mxu0 %v698
    %804 = vmatprep.subr.mxu0 0.0
    %805 = vmatpush1.msra.mxu0 0.0
    %806 = vmatprep.subr.mxu0 0.0
    %807 = vmatpush1.msra.mxu0 0.0
    %808 = vmatprep.subr.mxu0 0.0
    %809 = vmatpush1.msra.mxu0 0.0
    %810 = vmatprep.subr.mxu0 0.0
    %811 = vmatpush1.msra.mxu0 0.0
    %812 = vmatprep.subr.mxu0 0.0
    %813 = vmatpush1.msra.mxu0 0.0
    %814 = vmatprep.subr.mxu0 0.0
    %815 = vmatpush1.msra.mxu0 0.0
    %816 = vmatprep.subr.mxu0 0.0
    %817 = vmatpush1.msra.mxu0 0.0
    %818 = vmatprep.subr.mxu0 0.0
    %819 = vmatpush1.msra.mxu0 0.0
    %820 = vmatprep.subr.mxu0 0.0
    %821 = vmatpush1.msra.mxu0 0.0
    %822 = vmatprep.subr.mxu0 0.0
    %823 = vmatpush1.msra.mxu0 0.0
    %824 = vmatprep.subr.mxu0 0.0
    %825 = vmatpush1.msra.mxu0 0.0
    %826 = vmatprep.subr.mxu0 0.0
    %827 = vmatpush1.msra.mxu0 0.0
    %828 = vmatprep.subr.mxu0 0.0
    %829 = vmatpush1.msra.mxu0 0.0
    %830 = vmatprep.subr.mxu0 0.0
    %831 = vmatpush1.msra.mxu0 0.0
    %832 = vmatprep.subr.mxu0 0.0
    %833 = vmatpush1.msra.mxu0 0.0
    %834 = vmatprep.subr.mxu0 0.0
    %835 = vmatpush1.msra.mxu0 0.0
    %836 = vmatprep.mubr.f32.mxu0 0.0
    %837 = vmatmul.mubr.f32.gmra.mrb[0].mxu0 %v700
    %v838 = vpop.f32.mrb[0].mxu0
    %v839 = vadd.f32 %v769, %v838
    %v840 = vpop.f32.mrb[0].mxu0
    %841 = vdwg.mxu0
    %v843 = vrot.slane %v839, 3
    %v845 = vadd.f32 %v103, %v843
    %v846 = vsub.f32 0.0, %v650
    %847 = vst [vmem:[#allocation2 - $0x4] sm:$0x10] %v846
    %848 = vst [vmem:[#allocation2 + $0x34] sm:$0x10] %v846
    %849 = vst [vmem:[#allocation2 + $0x2d] sm:$0x10] %v846
    %850 = vst [vmem:[#allocation2 + $0x65] sm:$0x10] %v846
    %v851 = vlaneseq
    %v852 = vshrl.u32 %v851, 7
    %v853 = vsub.s32 3, %v852
    %v854 = vrot.slane %v645, %v853
    %v855 = vmul.f32 %v534, %v854
    %v856 = vmul.f32 %v539, %v854
    %v857 = vmul.f32 %v544, %v854
    %v858 = vmul.f32 %v549, %v854
    %v859 = vmul.f32 %v554, %v854
    %v860 = vmul.f32 %v559, %v854
    %v861 = vmul.f32 %v564, %v854
    %v862 = vmul.f32 %v569, %v854
    %v863 = vmul.f32 %v574, %v854
    %v864 = vmul.f32 %v579, %v854
    %v865 = vmul.f32 %v584, %v854
    %v866 = vmul.f32 %v589, %v854
    %867 = vst [vmem:[#allocation2 + $0x1] sm:$0xff] %v855
    %868 = vst [vmem:[#allocation2 + $0x9] sm:$0xff] %v856
    %869 = vst [vmem:[#allocation2 + $0x11] sm:$0xff] %v857
    %870 = vst [vmem:[#allocation2 + $0x19] sm:$0xff] %v858
    %871 = vst [vmem:[#allocation2 + $0x21] sm:$0xff] %v859
    %872 = vst [vmem:[#allocation2 + $0x29] sm:$0xff] %v860
    %873 = vst [vmem:[#allocation2 + $0x39] sm:$0xff] %v861
    %874 = vst [vmem:[#allocation2 + $0x41] sm:$0xff] %v862
    %875 = vst [vmem:[#allocation2 + $0x49] sm:$0xff] %v863
    %876 = vst [vmem:[#allocation2 + $0x51] sm:$0xff] %v864
    %877 = vst [vmem:[#allocation2 + $0x59] sm:$0xff] %v865
    %878 = vst [vmem:[#allocation2 + $0x61] sm:$0xff] %v866
    %v879 = vld [vmem:[#allocation2] sm:$0xff]
    %v880 = vld [vmem:[#allocation2 + $0x8] sm:$0xff]
    %v881 = vld [vmem:[#allocation2 + $0x10] sm:$0xff]
    %v882 = vld [vmem:[#allocation2 + $0x18] sm:$0xff]
    %v883 = vld [vmem:[#allocation2 + $0x20] sm:$0xff]
    %v884 = vld [vmem:[#allocation2 + $0x28] sm:$0xff]
    %v885 = vld [vmem:[#allocation2 + $0x38] sm:$0xff]
    %v886 = vld [vmem:[#allocation2 + $0x40] sm:$0xff]
    %v887 = vld [vmem:[#allocation2 + $0x48] sm:$0xff]
    %v888 = vld [vmem:[#allocation2 + $0x50] sm:$0xff]
    %v889 = vld [vmem:[#allocation2 + $0x58] sm:$0xff]
    %v890 = vld [vmem:[#allocation2 + $0x60] sm:$0xff]
    %v891 = vld [vmem:[#allocation2 + $0x1] sm:$0xff]
    %v892 = vld [vmem:[#allocation2 + $0x9] sm:$0xff]
    %v893 = vld [vmem:[#allocation2 + $0x11] sm:$0xff]
    %v894 = vld [vmem:[#allocation2 + $0x19] sm:$0xff]
    %v895 = vld [vmem:[#allocation2 + $0x21] sm:$0xff]
    %v896 = vld [vmem:[#allocation2 + $0x29] sm:$0xff]
    %v897 = vld [vmem:[#allocation2 + $0x39] sm:$0xff]
    %v898 = vld [vmem:[#allocation2 + $0x41] sm:$0xff]
    %v899 = vld [vmem:[#allocation2 + $0x49] sm:$0xff]
    %v900 = vld [vmem:[#allocation2 + $0x51] sm:$0xff]
    %v901 = vld [vmem:[#allocation2 + $0x59] sm:$0xff]
    %v902 = vld [vmem:[#allocation2 + $0x61] sm:$0xff]
    %v903 = vld [vmem:[#allocation2 + $0x2] sm:$0xff]
    %v904 = vld [vmem:[#allocation2 + $0xa] sm:$0xff]
    %v905 = vld [vmem:[#allocation2 + $0x12] sm:$0xff]
    %v906 = vld [vmem:[#allocation2 + $0x1a] sm:$0xff]
    %v907 = vld [vmem:[#allocation2 + $0x22] sm:$0xff]
    %v908 = vld [vmem:[#allocation2 + $0x2a] sm:$0xff]
    %v909 = vld [vmem:[#allocation2 + $0x3a] sm:$0xff]
    %v910 = vld [vmem:[#allocation2 + $0x42] sm:$0xff]
    %v911 = vld [vmem:[#allocation2 + $0x4a] sm:$0xff]
    %v912 = vld [vmem:[#allocation2 + $0x52] sm:$0xff]
    %v913 = vld [vmem:[#allocation2 + $0x5a] sm:$0xff]
    %v914 = vld [vmem:[#allocation2 + $0x62] sm:$0xff]
    %v915 = vlaneseq
    %v916 = vshrl.u32 %v915, 7
    %v917 = vsub.s32 5, %v916
    %v918 = vrot.slane %v845, %v917
    %919 = vmatprep.subr.mxu0 0.0
    %920 = vmatpush1.msra.mxu0 %v651
    %921 = vmatprep.subr.mxu0 0.0
    %922 = vmatpush1.msra.mxu0 %v652
    %923 = vmatprep.subr.mxu0 0.0
    %924 = vmatpush1.msra.mxu0 %v653
    %925 = vmatprep.subr.mxu0 0.0
    %926 = vmatpush1.msra.mxu0 %v654
    %927 = vmatprep.subr.mxu0 0.0
    %928 = vmatpush1.msra.mxu0 %v655
    %929 = vmatprep.subr.mxu0 0.0
    %930 = vmatpush1.msra.mxu0 %v656
    %931 = vmatprep.subr.mxu0 0.0
    %932 = vmatpush1.msra.mxu0 %v657
    %933 = vmatprep.subr.mxu0 0.0
    %934 = vmatpush1.msra.mxu0 %v658
    %935 = vmatprep.subr.mxu0 0.0
    %936 = vmatpush1.msra.mxu0 %v659
    %937 = vmatprep.subr.mxu0 0.0
    %938 = vmatpush1.msra.mxu0 %v660
    %939 = vmatprep.subr.mxu0 0.0
    %940 = vmatpush1.msra.mxu0 %v661
    %941 = vmatprep.subr.mxu0 0.0
    %942 = vmatpush1.msra.mxu0 %v662
    %943 = vmatprep.subr.mxu0 0.0
    %944 = vmatpush1.msra.mxu0 %v663
    %945 = vmatprep.subr.mxu0 0.0
    %946 = vmatpush1.msra.mxu0 %v664
    %947 = vmatprep.subr.mxu0 0.0
    %948 = vmatpush1.msra.mxu0 %v665
    %949 = vmatprep.subr.mxu0 0.0
    %950 = vmatpush1.msra.mxu0 %v666
    %951 = vmatprep.subr.mxu0 0.0
    %952 = vmatpush1.msra.mxu0 %v667
    %953 = vmatprep.subr.mxu0 0.0
    %954 = vmatpush1.msra.mxu0 %v668
    %955 = vmatprep.subr.mxu0 0.0
    %956 = vmatpush1.msra.mxu0 %v669
    %957 = vmatprep.subr.mxu0 0.0
    %958 = vmatpush1.msra.mxu0 %v670
    %959 = vmatprep.subr.mxu0 0.0
    %960 = vmatpush1.msra.mxu0 %v671
    %961 = vmatprep.subr.mxu0 0.0
    %962 = vmatpush1.msra.mxu0 %v672
    %963 = vmatprep.subr.mxu0 0.0
    %964 = vmatpush1.msra.mxu0 %v673
    %965 = vmatprep.subr.mxu0 0.0
    %966 = vmatpush1.msra.mxu0 %v674
    %967 = vmatprep.subr.mxu0 0.0
    %968 = vmatpush1.msra.mxu0 %v675
    %969 = vmatprep.subr.mxu0 0.0
    %970 = vmatpush1.msra.mxu0 %v676
    %971 = vmatprep.subr.mxu0 0.0
    %972 = vmatpush1.msra.mxu0 %v677
    %973 = vmatprep.subr.mxu0 0.0
    %974 = vmatpush1.msra.mxu0 %v678
    %975 = vmatprep.subr.mxu0 0.0
    %976 = vmatpush1.msra.mxu0 %v679
    %977 = vmatprep.subr.mxu0 0.0
    %978 = vmatpush1.msra.mxu0 %v680
    %979 = vmatprep.subr.mxu0 0.0
    %980 = vmatpush1.msra.mxu0 %v681
    %981 = vmatprep.subr.mxu0 0.0
    %982 = vmatpush1.msra.mxu0 %v682
    %983 = vmatprep.mubr.f32.mxu0 %v891
    %984 = vmatmul.mubr.f32.gmra.mrb[0].mxu0 %v879
    %v985 = vpop.f32.mrb[0].mxu0
    %v986 = vadd.f32 %v918, %v985
    %v987 = vpop.f32.mrb[0].mxu0
    %988 = vmatprep.mubr.f32.mxu0 %v892
    %989 = vmatmul.mubr.f32.gmra.mrb[0].mxu0 %v880
    %v990 = vpop.f32.mrb[0].mxu0
    %v991 = vadd.f32 %v918, %v990
    %v992 = vpop.f32.mrb[0].mxu0
    %993 = vmatprep.mubr.f32.mxu0 %v893
    %994 = vmatmul.mubr.f32.gmra.mrb[0].mxu0 %v881
    %v995 = vpop.f32.mrb[0].mxu0
    %v996 = vadd.f32 %v918, %v995
    %v997 = vpop.f32.mrb[0].mxu0
    %998 = vmatprep.mubr.f32.mxu0 %v894
    %999 = vmatmul.mubr.f32.gmra.mrb[0].mxu0 %v882
    %v1000 = vpop.f32.mrb[0].mxu0
    %v1001 = vadd.f32 %v918, %v1000
    %v1002 = vpop.f32.mrb[0].mxu0
    %1003 = vmatprep.mubr.f32.mxu0 %v895
    %1004 = vmatmul.mubr.f32.gmra.mrb[0].mxu0 %v883
    %v1005 = vpop.f32.mrb[0].mxu0
    %v1006 = vadd.f32 %v918, %v1005
    %v1007 = vpop.f32.mrb[0].mxu0
    %1008 = vmatprep.mubr.f32.mxu0 %v896
    %1009 = vmatmul.mubr.f32.gmra.mrb[0].mxu0 %v884
    %v1010 = vpop.f32.mrb[0].mxu0
    %v1011 = vadd.f32 %v918, %v1010
    %v1012 = vpop.f32.mrb[0].mxu0
    %1013 = vmatprep.mubr.f32.mxu0 %v897
    %1014 = vmatmul.mubr.f32.gmra.mrb[0].mxu0 %v885
    %v1015 = vpop.f32.mrb[0].mxu0
    %v1016 = vadd.f32 %v918, %v1015
    %v1017 = vpop.f32.mrb[0].mxu0
    %1018 = vmatprep.mubr.f32.mxu0 %v898
    %1019 = vmatmul.mubr.f32.gmra.mrb[0].mxu0 %v886
    %v1020 = vpop.f32.mrb[0].mxu0
    %v1021 = vadd.f32 %v918, %v1020
    %v1022 = vpop.f32.mrb[0].mxu0
    %1023 = vmatprep.mubr.f32.mxu0 %v899
    %1024 = vmatmul.mubr.f32.gmra.mrb[0].mxu0 %v887
    %v1025 = vpop.f32.mrb[0].mxu0
    %v1026 = vadd.f32 %v918, %v1025
    %v1027 = vpop.f32.mrb[0].mxu0
    %1028 = vmatprep.mubr.f32.mxu0 %v900
    %1029 = vmatmul.mubr.f32.gmra.mrb[0].mxu0 %v888
    %v1030 = vpop.f32.mrb[0].mxu0
    %v1031 = vadd.f32 %v918, %v1030
    %v1032 = vpop.f32.mrb[0].mxu0
    %1033 = vmatprep.mubr.f32.mxu0 %v901
    %1034 = vmatmul.mubr.f32.gmra.mrb[0].mxu0 %v889
    %v1035 = vpop.f32.mrb[0].mxu0
    %v1036 = vadd.f32 %v918, %v1035
    %v1037 = vpop.f32.mrb[0].mxu0
    %1038 = vmatprep.mubr.f32.mxu0 %v902
    %1039 = vmatmul.mubr.f32.gmra.mrb[0].mxu0 %v890
    %v1040 = vpop.f32.mrb[0].mxu0
    %v1041 = vadd.f32 %v918, %v1040
    %v1042 = vpop.f32.mrb[0].mxu0
    %1043 = vdwg.mxu0
    %1044 = vmatprep.subr.mxu0 0.0
    %1045 = vmatpush1.msra.mxu0 %v683
    %1046 = vmatprep.subr.mxu0 0.0
    %1047 = vmatpush1.msra.mxu0 %v684
    %1048 = vmatprep.subr.mxu0 0.0
    %1049 = vmatpush1.msra.mxu0 %v685
    %1050 = vmatprep.subr.mxu0 0.0
    %1051 = vmatpush1.msra.mxu0 %v686
    %1052 = vmatprep.subr.mxu0 0.0
    %1053 = vmatpush1.msra.mxu0 %v687
    %1054 = vmatprep.subr.mxu0 0.0
    %1055 = vmatpush1.msra.mxu0 %v688
    %1056 = vmatprep.subr.mxu0 0.0
    %1057 = vmatpush1.msra.mxu0 %v689
    %1058 = vmatprep.subr.mxu0 0.0
    %1059 = vmatpush1.msra.mxu0 %v690
    %1060 = vmatprep.subr.mxu0 0.0
    %1061 = vmatpush1.msra.mxu0 %v691
    %1062 = vmatprep.subr.mxu0 0.0
    %1063 = vmatpush1.msra.mxu0 %v692
    %1064 = vmatprep.subr.mxu0 0.0
    %1065 = vmatpush1.msra.mxu0 %v693
    %1066 = vmatprep.subr.mxu0 0.0
    %1067 = vmatpush1.msra.mxu0 %v694
    %1068 = vmatprep.subr.mxu0 0.0
    %1069 = vmatpush1.msra.mxu0 %v695
    %1070 = vmatprep.subr.mxu0 0.0
    %1071 = vmatpush1.msra.mxu0 %v696
    %1072 = vmatprep.subr.mxu0 0.0
    %1073 = vmatpush1.msra.mxu0 %v697
    %1074 = vmatprep.subr.mxu0 0.0
    %1075 = vmatpush1.msra.mxu0 %v698
    %1076 = vmatprep.subr.mxu0 0.0
    %1077 = vmatpush1.msra.mxu0 0.0
    %1078 = vmatprep.subr.mxu0 0.0
    %1079 = vmatpush1.msra.mxu0 0.0
    %1080 = vmatprep.subr.mxu0 0.0
    %1081 = vmatpush1.msra.mxu0 0.0
    %1082 = vmatprep.subr.mxu0 0.0
    %1083 = vmatpush1.msra.mxu0 0.0
    %1084 = vmatprep.subr.mxu0 0.0
    %1085 = vmatpush1.msra.mxu0 0.0
    %1086 = vmatprep.subr.mxu0 0.0
    %1087 = vmatpush1.msra.mxu0 0.0
    %1088 = vmatprep.subr.mxu0 0.0
    %1089 = vmatpush1.msra.mxu0 0.0
    %1090 = vmatprep.subr.mxu0 0.0
    %1091 = vmatpush1.msra.mxu0 0.0
    %1092 = vmatprep.subr.mxu0 0.0
    %1093 = vmatpush1.msra.mxu0 0.0
    %1094 = vmatprep.subr.mxu0 0.0
    %1095 = vmatpush1.msra.mxu0 0.0
    %1096 = vmatprep.subr.mxu0 0.0
    %1097 = vmatpush1.msra.mxu0 0.0
    %1098 = vmatprep.subr.mxu0 0.0
    %1099 = vmatpush1.msra.mxu0 0.0
    %1100 = vmatprep.subr.mxu0 0.0
    %1101 = vmatpush1.msra.mxu0 0.0
    %1102 = vmatprep.subr.mxu0 0.0
    %1103 = vmatpush1.msra.mxu0 0.0
    %1104 = vmatprep.subr.mxu0 0.0
    %1105 = vmatpush1.msra.mxu0 0.0
    %1106 = vmatprep.subr.mxu0 0.0
    %1107 = vmatpush1.msra.mxu0 0.0
    %1108 = vmatprep.mubr.f32.mxu0 0.0
    %1109 = vmatmul.mubr.f32.gmra.mrb[0].mxu0 %v903
    %v1110 = vpop.f32.mrb[0].mxu0
    %v1111 = vadd.f32 %v986, %v1110
    %v1112 = vpop.f32.mrb[0].mxu0
    %1113 = vmatprep.mubr.f32.mxu0 0.0
    %1114 = vmatmul.mubr.f32.gmra.mrb[0].mxu0 %v904
    %v1115 = vpop.f32.mrb[0].mxu0
    %v1116 = vadd.f32 %v991, %v1115
    %v1117 = vpop.f32.mrb[0].mxu0
    %1118 = vmatprep.mubr.f32.mxu0 0.0
    %1119 = vmatmul.mubr.f32.gmra.mrb[0].mxu0 %v905
    %v1120 = vpop.f32.mrb[0].mxu0
    %v1121 = vadd.f32 %v996, %v1120
    %v1122 = vpop.f32.mrb[0].mxu0
    %1123 = vmatprep.mubr.f32.mxu0 0.0
    %1124 = vmatmul.mubr.f32.gmra.mrb[0].mxu0 %v906
    %v1125 = vpop.f32.mrb[0].mxu0
    %v1126 = vadd.f32 %v1001, %v1125
    %v1127 = vpop.f32.mrb[0].mxu0
    %1128 = vmatprep.mubr.f32.mxu0 0.0
    %1129 = vmatmul.mubr.f32.gmra.mrb[0].mxu0 %v907
    %v1130 = vpop.f32.mrb[0].mxu0
    %v1131 = vadd.f32 %v1006, %v1130
    %v1132 = vpop.f32.mrb[0].mxu0
    %1133 = vmatprep.mubr.f32.mxu0 0.0
    %1134 = vmatmul.mubr.f32.gmra.mrb[0].mxu0 %v908
    %v1135 = vpop.f32.mrb[0].mxu0
    %v1136 = vadd.f32 %v1011, %v1135
    %v1137 = vpop.f32.mrb[0].mxu0
    %1138 = vmatprep.mubr.f32.mxu0 0.0
    %1139 = vmatmul.mubr.f32.gmra.mrb[0].mxu0 %v909
    %v1140 = vpop.f32.mrb[0].mxu0
    %v1141 = vadd.f32 %v1016, %v1140
    %v1142 = vpop.f32.mrb[0].mxu0
    %1143 = vmatprep.mubr.f32.mxu0 0.0
    %1144 = vmatmul.mubr.f32.gmra.mrb[0].mxu0 %v910
    %v1145 = vpop.f32.mrb[0].mxu0
    %v1146 = vadd.f32 %v1021, %v1145
    %v1147 = vpop.f32.mrb[0].mxu0
    %1148 = vmatprep.mubr.f32.mxu0 0.0
    %1149 = vmatmul.mubr.f32.gmra.mrb[0].mxu0 %v911
    %v1150 = vpop.f32.mrb[0].mxu0
    %v1151 = vadd.f32 %v1026, %v1150
    %v1152 = vpop.f32.mrb[0].mxu0
    %1153 = vmatprep.mubr.f32.mxu0 0.0
    %1154 = vmatmul.mubr.f32.gmra.mrb[0].mxu0 %v912
    %v1155 = vpop.f32.mrb[0].mxu0
    %v1156 = vadd.f32 %v1031, %v1155
    %v1157 = vpop.f32.mrb[0].mxu0
    %1158 = vmatprep.mubr.f32.mxu0 0.0
    %1159 = vmatmul.mubr.f32.gmra.mrb[0].mxu0 %v913
    %v1160 = vpop.f32.mrb[0].mxu0
    %v1161 = vadd.f32 %v1036, %v1160
    %v1162 = vpop.f32.mrb[0].mxu0
    %1163 = vmatprep.mubr.f32.mxu0 0.0
    %1164 = vmatmul.mubr.f32.gmra.mrb[0].mxu0 %v914
    %v1165 = vpop.f32.mrb[0].mxu0
    %v1166 = vadd.f32 %v1041, %v1165
    %v1167 = vpop.f32.mrb[0].mxu0
    %1168 = vdwg.mxu0
    %vm1169 = vcmp.gt.f32.partialorder %v1111, 0.0
    %vm1170 = vcmp.gt.f32.partialorder %v1116, 0.0
    %vm1171 = vcmp.gt.f32.partialorder %v1121, 0.0
    %vm1172 = vcmp.gt.f32.partialorder %v1126, 0.0
    %vm1173 = vcmp.gt.f32.partialorder %v1131, 0.0
    %vm1174 = vcmp.gt.f32.partialorder %v1136, 0.0
    %vm1175 = vcmp.gt.f32.partialorder %v1141, 0.0
    %vm1176 = vcmp.gt.f32.partialorder %v1146, 0.0
    %vm1177 = vcmp.gt.f32.partialorder %v1151, 0.0
    %vm1178 = vcmp.gt.f32.partialorder %v1156, 0.0
    %vm1179 = vcmp.gt.f32.partialorder %v1161, 0.0
    %vm1180 = vcmp.gt.f32.partialorder %v1166, 0.0
    %v1181 = vmul.f32 %v1111, 0.01
    %v1182 = vmul.f32 %v1116, 0.01
    %v1183 = vmul.f32 %v1121, 0.01
    %v1184 = vmul.f32 %v1126, 0.01
    %v1185 = vmul.f32 %v1131, 0.01
    %v1186 = vmul.f32 %v1136, 0.01
    %v1187 = vmul.f32 %v1141, 0.01
    %v1188 = vmul.f32 %v1146, 0.01
    %v1189 = vmul.f32 %v1151, 0.01
    %v1190 = vmul.f32 %v1156, 0.01
    %v1191 = vmul.f32 %v1161, 0.01
    %v1192 = vmul.f32 %v1166, 0.01
    %v1193 = vsel %vm1169, %v1111, %v1181
    %v1194 = vsel %vm1170, %v1116, %v1182
    %v1195 = vsel %vm1171, %v1121, %v1183
    %v1196 = vsel %vm1172, %v1126, %v1184
    %v1197 = vsel %vm1173, %v1131, %v1185
    %v1198 = vsel %vm1174, %v1136, %v1186
    %v1199 = vsel %vm1175, %v1141, %v1187
    %v1200 = vsel %vm1176, %v1146, %v1188
    %v1201 = vsel %vm1177, %v1151, %v1189
    %v1202 = vsel %vm1178, %v1156, %v1190
    %v1203 = vsel %vm1179, %v1161, %v1191
    %v1204 = vsel %vm1180, %v1166, %v1192
    %v1205 = vld [vmem:[#allocation8] sm:$0xff]
    %v1206 = vld [vmem:[#allocation8 + $0x8] sm:$0xff]
    %v1207 = vld [vmem:[#allocation8 + $0x10] sm:$0xff]
    %v1208 = vld [vmem:[#allocation8 + $0x18] sm:$0xff]
    %v1209 = vld [vmem:[#allocation8 + $0x20] sm:$0xff]
    %v1210 = vld [vmem:[#allocation8 + $0x28] sm:$0xff]
    %v1211 = vld [vmem:[#allocation8 + $0x30] sm:$0xff]
    %v1212 = vld [vmem:[#allocation8 + $0x38] sm:$0xff]
    %v1213 = vld [vmem:[#allocation8 + $0x40] sm:$0xff]
    %v1214 = vld [vmem:[#allocation8 + $0x48] sm:$0xff]
    %v1215 = vld [vmem:[#allocation8 + $0x50] sm:$0xff]
    %v1216 = vld [vmem:[#allocation8 + $0x58] sm:$0xff]
    %v1217 = vld [vmem:[#allocation8 + $0x60] sm:$0xff]
    %v1218 = vld [vmem:[#allocation8 + $0x68] sm:$0xff]
    %v1219 = vld [vmem:[#allocation8 + $0x70] sm:$0xff]
    %v1220 = vld [vmem:[#allocation8 + $0x78] sm:$0xff]
    %v1221 = vlaneseq
    %v1222 = vshrl.u32 %v1221, 7
    %v1223 = vsub.s32 6, %v1222
    %v1224 = vrot.slane %v103, %v1223
    %1225 = vmatprep.subr.mxu0 0.0
    %1226 = vmatpush1.msra.mxu0 %v1205
    %1227 = vmatprep.subr.mxu0 0.0
    %1228 = vmatpush1.msra.mxu0 %v1206
    %1229 = vmatprep.subr.mxu0 0.0
    %1230 = vmatpush1.msra.mxu0 %v1207
    %1231 = vmatprep.subr.mxu0 0.0
    %1232 = vmatpush1.msra.mxu0 %v1208
    %1233 = vmatprep.subr.mxu0 0.0
    %1234 = vmatpush1.msra.mxu0 %v1209
    %1235 = vmatprep.subr.mxu0 0.0
    %1236 = vmatpush1.msra.mxu0 %v1210
    %1237 = vmatprep.subr.mxu0 0.0
    %1238 = vmatpush1.msra.mxu0 %v1211
    %1239 = vmatprep.subr.mxu0 0.0
    %1240 = vmatpush1.msra.mxu0 %v1212
    %1241 = vmatprep.subr.mxu0 0.0
    %1242 = vmatpush1.msra.mxu0 %v1213
    %1243 = vmatprep.subr.mxu0 0.0
    %1244 = vmatpush1.msra.mxu0 %v1214
    %1245 = vmatprep.subr.mxu0 0.0
    %1246 = vmatpush1.msra.mxu0 %v1215
    %1247 = vmatprep.subr.mxu0 0.0
    %1248 = vmatpush1.msra.mxu0 %v1216
    %1249 = vmatprep.subr.mxu0 0.0
    %1250 = vmatpush1.msra.mxu0 %v1217
    %1251 = vmatprep.subr.mxu0 0.0
    %1252 = vmatpush1.msra.mxu0 %v1218
    %1253 = vmatprep.subr.mxu0 0.0
    %1254 = vmatpush1.msra.mxu0 %v1219
    %1255 = vmatprep.subr.mxu0 0.0
    %1256 = vmatpush1.msra.mxu0 %v1220
    %1257 = vmatprep.subr.mxu0 0.0
    %1258 = vmatpush1.msra.mxu0 0.0
    %1259 = vmatprep.subr.mxu0 0.0
    %1260 = vmatpush1.msra.mxu0 0.0
    %1261 = vmatprep.subr.mxu0 0.0
    %1262 = vmatpush1.msra.mxu0 0.0
    %1263 = vmatprep.subr.mxu0 0.0
    %1264 = vmatpush1.msra.mxu0 0.0
    %1265 = vmatprep.subr.mxu0 0.0
    %1266 = vmatpush1.msra.mxu0 0.0
    %1267 = vmatprep.subr.mxu0 0.0
    %1268 = vmatpush1.msra.mxu0 0.0
    %1269 = vmatprep.subr.mxu0 0.0
    %1270 = vmatpush1.msra.mxu0 0.0
    %1271 = vmatprep.subr.mxu0 0.0
    %1272 = vmatpush1.msra.mxu0 0.0
    %1273 = vmatprep.subr.mxu0 0.0
    %1274 = vmatpush1.msra.mxu0 0.0
    %1275 = vmatprep.subr.mxu0 0.0
    %1276 = vmatpush1.msra.mxu0 0.0
    %1277 = vmatprep.subr.mxu0 0.0
    %1278 = vmatpush1.msra.mxu0 0.0
    %1279 = vmatprep.subr.mxu0 0.0
    %1280 = vmatpush1.msra.mxu0 0.0
    %1281 = vmatprep.subr.mxu0 0.0
    %1282 = vmatpush1.msra.mxu0 0.0
    %1283 = vmatprep.subr.mxu0 0.0
    %1284 = vmatpush1.msra.mxu0 0.0
    %1285 = vmatprep.subr.mxu0 0.0
    %1286 = vmatpush1.msra.mxu0 0.0
    %1287 = vmatprep.subr.mxu0 0.0
    %1288 = vmatpush1.msra.mxu0 0.0
    %1289 = vmatprep.mubr.f32.mxu0 0.0
    %1290 = vmatmul.mubr.f32.gmra.mrb[0].mxu0 %v91
    %v1291 = vpop.f32.mrb[0].mxu0
    %v1292 = vadd.f32 %v1224, %v1291
    %v1293 = vpop.f32.mrb[0].mxu0
    %1294 = vmatprep.mubr.f32.mxu0 0.0
    %1295 = vmatmul.mubr.f32.gmra.mrb[0].mxu0 %v92
    %v1296 = vpop.f32.mrb[0].mxu0
    %v1297 = vadd.f32 %v1224, %v1296
    %v1298 = vpop.f32.mrb[0].mxu0
    %1299 = vmatprep.mubr.f32.mxu0 0.0
    %1300 = vmatmul.mubr.f32.gmra.mrb[0].mxu0 %v93
    %v1301 = vpop.f32.mrb[0].mxu0
    %v1302 = vadd.f32 %v1224, %v1301
    %v1303 = vpop.f32.mrb[0].mxu0
    %1304 = vmatprep.mubr.f32.mxu0 0.0
    %1305 = vmatmul.mubr.f32.gmra.mrb[0].mxu0 %v94
    %v1306 = vpop.f32.mrb[0].mxu0
    %v1307 = vadd.f32 %v1224, %v1306
    %v1308 = vpop.f32.mrb[0].mxu0
    %1309 = vmatprep.mubr.f32.mxu0 0.0
    %1310 = vmatmul.mubr.f32.gmra.mrb[0].mxu0 %v95
    %v1311 = vpop.f32.mrb[0].mxu0
    %v1312 = vadd.f32 %v1224, %v1311
    %v1313 = vpop.f32.mrb[0].mxu0
    %1314 = vmatprep.mubr.f32.mxu0 0.0
    %1315 = vmatmul.mubr.f32.gmra.mrb[0].mxu0 %v96
    %v1316 = vpop.f32.mrb[0].mxu0
    %v1317 = vadd.f32 %v1224, %v1316
    %v1318 = vpop.f32.mrb[0].mxu0
    %1319 = vmatprep.mubr.f32.mxu0 0.0
    %1320 = vmatmul.mubr.f32.gmra.mrb[0].mxu0 %v97
    %v1321 = vpop.f32.mrb[0].mxu0
    %v1322 = vadd.f32 %v1224, %v1321
    %v1323 = vpop.f32.mrb[0].mxu0
    %1324 = vmatprep.mubr.f32.mxu0 0.0
    %1325 = vmatmul.mubr.f32.gmra.mrb[0].mxu0 %v98
    %v1326 = vpop.f32.mrb[0].mxu0
    %v1327 = vadd.f32 %v1224, %v1326
    %v1328 = vpop.f32.mrb[0].mxu0
    %1329 = vmatprep.mubr.f32.mxu0 0.0
    %1330 = vmatmul.mubr.f32.gmra.mrb[0].mxu0 %v99
    %v1331 = vpop.f32.mrb[0].mxu0
    %v1332 = vadd.f32 %v1224, %v1331
    %v1333 = vpop.f32.mrb[0].mxu0
    %1334 = vmatprep.mubr.f32.mxu0 0.0
    %1335 = vmatmul.mubr.f32.gmra.mrb[0].mxu0 %v100
    %v1336 = vpop.f32.mrb[0].mxu0
    %v1337 = vadd.f32 %v1224, %v1336
    %v1338 = vpop.f32.mrb[0].mxu0
    %1339 = vmatprep.mubr.f32.mxu0 0.0
    %1340 = vmatmul.mubr.f32.gmra.mrb[0].mxu0 %v101
    %v1341 = vpop.f32.mrb[0].mxu0
    %v1342 = vadd.f32 %v1224, %v1341
    %v1343 = vpop.f32.mrb[0].mxu0
    %1344 = vmatprep.mubr.f32.mxu0 0.0
    %1345 = vmatmul.mubr.f32.gmra.mrb[0].mxu0 %v102
    %v1346 = vpop.f32.mrb[0].mxu0
    %v1347 = vadd.f32 %v1224, %v1346
    %v1348 = vpop.f32.mrb[0].mxu0
    %1349 = vdwg.mxu0
    %v1350 = vadd.f32 %v1193, %v1292
    %v1351 = vadd.f32 %v1194, %v1297
    %v1352 = vadd.f32 %v1195, %v1302
    %v1353 = vadd.f32 %v1196, %v1307
    %v1354 = vadd.f32 %v1197, %v1312
    %v1355 = vadd.f32 %v1198, %v1317
    %v1356 = vadd.f32 %v1199, %v1322
    %v1357 = vadd.f32 %v1200, %v1327
    %v1358 = vadd.f32 %v1201, %v1332
    %v1359 = vadd.f32 %v1202, %v1337
    %v1360 = vadd.f32 %v1203, %v1342
    %v1361 = vadd.f32 %v1204, %v1347
    %1362 = vst [vmem:[#allocation2] sm:$0xff] %v1350
    %1363 = vst [vmem:[#allocation2 + $0x8] sm:$0xff] %v1351
    %1364 = vst [vmem:[#allocation2 + $0x10] sm:$0xff] %v1352
    %1365 = vst [vmem:[#allocation2 + $0x18] sm:$0xff] %v1353
    %1366 = vst [vmem:[#allocation2 + $0x20] sm:$0xff] %v1354
    %1367 = vst [vmem:[#allocation2 + $0x28] sm:$0xff] %v1355
    %1368 = vst [vmem:[#allocation2 + $0x38] sm:$0xff] %v1356
    %1369 = vst [vmem:[#allocation2 + $0x40] sm:$0xff] %v1357
    %1370 = vst [vmem:[#allocation2 + $0x48] sm:$0xff] %v1358
    %1371 = vst [vmem:[#allocation2 + $0x50] sm:$0xff] %v1359
    %1372 = vst [vmem:[#allocation2 + $0x58] sm:$0xff] %v1360
    %1373 = vst [vmem:[#allocation2 + $0x60] sm:$0xff] %v1361
    %v1374 = vld [vmem:[#allocation2] ss:$3 sm:$0xff]
    %s1375 = scalar_lea.vmem [#allocation2], 24
    %v1376 = vld [vmem:[%s1375] ss:$3 sm:$0xff]
    %s1377 = scalar_lea.vmem [#allocation2], 56
    %v1378 = vld [vmem:[%s1377] ss:$3 sm:$0xff]
    %s1379 = scalar_lea.vmem [#allocation2], 80
    %v1380 = vld [vmem:[%s1379] ss:$3 sm:$0xff]
    %s1381 = scalar_lea.vmem [#allocation2], 1
    %v1382 = vld [vmem:[%s1381] ss:$3 sm:$0xff]
    %s1383 = scalar_lea.vmem [#allocation2], 25
    %v1384 = vld [vmem:[%s1383] ss:$3 sm:$0xff]
    %s1385 = scalar_lea.vmem [#allocation2], 57
    %v1386 = vld [vmem:[%s1385] ss:$3 sm:$0xff]
    %s1387 = scalar_lea.vmem [#allocation2], 81
    %v1388 = vld [vmem:[%s1387] ss:$3 sm:$0xff]
    %v1389 = vmax.f32 %v1374, %v1382
    %v1390 = vmax.f32 %v1376, %v1384
    %v1391 = vmax.f32 %v1378, %v1386
    %v1392 = vmax.f32 %v1380, %v1388
    %s1393 = scalar_lea.vmem [#allocation2], 2
    %v1394 = vld [vmem:[%s1393] ss:$3 sm:$0xff]
    %s1395 = scalar_lea.vmem [#allocation2], 26
    %v1396 = vld [vmem:[%s1395] ss:$3 sm:$0xff]
    %s1397 = scalar_lea.vmem [#allocation2], 58
    %v1398 = vld [vmem:[%s1397] ss:$3 sm:$0xff]
    %s1399 = scalar_lea.vmem [#allocation2], 82
    %v1400 = vld [vmem:[%s1399] ss:$3 sm:$0xff]
    %v1401 = vmax.f32 %v1389, %v1394
    %v1402 = vmax.f32 %v1390, %v1396
    %v1403 = vmax.f32 %v1391, %v1398
    %v1404 = vmax.f32 %v1392, %v1400
    %v1405 = vadd.f32 %v1401, %v1402
    %v1406 = vrot.slane %v1405, 4
    %v1407 = vadd.f32 %v1405, %v1406
    %v1408 = vrot.slane %v1407, 2
    %v1409 = vadd.f32 %v1407, %v1408
    %v1410 = vrot.slane %v1409, 1
    %v1411 = vadd.f32 %v1409, %v1410
    %v1412 = vadd.f32 %v1403, %v1404
    %v1413 = vrot.slane %v1412, 4
    %v1414 = vadd.f32 %v1412, %v1413
    %v1415 = vrot.slane %v1414, 2
    %v1416 = vadd.f32 %v1414, %v1415
    %v1417 = vrot.slane %v1416, 1
    %v1418 = vadd.f32 %v1416, %v1417
    %v1419 = vrcp.pop 16.0
    %v1420 = vmul.f32 %v1411, %v1419
    %v1421 = vmul.f32 %v1418, %v1419
    %v1422 = vld [vmem:[#allocation10] sm:$0xff]
    %v1423 = vld [vmem:[#allocation10 + $0x8] sm:$0xff]
    %v1424 = vld [vmem:[#allocation10 + $0x10] sm:$0xff]
    %v1425 = vld [vmem:[#allocation10 + $0x18] sm:$0xff]
    %v1426 = vld [vmem:[#allocation10 + $0x20] sm:$0xff]
    %v1427 = vld [vmem:[#allocation10 + $0x28] sm:$0xff]
    %v1428 = vld [vmem:[#allocation10 + $0x30] sm:$0xff]
    %v1429 = vld [vmem:[#allocation10 + $0x38] sm:$0xff]
    %v1430 = vld [vmem:[#allocation10 + $0x40] sm:$0xff]
    %v1431 = vld [vmem:[#allocation10 + $0x48] sm:$0xff]
    %v1432 = vld [vmem:[#allocation10 + $0x50] sm:$0xff]
    %v1433 = vld [vmem:[#allocation10 + $0x58] sm:$0xff]
    %v1434 = vld [vmem:[#allocation10 + $0x60] sm:$0xff]
    %v1435 = vld [vmem:[#allocation10 + $0x68] sm:$0xff]
    %v1436 = vld [vmem:[#allocation10 + $0x70] sm:$0xff]
    %v1437 = vld [vmem:[#allocation10 + $0x78] sm:$0xff]
    %v1438 = vlaneseq
    %v1439 = vshrl.u32 %v1438, 7
    %v1440 = vsub.s32 7, %v1439
    %v1441 = vrot.slane %v103, %v1440
    %vm1444 = vcmask 1041409
    %v1445 = vsel %vm1444, %v1421, %v1420
    %1447 = vmatprep.subr.mxu0 0.0
    %1448 = vmatpush1.msra.mxu0 %v1422
    %1449 = vmatprep.subr.mxu0 0.0
    %1450 = vmatpush1.msra.mxu0 %v1423
    %1451 = vmatprep.subr.mxu0 0.0
    %1452 = vmatpush1.msra.mxu0 %v1424
    %1453 = vmatprep.subr.mxu0 0.0
    %1454 = vmatpush1.msra.mxu0 %v1425
    %1455 = vmatprep.subr.mxu0 0.0
    %1456 = vmatpush1.msra.mxu0 %v1426
    %1457 = vmatprep.subr.mxu0 0.0
    %1458 = vmatpush1.msra.mxu0 %v1427
    %1459 = vmatprep.subr.mxu0 0.0
    %1460 = vmatpush1.msra.mxu0 %v1428
    %1461 = vmatprep.subr.mxu0 0.0
    %1462 = vmatpush1.msra.mxu0 %v1429
    %1463 = vmatprep.subr.mxu0 0.0
    %1464 = vmatpush1.msra.mxu0 %v1430
    %1465 = vmatprep.subr.mxu0 0.0
    %1466 = vmatpush1.msra.mxu0 %v1431
    %1467 = vmatprep.subr.mxu0 0.0
    %1468 = vmatpush1.msra.mxu0 %v1432
    %1469 = vmatprep.subr.mxu0 0.0
    %1470 = vmatpush1.msra.mxu0 %v1433
    %1471 = vmatprep.subr.mxu0 0.0
    %1472 = vmatpush1.msra.mxu0 %v1434
    %1473 = vmatprep.subr.mxu0 0.0
    %1474 = vmatpush1.msra.mxu0 %v1435
    %1475 = vmatprep.subr.mxu0 0.0
    %1476 = vmatpush1.msra.mxu0 %v1436
    %1477 = vmatprep.subr.mxu0 0.0
    %1478 = vmatpush1.msra.mxu0 %v1437
    %1479 = vmatprep.subr.mxu0 0.0
    %1480 = vmatpush1.msra.mxu0 0.0
    %1481 = vmatprep.subr.mxu0 0.0
    %1482 = vmatpush1.msra.mxu0 0.0
    %1483 = vmatprep.subr.mxu0 0.0
    %1484 = vmatpush1.msra.mxu0 0.0
    %1485 = vmatprep.subr.mxu0 0.0
    %1486 = vmatpush1.msra.mxu0 0.0
    %1487 = vmatprep.subr.mxu0 0.0
    %1488 = vmatpush1.msra.mxu0 0.0
    %1489 = vmatprep.subr.mxu0 0.0
    %1490 = vmatpush1.msra.mxu0 0.0
    %1491 = vmatprep.subr.mxu0 0.0
    %1492 = vmatpush1.msra.mxu0 0.0
    %1493 = vmatprep.subr.mxu0 0.0
    %1494 = vmatpush1.msra.mxu0 0.0
    %1495 = vmatprep.subr.mxu0 0.0
    %1496 = vmatpush1.msra.mxu0 0.0
    %1497 = vmatprep.subr.mxu0 0.0
    %1498 = vmatpush1.msra.mxu0 0.0
    %1499 = vmatprep.subr.mxu0 0.0
    %1500 = vmatpush1.msra.mxu0 0.0
    %1501 = vmatprep.subr.mxu0 0.0
    %1502 = vmatpush1.msra.mxu0 0.0
    %1503 = vmatprep.subr.mxu0 0.0
    %1504 = vmatpush1.msra.mxu0 0.0
    %1505 = vmatprep.subr.mxu0 0.0
    %1506 = vmatpush1.msra.mxu0 0.0
    %1507 = vmatprep.subr.mxu0 0.0
    %1508 = vmatpush1.msra.mxu0 0.0
    %1509 = vmatprep.subr.mxu0 0.0
    %1510 = vmatpush1.msra.mxu0 0.0
    %1511 = vmatprep.mubr.f32.mxu0 0.0
    %1512 = vmatmul.mubr.f32.gmra.mrb[0].mxu0 %v1445
    %v1513 = vpop.f32.mrb[0].mxu0
    %v1514 = vadd.f32 %v1441, %v1513
    %v1515 = vpop.f32.mrb[0].mxu0
    %1516 = vdwg.mxu0
    %v1517 = vxor.u32 %v1514, 2147483648
    %v1518 = vmul.f32 %v1517, 1.442695
    %v1519 = vpow.pop %v1518
    %v1520 = vadd.f32 %v1519, 1.0
    %v1521 = vrcp.pop %v1520
    %v1522 = vmul.f32 1.0, %v1521
    %v1523 = vadd.f32 %v1401, 1.0
    %v1524 = vadd.f32 %v1402, 1.0
    %v1525 = vadd.f32 %v1403, 1.0
    %v1526 = vadd.f32 %v1404, 1.0
    %v1529 = vunpack.c.l.s4 1966171168
    %v1530 = vunpack.c.0.s8 %v1529
    %v1531 = vlaneseq
    %v1532 = vshrl.u32 %v1531, 7
    %v1533 = vsub.s32 %v1530, %v1532
    %v1534 = vrot.slane %v1522, %v1533
    %v1535 = vcombine.high %v1534, %v1534
    %v1537 = vunpack.c.l.s4 1966171168
    %v1538 = vunpack.c.0.s8 %v1537
    %v1539 = vlaneseq
    %v1540 = vshrl.u32 %v1539, 7
    %v1541 = vsub.s32 %v1538, %v1540
    %v1542 = vrot.slane %v1534, %v1541
    %v1544 = vunpack.c.l.s4 1966171168
    %v1545 = vunpack.c.0.s8 %v1544
    %v1546 = vlaneseq
    %v1547 = vshrl.u32 %v1546, 7
    %v1548 = vsub.s32 %v1545, %v1547
    %v1549 = vrot.slane %v1535, %v1548
    %v1550 = vlaneseq
    %v1551 = vshrl.u32 %v1550, 7
    %v1552 = vsub.s32 0, %v1551
    %v1553 = vrot.slane %v1542, %v1552
    %v1554 = vlaneseq
    %v1555 = vshrl.u32 %v1554, 7
    %v1556 = vsub.s32 0, %v1555
    %v1557 = vrot.slane %v1549, %v1556
    %v1560 = vmul.f32 %v1523, %v1553
    %v1561 = vmul.f32 %v1524, %v1553
    %v1562 = vmul.f32 %v1525, %v1557
    %v1563 = vmul.f32 %v1526, %v1557
    %s1564 = scalar_lea.vmem %s5, 8
    %v1565 = vld [vmem:[%s1564] sm:$0xff]
    %v1566 = vadd.f32 %v1560, %v1561
    %v1567 = vadd.f32 %v1566, %v1562
    %v1568 = vadd.f32 %v1567, %v1563
    %v1569 = vrot.slane %v1568, 4
    %v1570 = vadd.f32 %v1568, %v1569
    %v1571 = vrot.slane %v1570, 2
    %v1572 = vadd.f32 %v1570, %v1571
    %v1573 = vrot.slane %v1572, 1
    %v1574 = vadd.f32 %v1572, %v1573
    %v1575 = vmul.f32 %v1560, %v1560
    %v1576 = vmul.f32 %v1561, %v1561
    %v1577 = vmul.f32 %v1562, %v1562
    %v1578 = vmul.f32 %v1563, %v1563
    %v1579 = vadd.f32 %v1575, %v1576
    %v1580 = vadd.f32 %v1579, %v1577
    %v1581 = vadd.f32 %v1580, %v1578
    %v1582 = vrot.slane %v1581, 4
    %v1583 = vadd.f32 %v1581, %v1582
    %v1584 = vrot.slane %v1583, 2
    %v1585 = vadd.f32 %v1583, %v1584
    %v1586 = vrot.slane %v1585, 1
    %v1587 = vadd.f32 %v1585, %v1586
    %v1588 = vmul.f32 %v1574, 0.03125
    %v1589 = vmul.f32 %v1587, 0.03125
    %v1590 = vmul.f32 %v1588, %v1588
    %v1591 = vsub.f32 %v1589, %v1590
    %v1592 = vmax.f32 %v1591, 0.0
    %v1593 = vsub.f32 %v1560, %v1588
    %v1594 = vsub.f32 %v1561, %v1588
    %v1595 = vsub.f32 %v1562, %v1588
    %v1596 = vsub.f32 %v1563, %v1588
    %v1597 = vadd.f32 %v1592, 1e-05
    %v1598 = vrsqrt.pop %v1597
    %v1599 = vmul.f32 %v1565, %v1598
    %v1600 = vlaneseq
    %v1601 = vshrl.u32 %v1600, 7
    %v1602 = vsub.s32 0, %v1601
    %v1603 = vrot.slane %v1599, %v1602
    %v1604 = vmul.f32 %v1593, %v1603
    %v1605 = vmul.f32 %v1594, %v1603
    %v1606 = vmul.f32 %v1595, %v1603
    %v1607 = vmul.f32 %v1596, %v1603
    %v1608 = vlaneseq
    %v1609 = vshrl.u32 %v1608, 7
    %v1610 = vsub.s32 1, %v1609
    %v1611 = vrot.slane %v1565, %v1610
    %v1612 = vadd.f32 %v1604, %v1611
    %v1613 = vadd.f32 %v1605, %v1611
    %v1614 = vadd.f32 %v1606, %v1611
    %v1615 = vadd.f32 %v1607, %v1611
    %vm1616 = vcmp.gt.f32.partialorder %v1612, 0.0
    %vm1617 = vcmp.gt.f32.partialorder %v1613, 0.0
    %vm1618 = vcmp.gt.f32.partialorder %v1614, 0.0
    %vm1619 = vcmp.gt.f32.partialorder %v1615, 0.0
    %v1620 = vmul.f32 %v1612, 0.01
    %v1621 = vmul.f32 %v1613, 0.01
    %v1622 = vmul.f32 %v1614, 0.01
    %v1623 = vmul.f32 %v1615, 0.01
    %v1624 = vsel %vm1616, %v1612, %v1620
    %v1625 = vsel %vm1617, %v1613, %v1621
    %v1626 = vsel %vm1618, %v1614, %v1622
    %v1627 = vsel %vm1619, %v1615, %v1623
    %1628 = vst [vmem:[#allocation2] sm:$0x1] 0.0
    %1629 = vst [vmem:[#allocation2 + $0x38] sm:$0x1] 0.0
    %1630 = vst [vmem:[#allocation2 + $0x11] sm:$0x1] 0.0
    %1631 = vst [vmem:[#allocation2 + $0x49] sm:$0x1] 0.0
    %1632 = vst [vmem:[#allocation2 + $0x1] sm:$0xff] %v1624
    %1633 = vst [vmem:[#allocation2 + $0x9] sm:$0xff] %v1625
    %1634 = vst [vmem:[#allocation2 + $0x39] sm:$0xff] %v1626
    %1635 = vst [vmem:[#allocation2 + $0x41] sm:$0xff] %v1627
    %v1636 = vld [vmem:[#allocation2] sm:$0xff]
    %v1637 = vld [vmem:[#allocation2 + $0x8] sm:$0xff]
    %v1638 = vld [vmem:[#allocation2 + $0x38] sm:$0xff]
    %v1639 = vld [vmem:[#allocation2 + $0x40] sm:$0xff]
    %v1640 = vld [vmem:[#allocation2 + $0x1] sm:$0xff]
    %v1641 = vld [vmem:[#allocation2 + $0x9] sm:$0xff]
    %v1642 = vld [vmem:[#allocation2 + $0x39] sm:$0xff]
    %v1643 = vld [vmem:[#allocation2 + $0x41] sm:$0xff]
    %v1644 = vld [vmem:[#allocation2 + $0x2] sm:$0xff]
    %v1645 = vld [vmem:[#allocation2 + $0xa] sm:$0xff]
    %v1646 = vld [vmem:[#allocation2 + $0x3a] sm:$0xff]
    %v1647 = vld [vmem:[#allocation2 + $0x42] sm:$0xff]
    %s1648 = scalar_lea.vmem [#allocation5], 384
    %v1649 = vld [vmem:[%s1648] sm:$0xff]
    %v1650 = vld [vmem:[%s1648 + $0x8] sm:$0xff]
    %v1651 = vld [vmem:[%s1648 + $0x10] sm:$0xff]
    %v1652 = vld [vmem:[%s1648 + $0x18] sm:$0xff]
    %v1653 = vld [vmem:[%s1648 + $0x20] sm:$0xff]
    %v1654 = vld [vmem:[%s1648 + $0x28] sm:$0xff]
    %v1655 = vld [vmem:[%s1648 + $0x30] sm:$0xff]
    %v1656 = vld [vmem:[%s1648 + $0x38] sm:$0xff]
    %v1657 = vld [vmem:[%s1648 + $0x40] sm:$0xff]
    %v1658 = vld [vmem:[%s1648 + $0x48] sm:$0xff]
    %v1659 = vld [vmem:[%s1648 + $0x50] sm:$0xff]
    %v1660 = vld [vmem:[%s1648 + $0x58] sm:$0xff]
    %v1661 = vld [vmem:[%s1648 + $0x60] sm:$0xff]
    %v1662 = vld [vmem:[%s1648 + $0x68] sm:$0xff]
    %v1663 = vld [vmem:[%s1648 + $0x70] sm:$0xff]
    %v1664 = vld [vmem:[%s1648 + $0x78] sm:$0xff]
    %v1665 = vld [vmem:[%s1648 + $0x80] sm:$0xff]
    %v1666 = vld [vmem:[%s1648 + $0x88] sm:$0xff]
    %v1667 = vld [vmem:[%s1648 + $0x90] sm:$0xff]
    %v1668 = vld [vmem:[%s1648 + $0x98] sm:$0xff]
    %v1669 = vld [vmem:[%s1648 + $0xa0] sm:$0xff]
    %v1670 = vld [vmem:[%s1648 + $0xa8] sm:$0xff]
    %v1671 = vld [vmem:[%s1648 + $0xb0] sm:$0xff]
    %v1672 = vld [vmem:[%s1648 + $0xb8] sm:$0xff]
    %v1673 = vld [vmem:[%s1648 + $0xc0] sm:$0xff]
    %v1674 = vld [vmem:[%s1648 + $0xc8] sm:$0xff]
    %v1675 = vld [vmem:[%s1648 + $0xd0] sm:$0xff]
    %v1676 = vld [vmem:[%s1648 + $0xd8] sm:$0xff]
    %v1677 = vld [vmem:[%s1648 + $0xe0] sm:$0xff]
    %v1678 = vld [vmem:[%s1648 + $0xe8] sm:$0xff]
    %v1679 = vld [vmem:[%s1648 + $0xf0] sm:$0xff]
    %v1680 = vld [vmem:[%s1648 + $0xf8] sm:$0xff]
    %v1681 = vld [vmem:[%s1648 + $0x100] sm:$0xff]
    %v1682 = vld [vmem:[%s1648 + $0x108] sm:$0xff]
    %v1683 = vld [vmem:[%s1648 + $0x110] sm:$0xff]
    %v1684 = vld [vmem:[%s1648 + $0x118] sm:$0xff]
    %v1685 = vld [vmem:[%s1648 + $0x120] sm:$0xff]
    %v1686 = vld [vmem:[%s1648 + $0x128] sm:$0xff]
    %v1687 = vld [vmem:[%s1648 + $0x130] sm:$0xff]
    %v1688 = vld [vmem:[%s1648 + $0x138] sm:$0xff]
    %v1689 = vld [vmem:[%s1648 + $0x140] sm:$0xff]
    %v1690 = vld [vmem:[%s1648 + $0x148] sm:$0xff]
    %v1691 = vld [vmem:[%s1648 + $0x150] sm:$0xff]
    %v1692 = vld [vmem:[%s1648 + $0x158] sm:$0xff]
    %v1693 = vld [vmem:[%s1648 + $0x160] sm:$0xff]
    %v1694 = vld [vmem:[%s1648 + $0x168] sm:$0xff]
    %v1695 = vld [vmem:[%s1648 + $0x170] sm:$0xff]
    %v1696 = vld [vmem:[%s1648 + $0x178] sm:$0xff]
    %v1697 = vlaneseq
    %v1698 = vshrl.u32 %v1697, 7
    %v1699 = vsub.s32 2, %v1698
    %v1700 = vrot.slane %v1565, %v1699
    %1701 = vmatprep.subr.mxu0 0.0
    %1702 = vmatpush1.msra.mxu0 %v1649
    %1703 = vmatprep.subr.mxu0 0.0
    %1704 = vmatpush1.msra.mxu0 %v1650
    %1705 = vmatprep.subr.mxu0 0.0
    %1706 = vmatpush1.msra.mxu0 %v1651
    %1707 = vmatprep.subr.mxu0 0.0
    %1708 = vmatpush1.msra.mxu0 %v1652
    %1709 = vmatprep.subr.mxu0 0.0
    %1710 = vmatpush1.msra.mxu0 %v1653
    %1711 = vmatprep.subr.mxu0 0.0
    %1712 = vmatpush1.msra.mxu0 %v1654
    %1713 = vmatprep.subr.mxu0 0.0
    %1714 = vmatpush1.msra.mxu0 %v1655
    %1715 = vmatprep.subr.mxu0 0.0
    %1716 = vmatpush1.msra.mxu0 %v1656
    %1717 = vmatprep.subr.mxu0 0.0
    %1718 = vmatpush1.msra.mxu0 %v1657
    %1719 = vmatprep.subr.mxu0 0.0
    %1720 = vmatpush1.msra.mxu0 %v1658
    %1721 = vmatprep.subr.mxu0 0.0
    %1722 = vmatpush1.msra.mxu0 %v1659
    %1723 = vmatprep.subr.mxu0 0.0
    %1724 = vmatpush1.msra.mxu0 %v1660
    %1725 = vmatprep.subr.mxu0 0.0
    %1726 = vmatpush1.msra.mxu0 %v1661
    %1727 = vmatprep.subr.mxu0 0.0
    %1728 = vmatpush1.msra.mxu0 %v1662
    %1729 = vmatprep.subr.mxu0 0.0
    %1730 = vmatpush1.msra.mxu0 %v1663
    %1731 = vmatprep.subr.mxu0 0.0
    %1732 = vmatpush1.msra.mxu0 %v1664
    %1733 = vmatprep.subr.mxu0 0.0
    %1734 = vmatpush1.msra.mxu0 %v1665
    %1735 = vmatprep.subr.mxu0 0.0
    %1736 = vmatpush1.msra.mxu0 %v1666
    %1737 = vmatprep.subr.mxu0 0.0
    %1738 = vmatpush1.msra.mxu0 %v1667
    %1739 = vmatprep.subr.mxu0 0.0
    %1740 = vmatpush1.msra.mxu0 %v1668
    %1741 = vmatprep.subr.mxu0 0.0
    %1742 = vmatpush1.msra.mxu0 %v1669
    %1743 = vmatprep.subr.mxu0 0.0
    %1744 = vmatpush1.msra.mxu0 %v1670
    %1745 = vmatprep.subr.mxu0 0.0
    %1746 = vmatpush1.msra.mxu0 %v1671
    %1747 = vmatprep.subr.mxu0 0.0
    %1748 = vmatpush1.msra.mxu0 %v1672
    %1749 = vmatprep.subr.mxu0 0.0
    %1750 = vmatpush1.msra.mxu0 %v1673
    %1751 = vmatprep.subr.mxu0 0.0
    %1752 = vmatpush1.msra.mxu0 %v1674
    %1753 = vmatprep.subr.mxu0 0.0
    %1754 = vmatpush1.msra.mxu0 %v1675
    %1755 = vmatprep.subr.mxu0 0.0
    %1756 = vmatpush1.msra.mxu0 %v1676
    %1757 = vmatprep.subr.mxu0 0.0
    %1758 = vmatpush1.msra.mxu0 %v1677
    %1759 = vmatprep.subr.mxu0 0.0
    %1760 = vmatpush1.msra.mxu0 %v1678
    %1761 = vmatprep.subr.mxu0 0.0
    %1762 = vmatpush1.msra.mxu0 %v1679
    %1763 = vmatprep.subr.mxu0 0.0
    %1764 = vmatpush1.msra.mxu0 %v1680
    %1765 = vmatprep.mubr.f32.mxu0 %v1640
    %1766 = vmatmul.mubr.f32.gmra.mrb[0].mxu0 %v1636
    %v1767 = vpop.f32.mrb[0].mxu0
    %v1768 = vadd.f32 %v1700, %v1767
    %v1769 = vpop.f32.mrb[0].mxu0
    %1770 = vmatprep.mubr.f32.mxu0 %v1641
    %1771 = vmatmul.mubr.f32.gmra.mrb[0].mxu0 %v1637
    %v1772 = vpop.f32.mrb[0].mxu0
    %v1773 = vadd.f32 %v1700, %v1772
    %v1774 = vpop.f32.mrb[0].mxu0
    %1775 = vmatprep.mubr.f32.mxu0 %v1642
    %1776 = vmatmul.mubr.f32.gmra.mrb[0].mxu0 %v1638
    %v1777 = vpop.f32.mrb[0].mxu0
    %v1778 = vadd.f32 %v1700, %v1777
    %v1779 = vpop.f32.mrb[0].mxu0
    %1780 = vmatprep.mubr.f32.mxu0 %v1643
    %1781 = vmatmul.mubr.f32.gmra.mrb[0].mxu0 %v1639
    %v1782 = vpop.f32.mrb[0].mxu0
    %v1783 = vadd.f32 %v1700, %v1782
    %v1784 = vpop.f32.mrb[0].mxu0
    %1785 = vdwg.mxu0
    %1786 = vmatprep.subr.mxu0 0.0
    %1787 = vmatpush1.msra.mxu0 %v1681
    %1788 = vmatprep.subr.mxu0 0.0
    %1789 = vmatpush1.msra.mxu0 %v1682
    %1790 = vmatprep.subr.mxu0 0.0
    %1791 = vmatpush1.msra.mxu0 %v1683
    %1792 = vmatprep.subr.mxu0 0.0
    %1793 = vmatpush1.msra.mxu0 %v1684
    %1794 = vmatprep.subr.mxu0 0.0
    %1795 = vmatpush1.msra.mxu0 %v1685
    %1796 = vmatprep.subr.mxu0 0.0
    %1797 = vmatpush1.msra.mxu0 %v1686
    %1798 = vmatprep.subr.mxu0 0.0
    %1799 = vmatpush1.msra.mxu0 %v1687
    %1800 = vmatprep.subr.mxu0 0.0
    %1801 = vmatpush1.msra.mxu0 %v1688
    %1802 = vmatprep.subr.mxu0 0.0
    %1803 = vmatpush1.msra.mxu0 %v1689
    %1804 = vmatprep.subr.mxu0 0.0
    %1805 = vmatpush1.msra.mxu0 %v1690
    %1806 = vmatprep.subr.mxu0 0.0
    %1807 = vmatpush1.msra.mxu0 %v1691
    %1808 = vmatprep.subr.mxu0 0.0
    %1809 = vmatpush1.msra.mxu0 %v1692
    %1810 = vmatprep.subr.mxu0 0.0
    %1811 = vmatpush1.msra.mxu0 %v1693
    %1812 = vmatprep.subr.mxu0 0.0
    %1813 = vmatpush1.msra.mxu0 %v1694
    %1814 = vmatprep.subr.mxu0 0.0
    %1815 = vmatpush1.msra.mxu0 %v1695
    %1816 = vmatprep.subr.mxu0 0.0
    %1817 = vmatpush1.msra.mxu0 %v1696
    %1818 = vmatprep.subr.mxu0 0.0
    %1819 = vmatpush1.msra.mxu0 0.0
    %1820 = vmatprep.subr.mxu0 0.0
    %1821 = vmatpush1.msra.mxu0 0.0
    %1822 = vmatprep.subr.mxu0 0.0
    %1823 = vmatpush1.msra.mxu0 0.0
    %1824 = vmatprep.subr.mxu0 0.0
    %1825 = vmatpush1.msra.mxu0 0.0
    %1826 = vmatprep.subr.mxu0 0.0
    %1827 = vmatpush1.msra.mxu0 0.0
    %1828 = vmatprep.subr.mxu0 0.0
    %1829 = vmatpush1.msra.mxu0 0.0
    %1830 = vmatprep.subr.mxu0 0.0
    %1831 = vmatpush1.msra.mxu0 0.0
    %1832 = vmatprep.subr.mxu0 0.0
    %1833 = vmatpush1.msra.mxu0 0.0
    %1834 = vmatprep.subr.mxu0 0.0
    %1835 = vmatpush1.msra.mxu0 0.0
    %1836 = vmatprep.subr.mxu0 0.0
    %1837 = vmatpush1.msra.mxu0 0.0
    %1838 = vmatprep.subr.mxu0 0.0
    %1839 = vmatpush1.msra.mxu0 0.0
    %1840 = vmatprep.subr.mxu0 0.0
    %1841 = vmatpush1.msra.mxu0 0.0
    %1842 = vmatprep.subr.mxu0 0.0
    %1843 = vmatpush1.msra.mxu0 0.0
    %1844 = vmatprep.subr.mxu0 0.0
    %1845 = vmatpush1.msra.mxu0 0.0
    %1846 = vmatprep.subr.mxu0 0.0
    %1847 = vmatpush1.msra.mxu0 0.0
    %1848 = vmatprep.subr.mxu0 0.0
    %1849 = vmatpush1.msra.mxu0 0.0
    %1850 = vmatprep.mubr.f32.mxu0 0.0
    %1851 = vmatmul.mubr.f32.gmra.mrb[0].mxu0 %v1644
    %v1852 = vpop.f32.mrb[0].mxu0
    %v1853 = vadd.f32 %v1768, %v1852
    %v1854 = vpop.f32.mrb[0].mxu0
    %1855 = vmatprep.mubr.f32.mxu0 0.0
    %1856 = vmatmul.mubr.f32.gmra.mrb[0].mxu0 %v1645
    %v1857 = vpop.f32.mrb[0].mxu0
    %v1858 = vadd.f32 %v1773, %v1857
    %v1859 = vpop.f32.mrb[0].mxu0
    %1860 = vmatprep.mubr.f32.mxu0 0.0
    %1861 = vmatmul.mubr.f32.gmra.mrb[0].mxu0 %v1646
    %v1862 = vpop.f32.mrb[0].mxu0
    %v1863 = vadd.f32 %v1778, %v1862
    %v1864 = vpop.f32.mrb[0].mxu0
    %1865 = vmatprep.mubr.f32.mxu0 0.0
    %1866 = vmatmul.mubr.f32.gmra.mrb[0].mxu0 %v1647
    %v1867 = vpop.f32.mrb[0].mxu0
    %v1868 = vadd.f32 %v1783, %v1867
    %v1869 = vpop.f32.mrb[0].mxu0
    %1870 = vdwg.mxu0
    %v1871 = vadd.f32 %v1853, %v1858
    %v1872 = vadd.f32 %v1871, %v1863
    %v1873 = vadd.f32 %v1872, %v1868
    %v1874 = vrot.slane %v1873, 4
    %v1875 = vadd.f32 %v1873, %v1874
    %v1876 = vrot.slane %v1875, 2
    %v1877 = vadd.f32 %v1875, %v1876
    %v1878 = vrot.slane %v1877, 1
    %v1879 = vadd.f32 %v1877, %v1878
    %v1880 = vmul.f32 %v1853, %v1853
    %v1881 = vmul.f32 %v1858, %v1858
    %v1882 = vmul.f32 %v1863, %v1863
    %v1883 = vmul.f32 %v1868, %v1868
    %v1884 = vadd.f32 %v1880, %v1881
    %v1885 = vadd.f32 %v1884, %v1882
    %v1886 = vadd.f32 %v1885, %v1883
    %v1887 = vrot.slane %v1886, 4
    %v1888 = vadd.f32 %v1886, %v1887
    %v1889 = vrot.slane %v1888, 2
    %v1890 = vadd.f32 %v1888, %v1889
    %v1891 = vrot.slane %v1890, 1
    %v1892 = vadd.f32 %v1890, %v1891
    %v1893 = vmul.f32 %v1879, 0.03125
    %v1894 = vmul.f32 %v1892, 0.03125
    %v1895 = vmul.f32 %v1893, %v1893
    %v1896 = vsub.f32 %v1894, %v1895
    %v1897 = vmax.f32 %v1896, 0.0
    %v1898 = vadd.f32 %v1897, 1e-05
    %v1899 = vrsqrt.pop %v1898
    %v1900 = vmul.f32 %v1565, %v1899
    %v1901 = vmul.f32 %v1893, %v1900
    %v1903 = vrot.slane %v1901, 7
    %v1905 = vsub.f32 %v1565, %v1903
    %s1906 = scalar_lea.vmem [#allocation7], 384
    %v1907 = vld [vmem:[%s1906] sm:$0xff]
    %v1908 = vld [vmem:[%s1906 + $0x8] sm:$0xff]
    %v1909 = vld [vmem:[%s1906 + $0x10] sm:$0xff]
    %v1910 = vld [vmem:[%s1906 + $0x18] sm:$0xff]
    %v1911 = vld [vmem:[%s1906 + $0x20] sm:$0xff]
    %v1912 = vld [vmem:[%s1906 + $0x28] sm:$0xff]
    %v1913 = vld [vmem:[%s1906 + $0x30] sm:$0xff]
    %v1914 = vld [vmem:[%s1906 + $0x38] sm:$0xff]
    %v1915 = vld [vmem:[%s1906 + $0x40] sm:$0xff]
    %v1916 = vld [vmem:[%s1906 + $0x48] sm:$0xff]
    %v1917 = vld [vmem:[%s1906 + $0x50] sm:$0xff]
    %v1918 = vld [vmem:[%s1906 + $0x58] sm:$0xff]
    %v1919 = vld [vmem:[%s1906 + $0x60] sm:$0xff]
    %v1920 = vld [vmem:[%s1906 + $0x68] sm:$0xff]
    %v1921 = vld [vmem:[%s1906 + $0x70] sm:$0xff]
    %v1922 = vld [vmem:[%s1906 + $0x78] sm:$0xff]
    %v1923 = vld [vmem:[%s1906 + $0x80] sm:$0xff]
    %v1924 = vld [vmem:[%s1906 + $0x88] sm:$0xff]
    %v1925 = vld [vmem:[%s1906 + $0x90] sm:$0xff]
    %v1926 = vld [vmem:[%s1906 + $0x98] sm:$0xff]
    %v1927 = vld [vmem:[%s1906 + $0xa0] sm:$0xff]
    %v1928 = vld [vmem:[%s1906 + $0xa8] sm:$0xff]
    %v1929 = vld [vmem:[%s1906 + $0xb0] sm:$0xff]
    %v1930 = vld [vmem:[%s1906 + $0xb8] sm:$0xff]
    %v1931 = vld [vmem:[%s1906 + $0xc0] sm:$0xff]
    %v1932 = vld [vmem:[%s1906 + $0xc8] sm:$0xff]
    %v1933 = vld [vmem:[%s1906 + $0xd0] sm:$0xff]
    %v1934 = vld [vmem:[%s1906 + $0xd8] sm:$0xff]
    %v1935 = vld [vmem:[%s1906 + $0xe0] sm:$0xff]
    %v1936 = vld [vmem:[%s1906 + $0xe8] sm:$0xff]
    %v1937 = vld [vmem:[%s1906 + $0xf0] sm:$0xff]
    %v1938 = vld [vmem:[%s1906 + $0xf8] sm:$0xff]
    %v1939 = vld [vmem:[%s1906 + $0x100] sm:$0xff]
    %v1940 = vld [vmem:[%s1906 + $0x108] sm:$0xff]
    %v1941 = vld [vmem:[%s1906 + $0x110] sm:$0xff]
    %v1942 = vld [vmem:[%s1906 + $0x118] sm:$0xff]
    %v1943 = vld [vmem:[%s1906 + $0x120] sm:$0xff]
    %v1944 = vld [vmem:[%s1906 + $0x128] sm:$0xff]
    %v1945 = vld [vmem:[%s1906 + $0x130] sm:$0xff]
    %v1946 = vld [vmem:[%s1906 + $0x138] sm:$0xff]
    %v1947 = vld [vmem:[%s1906 + $0x140] sm:$0xff]
    %v1948 = vld [vmem:[%s1906 + $0x148] sm:$0xff]
    %v1949 = vld [vmem:[%s1906 + $0x150] sm:$0xff]
    %v1950 = vld [vmem:[%s1906 + $0x158] sm:$0xff]
    %v1951 = vld [vmem:[%s1906 + $0x160] sm:$0xff]
    %v1952 = vld [vmem:[%s1906 + $0x168] sm:$0xff]
    %v1953 = vld [vmem:[%s1906 + $0x170] sm:$0xff]
    %v1954 = vld [vmem:[%s1906 + $0x178] sm:$0xff]
    %v1956 = vrot.slane %v1905, 4
    %1958 = vmatprep.subr.mxu0 0.0
    %1959 = vmatpush1.msra.mxu0 %v1907
    %1960 = vmatprep.subr.mxu0 0.0
    %1961 = vmatpush1.msra.mxu0 %v1908
    %1962 = vmatprep.subr.mxu0 0.0
    %1963 = vmatpush1.msra.mxu0 %v1909
    %1964 = vmatprep.subr.mxu0 0.0
    %1965 = vmatpush1.msra.mxu0 %v1910
    %1966 = vmatprep.subr.mxu0 0.0
    %1967 = vmatpush1.msra.mxu0 %v1911
    %1968 = vmatprep.subr.mxu0 0.0
    %1969 = vmatpush1.msra.mxu0 %v1912
    %1970 = vmatprep.subr.mxu0 0.0
    %1971 = vmatpush1.msra.mxu0 %v1913
    %1972 = vmatprep.subr.mxu0 0.0
    %1973 = vmatpush1.msra.mxu0 %v1914
    %1974 = vmatprep.subr.mxu0 0.0
    %1975 = vmatpush1.msra.mxu0 %v1915
    %1976 = vmatprep.subr.mxu0 0.0
    %1977 = vmatpush1.msra.mxu0 %v1916
    %1978 = vmatprep.subr.mxu0 0.0
    %1979 = vmatpush1.msra.mxu0 %v1917
    %1980 = vmatprep.subr.mxu0 0.0
    %1981 = vmatpush1.msra.mxu0 %v1918
    %1982 = vmatprep.subr.mxu0 0.0
    %1983 = vmatpush1.msra.mxu0 %v1919
    %1984 = vmatprep.subr.mxu0 0.0
    %1985 = vmatpush1.msra.mxu0 %v1920
    %1986 = vmatprep.subr.mxu0 0.0
    %1987 = vmatpush1.msra.mxu0 %v1921
    %1988 = vmatprep.subr.mxu0 0.0
    %1989 = vmatpush1.msra.mxu0 %v1922
    %1990 = vmatprep.subr.mxu0 0.0
    %1991 = vmatpush1.msra.mxu0 %v1923
    %1992 = vmatprep.subr.mxu0 0.0
    %1993 = vmatpush1.msra.mxu0 %v1924
    %1994 = vmatprep.subr.mxu0 0.0
    %1995 = vmatpush1.msra.mxu0 %v1925
    %1996 = vmatprep.subr.mxu0 0.0
    %1997 = vmatpush1.msra.mxu0 %v1926
    %1998 = vmatprep.subr.mxu0 0.0
    %1999 = vmatpush1.msra.mxu0 %v1927
    %2000 = vmatprep.subr.mxu0 0.0
    %2001 = vmatpush1.msra.mxu0 %v1928
    %2002 = vmatprep.subr.mxu0 0.0
    %2003 = vmatpush1.msra.mxu0 %v1929
    %2004 = vmatprep.subr.mxu0 0.0
    %2005 = vmatpush1.msra.mxu0 %v1930
    %2006 = vmatprep.subr.mxu0 0.0
    %2007 = vmatpush1.msra.mxu0 %v1931
    %2008 = vmatprep.subr.mxu0 0.0
    %2009 = vmatpush1.msra.mxu0 %v1932
    %2010 = vmatprep.subr.mxu0 0.0
    %2011 = vmatpush1.msra.mxu0 %v1933
    %2012 = vmatprep.subr.mxu0 0.0
    %2013 = vmatpush1.msra.mxu0 %v1934
    %2014 = vmatprep.subr.mxu0 0.0
    %2015 = vmatpush1.msra.mxu0 %v1935
    %2016 = vmatprep.subr.mxu0 0.0
    %2017 = vmatpush1.msra.mxu0 %v1936
    %2018 = vmatprep.subr.mxu0 0.0
    %2019 = vmatpush1.msra.mxu0 %v1937
    %2020 = vmatprep.subr.mxu0 0.0
    %2021 = vmatpush1.msra.mxu0 %v1938
    %2022 = vmatprep.mubr.f32.mxu0 %v1956
    %2023 = vmatmul.mubr.f32.gmra.mrb[0].mxu0 %v1956
    %v2024 = vpop.f32.mrb[0].mxu0
    %v2025 = vadd.f32 0.0, %v2024
    %v2026 = vpop.f32.mrb[0].mxu0
    %2027 = vdwg.mxu0
    %2028 = vmatprep.subr.mxu0 0.0
    %2029 = vmatpush1.msra.mxu0 %v1939
    %2030 = vmatprep.subr.mxu0 0.0
    %2031 = vmatpush1.msra.mxu0 %v1940
    %2032 = vmatprep.subr.mxu0 0.0
    %2033 = vmatpush1.msra.mxu0 %v1941
    %2034 = vmatprep.subr.mxu0 0.0
    %2035 = vmatpush1.msra.mxu0 %v1942
    %2036 = vmatprep.subr.mxu0 0.0
    %2037 = vmatpush1.msra.mxu0 %v1943
    %2038 = vmatprep.subr.mxu0 0.0
    %2039 = vmatpush1.msra.mxu0 %v1944
    %2040 = vmatprep.subr.mxu0 0.0
    %2041 = vmatpush1.msra.mxu0 %v1945
    %2042 = vmatprep.subr.mxu0 0.0
    %2043 = vmatpush1.msra.mxu0 %v1946
    %2044 = vmatprep.subr.mxu0 0.0
    %2045 = vmatpush1.msra.mxu0 %v1947
    %2046 = vmatprep.subr.mxu0 0.0
    %2047 = vmatpush1.msra.mxu0 %v1948
    %2048 = vmatprep.subr.mxu0 0.0
    %2049 = vmatpush1.msra.mxu0 %v1949
    %2050 = vmatprep.subr.mxu0 0.0
    %2051 = vmatpush1.msra.mxu0 %v1950
    %2052 = vmatprep.subr.mxu0 0.0
    %2053 = vmatpush1.msra.mxu0 %v1951
    %2054 = vmatprep.subr.mxu0 0.0
    %2055 = vmatpush1.msra.mxu0 %v1952
    %2056 = vmatprep.subr.mxu0 0.0
    %2057 = vmatpush1.msra.mxu0 %v1953
    %2058 = vmatprep.subr.mxu0 0.0
    %2059 = vmatpush1.msra.mxu0 %v1954
    %2060 = vmatprep.subr.mxu0 0.0
    %2061 = vmatpush1.msra.mxu0 0.0
    %2062 = vmatprep.subr.mxu0 0.0
    %2063 = vmatpush1.msra.mxu0 0.0
    %2064 = vmatprep.subr.mxu0 0.0
    %2065 = vmatpush1.msra.mxu0 0.0
    %2066 = vmatprep.subr.mxu0 0.0
    %2067 = vmatpush1.msra.mxu0 0.0
    %2068 = vmatprep.subr.mxu0 0.0
    %2069 = vmatpush1.msra.mxu0 0.0
    %2070 = vmatprep.subr.mxu0 0.0
    %2071 = vmatpush1.msra.mxu0 0.0
    %2072 = vmatprep.subr.mxu0 0.0
    %2073 = vmatpush1.msra.mxu0 0.0
    %2074 = vmatprep.subr.mxu0 0.0
    %2075 = vmatpush1.msra.mxu0 0.0
    %2076 = vmatprep.subr.mxu0 0.0
    %2077 = vmatpush1.msra.mxu0 0.0
    %2078 = vmatprep.subr.mxu0 0.0
    %2079 = vmatpush1.msra.mxu0 0.0
    %2080 = vmatprep.subr.mxu0 0.0
    %2081 = vmatpush1.msra.mxu0 0.0
    %2082 = vmatprep.subr.mxu0 0.0
    %2083 = vmatpush1.msra.mxu0 0.0
    %2084 = vmatprep.subr.mxu0 0.0
    %2085 = vmatpush1.msra.mxu0 0.0
    %2086 = vmatprep.subr.mxu0 0.0
    %2087 = vmatpush1.msra.mxu0 0.0
    %2088 = vmatprep.subr.mxu0 0.0
    %2089 = vmatpush1.msra.mxu0 0.0
    %2090 = vmatprep.subr.mxu0 0.0
    %2091 = vmatpush1.msra.mxu0 0.0
    %2092 = vmatprep.mubr.f32.mxu0 0.0
    %2093 = vmatmul.mubr.f32.gmra.mrb[0].mxu0 %v1956
    %v2094 = vpop.f32.mrb[0].mxu0
    %v2095 = vadd.f32 %v2025, %v2094
    %v2096 = vpop.f32.mrb[0].mxu0
    %2097 = vdwg.mxu0
    %v2099 = vrot.slane %v2095, 3
    %v2101 = vadd.f32 %v1565, %v2099
    %v2102 = vsub.f32 0.0, %v1905
    %2103 = vst [vmem:[#allocation2 - $0x4] sm:$0x10] %v2102
    %2104 = vst [vmem:[#allocation2 + $0x34] sm:$0x10] %v2102
    %2105 = vst [vmem:[#allocation2 + $0xd] sm:$0x10] %v2102
    %2106 = vst [vmem:[#allocation2 + $0x45] sm:$0x10] %v2102
    %v2107 = vlaneseq
    %v2108 = vshrl.u32 %v2107, 7
    %v2109 = vsub.s32 3, %v2108
    %v2110 = vrot.slane %v1900, %v2109
    %v2111 = vmul.f32 %v1853, %v2110
    %v2112 = vmul.f32 %v1858, %v2110
    %v2113 = vmul.f32 %v1863, %v2110
    %v2114 = vmul.f32 %v1868, %v2110
    %2115 = vst [vmem:[#allocation2 + $0x1] sm:$0xff] %v2111
    %2116 = vst [vmem:[#allocation2 + $0x9] sm:$0xff] %v2112
    %2117 = vst [vmem:[#allocation2 + $0x39] sm:$0xff] %v2113
    %2118 = vst [vmem:[#allocation2 + $0x41] sm:$0xff] %v2114
    %v2119 = vld [vmem:[#allocation2] sm:$0xff]
    %v2120 = vld [vmem:[#allocation2 + $0x8] sm:$0xff]
    %v2121 = vld [vmem:[#allocation2 + $0x38] sm:$0xff]
    %v2122 = vld [vmem:[#allocation2 + $0x40] sm:$0xff]
    %v2123 = vld [vmem:[#allocation2 + $0x1] sm:$0xff]
    %v2124 = vld [vmem:[#allocation2 + $0x9] sm:$0xff]
    %v2125 = vld [vmem:[#allocation2 + $0x39] sm:$0xff]
    %v2126 = vld [vmem:[#allocation2 + $0x41] sm:$0xff]
    %v2127 = vld [vmem:[#allocation2 + $0x2] sm:$0xff]
    %v2128 = vld [vmem:[#allocation2 + $0xa] sm:$0xff]
    %v2129 = vld [vmem:[#allocation2 + $0x3a] sm:$0xff]
    %v2130 = vld [vmem:[#allocation2 + $0x42] sm:$0xff]
    %v2131 = vlaneseq
    %v2132 = vshrl.u32 %v2131, 7
    %v2133 = vsub.s32 5, %v2132
    %v2134 = vrot.slane %v2101, %v2133
    %2135 = vmatprep.subr.mxu0 0.0
    %2136 = vmatpush1.msra.mxu0 %v1907
    %2137 = vmatprep.subr.mxu0 0.0
    %2138 = vmatpush1.msra.mxu0 %v1908
    %2139 = vmatprep.subr.mxu0 0.0
    %2140 = vmatpush1.msra.mxu0 %v1909
    %2141 = vmatprep.subr.mxu0 0.0
    %2142 = vmatpush1.msra.mxu0 %v1910
    %2143 = vmatprep.subr.mxu0 0.0
    %2144 = vmatpush1.msra.mxu0 %v1911
    %2145 = vmatprep.subr.mxu0 0.0
    %2146 = vmatpush1.msra.mxu0 %v1912
    %2147 = vmatprep.subr.mxu0 0.0
    %2148 = vmatpush1.msra.mxu0 %v1913
    %2149 = vmatprep.subr.mxu0 0.0
    %2150 = vmatpush1.msra.mxu0 %v1914
    %2151 = vmatprep.subr.mxu0 0.0
    %2152 = vmatpush1.msra.mxu0 %v1915
    %2153 = vmatprep.subr.mxu0 0.0
    %2154 = vmatpush1.msra.mxu0 %v1916
    %2155 = vmatprep.subr.mxu0 0.0
    %2156 = vmatpush1.msra.mxu0 %v1917
    %2157 = vmatprep.subr.mxu0 0.0
    %2158 = vmatpush1.msra.mxu0 %v1918
    %2159 = vmatprep.subr.mxu0 0.0
    %2160 = vmatpush1.msra.mxu0 %v1919
    %2161 = vmatprep.subr.mxu0 0.0
    %2162 = vmatpush1.msra.mxu0 %v1920
    %2163 = vmatprep.subr.mxu0 0.0
    %2164 = vmatpush1.msra.mxu0 %v1921
    %2165 = vmatprep.subr.mxu0 0.0
    %2166 = vmatpush1.msra.mxu0 %v1922
    %2167 = vmatprep.subr.mxu0 0.0
    %2168 = vmatpush1.msra.mxu0 %v1923
    %2169 = vmatprep.subr.mxu0 0.0
    %2170 = vmatpush1.msra.mxu0 %v1924
    %2171 = vmatprep.subr.mxu0 0.0
    %2172 = vmatpush1.msra.mxu0 %v1925
    %2173 = vmatprep.subr.mxu0 0.0
    %2174 = vmatpush1.msra.mxu0 %v1926
    %2175 = vmatprep.subr.mxu0 0.0
    %2176 = vmatpush1.msra.mxu0 %v1927
    %2177 = vmatprep.subr.mxu0 0.0
    %2178 = vmatpush1.msra.mxu0 %v1928
    %2179 = vmatprep.subr.mxu0 0.0
    %2180 = vmatpush1.msra.mxu0 %v1929
    %2181 = vmatprep.subr.mxu0 0.0
    %2182 = vmatpush1.msra.mxu0 %v1930
    %2183 = vmatprep.subr.mxu0 0.0
    %2184 = vmatpush1.msra.mxu0 %v1931
    %2185 = vmatprep.subr.mxu0 0.0
    %2186 = vmatpush1.msra.mxu0 %v1932
    %2187 = vmatprep.subr.mxu0 0.0
    %2188 = vmatpush1.msra.mxu0 %v1933
    %2189 = vmatprep.subr.mxu0 0.0
    %2190 = vmatpush1.msra.mxu0 %v1934
    %2191 = vmatprep.subr.mxu0 0.0
    %2192 = vmatpush1.msra.mxu0 %v1935
    %2193 = vmatprep.subr.mxu0 0.0
    %2194 = vmatpush1.msra.mxu0 %v1936
    %2195 = vmatprep.subr.mxu0 0.0
    %2196 = vmatpush1.msra.mxu0 %v1937
    %2197 = vmatprep.subr.mxu0 0.0
    %2198 = vmatpush1.msra.mxu0 %v1938
    %2199 = vmatprep.mubr.f32.mxu0 %v2123
    %2200 = vmatmul.mubr.f32.gmra.mrb[0].mxu0 %v2119
    %v2201 = vpop.f32.mrb[0].mxu0
    %v2202 = vadd.f32 %v2134, %v2201
    %v2203 = vpop.f32.mrb[0].mxu0
    %2204 = vmatprep.mubr.f32.mxu0 %v2124
    %2205 = vmatmul.mubr.f32.gmra.mrb[0].mxu0 %v2120
    %v2206 = vpop.f32.mrb[0].mxu0
    %v2207 = vadd.f32 %v2134, %v2206
    %v2208 = vpop.f32.mrb[0].mxu0
    %2209 = vmatprep.mubr.f32.mxu0 %v2125
    %2210 = vmatmul.mubr.f32.gmra.mrb[0].mxu0 %v2121
    %v2211 = vpop.f32.mrb[0].mxu0
    %v2212 = vadd.f32 %v2134, %v2211
    %v2213 = vpop.f32.mrb[0].mxu0
    %2214 = vmatprep.mubr.f32.mxu0 %v2126
    %2215 = vmatmul.mubr.f32.gmra.mrb[0].mxu0 %v2122
    %v2216 = vpop.f32.mrb[0].mxu0
    %v2217 = vadd.f32 %v2134, %v2216
    %v2218 = vpop.f32.mrb[0].mxu0
    %2219 = vdwg.mxu0
    %2220 = vmatprep.subr.mxu0 0.0
    %2221 = vmatpush1.msra.mxu0 %v1939
    %2222 = vmatprep.subr.mxu0 0.0
    %2223 = vmatpush1.msra.mxu0 %v1940
    %2224 = vmatprep.subr.mxu0 0.0
    %2225 = vmatpush1.msra.mxu0 %v1941
    %2226 = vmatprep.subr.mxu0 0.0
    %2227 = vmatpush1.msra.mxu0 %v1942
    %2228 = vmatprep.subr.mxu0 0.0
    %2229 = vmatpush1.msra.mxu0 %v1943
    %2230 = vmatprep.subr.mxu0 0.0
    %2231 = vmatpush1.msra.mxu0 %v1944
    %2232 = vmatprep.subr.mxu0 0.0
    %2233 = vmatpush1.msra.mxu0 %v1945
    %2234 = vmatprep.subr.mxu0 0.0
    %2235 = vmatpush1.msra.mxu0 %v1946
    %2236 = vmatprep.subr.mxu0 0.0
    %2237 = vmatpush1.msra.mxu0 %v1947
    %2238 = vmatprep.subr.mxu0 0.0
    %2239 = vmatpush1.msra.mxu0 %v1948
    %2240 = vmatprep.subr.mxu0 0.0
    %2241 = vmatpush1.msra.mxu0 %v1949
    %2242 = vmatprep.subr.mxu0 0.0
    %2243 = vmatpush1.msra.mxu0 %v1950
    %2244 = vmatprep.subr.mxu0 0.0
    %2245 = vmatpush1.msra.mxu0 %v1951
    %2246 = vmatprep.subr.mxu0 0.0
    %2247 = vmatpush1.msra.mxu0 %v1952
    %2248 = vmatprep.subr.mxu0 0.0
    %2249 = vmatpush1.msra.mxu0 %v1953
    %2250 = vmatprep.subr.mxu0 0.0
    %2251 = vmatpush1.msra.mxu0 %v1954
    %2252 = vmatprep.subr.mxu0 0.0
    %2253 = vmatpush1.msra.mxu0 0.0
    %2254 = vmatprep.subr.mxu0 0.0
    %2255 = vmatpush1.msra.mxu0 0.0
    %2256 = vmatprep.subr.mxu0 0.0
    %2257 = vmatpush1.msra.mxu0 0.0
    %2258 = vmatprep.subr.mxu0 0.0
    %2259 = vmatpush1.msra.mxu0 0.0
    %2260 = vmatprep.subr.mxu0 0.0
    %2261 = vmatpush1.msra.mxu0 0.0
    %2262 = vmatprep.subr.mxu0 0.0
    %2263 = vmatpush1.msra.mxu0 0.0
    %2264 = vmatprep.subr.mxu0 0.0
    %2265 = vmatpush1.msra.mxu0 0.0
    %2266 = vmatprep.subr.mxu0 0.0
    %2267 = vmatpush1.msra.mxu0 0.0
    %2268 = vmatprep.subr.mxu0 0.0
    %2269 = vmatpush1.msra.mxu0 0.0
    %2270 = vmatprep.subr.mxu0 0.0
    %2271 = vmatpush1.msra.mxu0 0.0
    %2272 = vmatprep.subr.mxu0 0.0
    %2273 = vmatpush1.msra.mxu0 0.0
    %2274 = vmatprep.subr.mxu0 0.0
    %2275 = vmatpush1.msra.mxu0 0.0
    %2276 = vmatprep.subr.mxu0 0.0
    %2277 = vmatpush1.msra.mxu0 0.0
    %2278 = vmatprep.subr.mxu0 0.0
    %2279 = vmatpush1.msra.mxu0 0.0
    %2280 = vmatprep.subr.mxu0 0.0
    %2281 = vmatpush1.msra.mxu0 0.0
    %2282 = vmatprep.subr.mxu0 0.0
    %2283 = vmatpush1.msra.mxu0 0.0
    %2284 = vmatprep.mubr.f32.mxu0 0.0
    %2285 = vmatmul.mubr.f32.gmra.mrb[0].mxu0 %v2127
    %v2286 = vpop.f32.mrb[0].mxu0
    %v2287 = vadd.f32 %v2202, %v2286
    %v2288 = vpop.f32.mrb[0].mxu0
    %2289 = vmatprep.mubr.f32.mxu0 0.0
    %2290 = vmatmul.mubr.f32.gmra.mrb[0].mxu0 %v2128
    %v2291 = vpop.f32.mrb[0].mxu0
    %v2292 = vadd.f32 %v2207, %v2291
    %v2293 = vpop.f32.mrb[0].mxu0
    %2294 = vmatprep.mubr.f32.mxu0 0.0
    %2295 = vmatmul.mubr.f32.gmra.mrb[0].mxu0 %v2129
    %v2296 = vpop.f32.mrb[0].mxu0
    %v2297 = vadd.f32 %v2212, %v2296
    %v2298 = vpop.f32.mrb[0].mxu0
    %2299 = vmatprep.mubr.f32.mxu0 0.0
    %2300 = vmatmul.mubr.f32.gmra.mrb[0].mxu0 %v2130
    %v2301 = vpop.f32.mrb[0].mxu0
    %v2302 = vadd.f32 %v2217, %v2301
    %v2303 = vpop.f32.mrb[0].mxu0
    %2304 = vdwg.mxu0
    %vm2305 = vcmp.gt.f32.partialorder %v2287, 0.0
    %vm2306 = vcmp.gt.f32.partialorder %v2292, 0.0
    %vm2307 = vcmp.gt.f32.partialorder %v2297, 0.0
    %vm2308 = vcmp.gt.f32.partialorder %v2302, 0.0
    %v2309 = vmul.f32 %v2287, 0.01
    %v2310 = vmul.f32 %v2292, 0.01
    %v2311 = vmul.f32 %v2297, 0.01
    %v2312 = vmul.f32 %v2302, 0.01
    %v2313 = vsel %vm2305, %v2287, %v2309
    %v2314 = vsel %vm2306, %v2292, %v2310
    %v2315 = vsel %vm2307, %v2297, %v2311
    %v2316 = vsel %vm2308, %v2302, %v2312
    %v2317 = vadd.f32 %v2313, %v1560
    %v2318 = vadd.f32 %v2314, %v1561
    %v2319 = vadd.f32 %v2315, %v1562
    %v2320 = vadd.f32 %v2316, %v1563
    %2321 = vst [vmem:[#allocation2] sm:$0xff] %v2317
    %2322 = vst [vmem:[#allocation2 + $0x8] sm:$0xff] %v2318
    %2323 = vst [vmem:[#allocation2 + $0x38] sm:$0xff] %v2319
    %2324 = vst [vmem:[#allocation2 + $0x40] sm:$0xff] %v2320
    %v2325 = vld [vmem:[#allocation2] ss:$3 sm:$0x1f]
    %v2326 = vld [vmem:[%s1377] ss:$3 sm:$0x1f]
    %v2327 = vld [vmem:[%s1381] ss:$3 sm:$0x1f]
    %v2328 = vld [vmem:[%s1385] ss:$3 sm:$0x1f]
    %v2329 = vmax.f32 %v2325, %v2327
    %v2330 = vmax.f32 %v2326, %v2328
    %s2331 = scalar_lea.vmem [#allocation2], 2
    %v2332 = vld [vmem:[%s2331] ss:$3 sm:$0x1f]
    %s2333 = scalar_lea.vmem [#allocation2], 58
    %v2334 = vld [vmem:[%s2333] ss:$3 sm:$0x1f]
    %v2335 = vmax.f32 %v2329, %v2332
    %v2336 = vmax.f32 %v2330, %v2334
    %vm2337 = vcmask 1044480
    %v2338 = vsel %vm2337, %v2335, 0.0
    %v2339 = vrot.slane %v2338, 4
    %v2340 = vadd.f32 %v2338, %v2339
    %v2341 = vrot.slane %v2340, 2
    %v2342 = vadd.f32 %v2340, %v2341
    %v2343 = vrot.slane %v2342, 1
    %v2344 = vadd.f32 %v2342, %v2343
    %v2345 = vsel %vm2337, %v2336, 0.0
    %v2346 = vrot.slane %v2345, 4
    %v2347 = vadd.f32 %v2345, %v2346
    %v2348 = vrot.slane %v2347, 2
    %v2349 = vadd.f32 %v2347, %v2348
    %v2350 = vrot.slane %v2349, 1
    %v2351 = vadd.f32 %v2349, %v2350
    %v2352 = vrcp.pop 5.0
    %v2353 = vmul.f32 %v2344, %v2352
    %v2354 = vmul.f32 %v2351, %v2352
    %s2355 = scalar_lea.vmem [#allocation10], 128
    %v2356 = vld [vmem:[%s2355] sm:$0xff]
    %v2357 = vld [vmem:[%s2355 + $0x8] sm:$0xff]
    %v2358 = vld [vmem:[%s2355 + $0x10] sm:$0xff]
    %v2359 = vld [vmem:[%s2355 + $0x18] sm:$0xff]
    %v2360 = vld [vmem:[%s2355 + $0x20] sm:$0xff]
    %v2361 = vld [vmem:[%s2355 + $0x28] sm:$0xff]
    %v2362 = vld [vmem:[%s2355 + $0x30] sm:$0xff]
    %v2363 = vld [vmem:[%s2355 + $0x38] sm:$0xff]
    %v2364 = vld [vmem:[%s2355 + $0x40] sm:$0xff]
    %v2365 = vld [vmem:[%s2355 + $0x48] sm:$0xff]
    %v2366 = vld [vmem:[%s2355 + $0x50] sm:$0xff]
    %v2367 = vld [vmem:[%s2355 + $0x58] sm:$0xff]
    %v2368 = vld [vmem:[%s2355 + $0x60] sm:$0xff]
    %v2369 = vld [vmem:[%s2355 + $0x68] sm:$0xff]
    %v2370 = vld [vmem:[%s2355 + $0x70] sm:$0xff]
    %v2371 = vld [vmem:[%s2355 + $0x78] sm:$0xff]
    %v2372 = vlaneseq
    %v2373 = vshrl.u32 %v2372, 7
    %v2374 = vsub.s32 7, %v2373
    %v2375 = vrot.slane %v1565, %v2374
    %v2378 = vsel %vm1444, %v2354, %v2353
    %2380 = vmatprep.subr.mxu0 0.0
    %2381 = vmatpush1.msra.mxu0 %v2356
    %2382 = vmatprep.subr.mxu0 0.0
    %2383 = vmatpush1.msra.mxu0 %v2357
    %2384 = vmatprep.subr.mxu0 0.0
    %2385 = vmatpush1.msra.mxu0 %v2358
    %2386 = vmatprep.subr.mxu0 0.0
    %2387 = vmatpush1.msra.mxu0 %v2359
    %2388 = vmatprep.subr.mxu0 0.0
    %2389 = vmatpush1.msra.mxu0 %v2360
    %2390 = vmatprep.subr.mxu0 0.0
    %2391 = vmatpush1.msra.mxu0 %v2361
    %2392 = vmatprep.subr.mxu0 0.0
    %2393 = vmatpush1.msra.mxu0 %v2362
    %2394 = vmatprep.subr.mxu0 0.0
    %2395 = vmatpush1.msra.mxu0 %v2363
    %2396 = vmatprep.subr.mxu0 0.0
    %2397 = vmatpush1.msra.mxu0 %v2364
    %2398 = vmatprep.subr.mxu0 0.0
    %2399 = vmatpush1.msra.mxu0 %v2365
    %2400 = vmatprep.subr.mxu0 0.0
    %2401 = vmatpush1.msra.mxu0 %v2366
    %2402 = vmatprep.subr.mxu0 0.0
    %2403 = vmatpush1.msra.mxu0 %v2367
    %2404 = vmatprep.subr.mxu0 0.0
    %2405 = vmatpush1.msra.mxu0 %v2368
    %2406 = vmatprep.subr.mxu0 0.0
    %2407 = vmatpush1.msra.mxu0 %v2369
    %2408 = vmatprep.subr.mxu0 0.0
    %2409 = vmatpush1.msra.mxu0 %v2370
    %2410 = vmatprep.subr.mxu0 0.0
    %2411 = vmatpush1.msra.mxu0 %v2371
    %2412 = vmatprep.subr.mxu0 0.0
    %2413 = vmatpush1.msra.mxu0 0.0
    %2414 = vmatprep.subr.mxu0 0.0
    %2415 = vmatpush1.msra.mxu0 0.0
    %2416 = vmatprep.subr.mxu0 0.0
    %2417 = vmatpush1.msra.mxu0 0.0
    %2418 = vmatprep.subr.mxu0 0.0
    %2419 = vmatpush1.msra.mxu0 0.0
    %2420 = vmatprep.subr.mxu0 0.0
    %2421 = vmatpush1.msra.mxu0 0.0
    %2422 = vmatprep.subr.mxu0 0.0
    %2423 = vmatpush1.msra.mxu0 0.0
    %2424 = vmatprep.subr.mxu0 0.0
    %2425 = vmatpush1.msra.mxu0 0.0
    %2426 = vmatprep.subr.mxu0 0.0
    %2427 = vmatpush1.msra.mxu0 0.0
    %2428 = vmatprep.subr.mxu0 0.0
    %2429 = vmatpush1.msra.mxu0 0.0
    %2430 = vmatprep.subr.mxu0 0.0
    %2431 = vmatpush1.msra.mxu0 0.0
    %2432 = vmatprep.subr.mxu0 0.0
    %2433 = vmatpush1.msra.mxu0 0.0
    %2434 = vmatprep.subr.mxu0 0.0
    %2435 = vmatpush1.msra.mxu0 0.0
    %2436 = vmatprep.subr.mxu0 0.0
    %2437 = vmatpush1.msra.mxu0 0.0
    %2438 = vmatprep.subr.mxu0 0.0
    %2439 = vmatpush1.msra.mxu0 0.0
    %2440 = vmatprep.subr.mxu0 0.0
    %2441 = vmatpush1.msra.mxu0 0.0
    %2442 = vmatprep.subr.mxu0 0.0
    %2443 = vmatpush1.msra.mxu0 0.0
    %2444 = vmatprep.mubr.f32.mxu0 0.0
    %2445 = vmatmul.mubr.f32.gmra.mrb[0].mxu0 %v2378
    %v2446 = vpop.f32.mrb[0].mxu0
    %v2447 = vadd.f32 %v2375, %v2446
    %v2448 = vpop.f32.mrb[0].mxu0
    %2449 = vdwg.mxu0
    %v2450 = vxor.u32 %v2447, 2147483648
    %v2451 = vmul.f32 %v2450, 1.442695
    %v2452 = vpow.pop %v2451
    %v2453 = vadd.f32 %v2452, 1.0
    %v2454 = vrcp.pop %v2453
    %v2455 = vmul.f32 1.0, %v2454
    %v2456 = vadd.f32 %v2335, 1.0
    %v2457 = vadd.f32 %v2336, 1.0
    %v2460 = vunpack.c.l.s4 1966171168
    %v2461 = vunpack.c.0.s8 %v2460
    %v2462 = vlaneseq
    %v2463 = vshrl.u32 %v2462, 7
    %v2464 = vsub.s32 %v2461, %v2463
    %v2465 = vrot.slane %v2455, %v2464
    %v2466 = vcombine.high %v2465, %v2465
    %v2468 = vunpack.c.l.s4 1966171168
    %v2469 = vunpack.c.0.s8 %v2468
    %v2470 = vlaneseq
    %v2471 = vshrl.u32 %v2470, 7
    %v2472 = vsub.s32 %v2469, %v2471
    %v2473 = vrot.slane %v2465, %v2472
    %v2475 = vunpack.c.l.s4 1966171168
    %v2476 = vunpack.c.0.s8 %v2475
    %v2477 = vlaneseq
    %v2478 = vshrl.u32 %v2477, 7
    %v2479 = vsub.s32 %v2476, %v2478
    %v2480 = vrot.slane %v2466, %v2479
    %v2481 = vlaneseq
    %v2482 = vshrl.u32 %v2481, 7
    %v2483 = vsub.s32 0, %v2482
    %v2484 = vrot.slane %v2473, %v2483
    %v2485 = vlaneseq
    %v2486 = vshrl.u32 %v2485, 7
    %v2487 = vsub.s32 0, %v2486
    %v2488 = vrot.slane %v2480, %v2487
    %v2491 = vmul.f32 %v2456, %v2484
    %v2492 = vmul.f32 %v2457, %v2488
    %2493 = vst [vmem:[%s6] sm:$0x1f] %v2491
    %2494 = vst [vmem:[%s6 + $0x8] sm:$0x1f] %v2492
    // Predicated region
    $region46: #{tpu_custom_call.1} parent=1 // pred_check
      _
    $region47: #{tpu_custom_call.1} parent=1 // pred_check_branch
      %2496 = sbr.rel (0) target = $region49
    $region48: #{tpu_custom_call.1} parent=1 // pred_region
      _
    $region49: #{tpu_custom_call.1} parent=1 // pred_fallthru
      _
    // Predicated region
    $region50: #{tpu_custom_call.1} parent=1 // pred_check
      _
    $region51: #{tpu_custom_call.1} parent=1 // pred_check_branch
      %2498 = sbr.rel (0) target = $region53
    $region52: #{tpu_custom_call.1} parent=1 // pred_region
      _
    $region53: #{tpu_custom_call.1} parent=1 // pred_fallthru
      _
    %2499 = vsyncpa [#allocation4], 1
    %2500 = vsyncpa [#allocation6], 1
    %2501 = vsyncpa [#allocation9], 1

</llo_original>
